<compile_context>
chip_gen: v7x
topology: tpu7x:2x2x1
jax: 0.10.0
libtpu: 0.0.40
codegen_flags: <defaults>
</compile_context>

<pallas_src>
import functools

import numpy as np
import jax
import jax.numpy as jnp
from jax import lax
from jax.experimental import pallas as pl
from jax.experimental.pallas import tpu as pltpu


_VMEM_STEP_BUDGET = 16 * 1024 * 1024   # target live VMEM bytes per grid step
_VMEM_LIMIT = 48 * 1024 * 1024         # scoped limit (<= v7x 64 MiB physical)


# ----------------------------------------------------------------------------
# Kernel
# ----------------------------------------------------------------------------
def _edge_transition_kernel(
    edge_ref,    # (1, rows, Ce)       flattened edge rows of this (batch, i-tile)
    ctx_i_ref,   # (1, block_i, H+Co)  f32: proj[i] @ [W1_i | Wf_i] + [b1 | bf]
    ctx_j_ref,   # (1, N, H+Co)        f32: proj[j] @ [W1_j | Wf_j]
    w_e_ref,     # (Ce, H+Co)          [W1_e | Wf_e], compute dtype
    wt_ref,      # (L, H, H)           trunk weights (layer 0 unused), compute dtype
    bt_ref,      # (L, H)              trunk biases, f32
    wf_ref,      # (H, Co)             final-layer weight, compute dtype
    gamma_ref,   # (1, Co)             LayerNorm scale, f32
    beta_ref,    # (1, Co)             LayerNorm shift, f32
    out_ref,     # (1, rows, Co)
    *,
    eps,
):
    f32 = jnp.float32
    cdt = w_e_ref.dtype                    # MXU compute dtype (bf16 or f32)
    rows = edge_ref.shape[1]
    ti = ctx_i_ref.shape[1]
    n = ctx_j_ref.shape[1]
    hc = w_e_ref.shape[1]
    hidden = wt_ref.shape[-1]
    num_layers = wt_ref.shape[0]

    # --- fused edge contribution to [trunk-layer-0 | final residual] ----------
    # Single MXU pass over the edge tile gives both the first trunk layer's
    # edge term and the residual-path (h0 @ Wf) edge term.
    edge = edge_ref[0].astype(cdt)
    ez = jnp.dot(edge, w_e_ref[...], preferred_element_type=f32)      # (rows, H+Co)

    # Node-i / node-j contributions are rank-structured: add them with pure
    # VPU broadcasts (row r <-> (i = r // N, j = r % N)); no selector matmuls,
    # no materialized h0.
    comb = ez.reshape(ti, n, hc)
    comb = comb + ctx_i_ref[0][:, None, :]   # varies with i, broadcast over j
    comb = comb + ctx_j_ref[0][None, :, :]   # varies with j, broadcast over i
    comb = comb.reshape(rows, hc)

    # --- trunk -----------------------------------------------------------------
    h = jnp.maximum(comb[:, :hidden], 0.0)                            # layer 0
    for l in range(1, num_layers):                                    # static unroll
        h = jnp.maximum(
            jnp.dot(h.astype(cdt), wt_ref[l], preferred_element_type=f32)
            + bt_ref[l:l + 1, :],
            0.0)

    # --- final layer: (h + h0) @ Wf + bf ; h0/bf part is comb[:, H:] -----------
    y = jnp.dot(h.astype(cdt), wf_ref[...], preferred_element_type=f32)
    y = y + comb[:, hidden:]

    # --- LayerNorm over the output channels (single-pass stats) ---------------
    co = y.shape[-1]
    inv_co = 1.0 / co
    s1 = jnp.sum(y, axis=-1, keepdims=True)
    s2 = jnp.sum(y * y, axis=-1, keepdims=True)
    mean = s1 * inv_co
    var = jnp.maximum(s2 * inv_co - mean * mean, 0.0)
    y = (y - mean) * lax.rsqrt(var + eps)
    y = y * gamma_ref[...] + beta_ref[...]

    out_ref[0] = y.astype(out_ref.dtype)


# ----------------------------------------------------------------------------
# Tile sizing
# ----------------------------------------------------------------------------
def _choose_block_i(n, batch, per_row_bytes, fixed_bytes, min_steps=8):
    """Pick block_i (rows per step = block_i * n).

    Largest tile that fits the per-step VMEM budget, while keeping at least
    `min_steps` grid steps (feeds 2 TensorCores on v7x and keeps the DMA
    pipeline busy).  Valid tiles under the (8,128) rule: block_i a multiple of
    8 dividing n, or the full n.  Clamped to the smallest valid tile instead of
    silently overshooting VMEM.
    """
    cands = sorted({n} | {d for d in range(8, n, 8) if n % d == 0}, reverse=True)
    fitting = [c for c in cands
               if fixed_bytes + c * n * per_row_bytes <= _VMEM_STEP_BUDGET]
    if not fitting:
        return cands[-1]                 # clamp to smallest valid tile
    for c in fitting:                    # largest fitting tile with enough steps
        if batch * (n // c) >= min_steps:
            return c
    return fitting[-1]                   # otherwise maximize step count


# ----------------------------------------------------------------------------
# Wrapper
# ----------------------------------------------------------------------------
@functools.partial(jax.jit, static_argnames=("compute_dtype", "block_i"))
def edge_transition_pallas(node_embed, edge_embed, params,
                           compute_dtype=jnp.bfloat16, block_i=None):
    """Pallas forward pass of EdgeTransition.

    node_embed: (B, N, Dn); edge_embed: (B, N, N, Ce).
    params (weights stored (in, out), i.e. transposed vs. torch Linear):
      w0 (Dn,Cb), b0 (Cb,), wt (L,H,H), bt (L,H), wf (H,Co), bf (Co,),
      gamma (Co,), beta (Co,)  with H == Ce + 2*Cb.
    """
    B, N, _ = node_embed.shape
    Ce = edge_embed.shape[-1]
    Cb = params["w0"].shape[1]
    L, H = params["wt"].shape[0], params["wt"].shape[-1]
    Co = params["wf"].shape[-1]
    assert H == Ce + 2 * Cb and L >= 1
    HC = H + Co
    f32 = jnp.float32

    # ---- O(B*N) node projection + rank-structured weight products: plain XLA.
    proj = (node_embed.astype(f32) @ params["w0"].astype(f32)
            + params["b0"].astype(f32))                                # (B, N, Cb)
    w1 = params["wt"][0].astype(f32)                                   # (H, H)
    wf = params["wf"].astype(f32)                                      # (H, Co)
    w_e = jnp.concatenate([w1[:Ce], wf[:Ce]], axis=1)                  # (Ce, H+Co)
    w_i = jnp.concatenate([w1[Ce:Ce + Cb], wf[Ce:Ce + Cb]], axis=1)    # (Cb, H+Co)
    w_j = jnp.concatenate([w1[Ce + Cb:], wf[Ce + Cb:]], axis=1)        # (Cb, H+Co)
    bias_ef = jnp.concatenate([params["bt"][0].astype(f32),
                               params["bf"].astype(f32)])              # (H+Co,)
    ctx_i = proj @ w_i + bias_ef                                       # (B, N, H+Co)
    ctx_j = proj @ w_j                                                 # (B, N, H+Co)

    # ---- weights the kernel multiplies with, cast once to the compute dtype.
    # (Layer 0 of wt is unused in-kernel but kept so L == 1 stays well-formed.)
    w_e_c = w_e.astype(compute_dtype)
    wt_c = params["wt"].astype(compute_dtype)
    wf_c = params["wf"].astype(compute_dtype)
    bt_f = params["bt"].astype(f32)
    gamma = params["gamma"].reshape(1, Co).astype(f32)
    beta = params["beta"].reshape(1, Co).astype(f32)

    edge_flat = edge_embed.reshape(B, N * N, Ce)     # contiguous, free reshape

    # ---- tile sizing from an explicit byte budget.
    eb = edge_embed.dtype.itemsize
    cbytes = jnp.dtype(compute_dtype).itemsize
    per_row = (2 * Ce * eb                 # edge block, double-buffered
               + 2 * Co * eb               # out block, double-buffered
               + Ce * cbytes               # in-kernel compute-dtype edge copy
               + 4 * (2 * HC + H + Co))    # f32 intermediates (ez+comb, h, y)
    fixed = (cbytes * (Ce * HC + L * H * H + H * Co)
             + 4 * (2 * N * HC + L * H + 2 * Co))
    if block_i is None:
        block_i = _choose_block_i(N, B, per_row, fixed)
    assert N % block_i == 0 and (block_i % 8 == 0 or block_i == N)
    rows = block_i * N

    kernel = functools.partial(_edge_transition_kernel, eps=1e-5)

    out = pl.pallas_call(
        kernel,
        out_shape=jax.ShapeDtypeStruct((B, N * N, Co), edge_embed.dtype),
        grid_spec=pltpu.PrefetchScalarGridSpec(
            num_scalar_prefetch=0,
            grid=(B, N // block_i),
            in_specs=[
                pl.BlockSpec((1, rows, Ce), lambda b, ib: (b, ib, 0)),
                pl.BlockSpec((1, block_i, HC), lambda b, ib: (b, ib, 0)),
                pl.BlockSpec((1, N, HC), lambda b, ib: (b, 0, 0)),
                pl.BlockSpec((Ce, HC), lambda b, ib: (0, 0)),
                pl.BlockSpec((L, H, H), lambda b, ib: (0, 0, 0)),
                pl.BlockSpec((L, H), lambda b, ib: (0, 0)),
                pl.BlockSpec((H, Co), lambda b, ib: (0, 0)),
                pl.BlockSpec((1, Co), lambda b, ib: (0, 0)),
                pl.BlockSpec((1, Co), lambda b, ib: (0, 0)),
            ],
            out_specs=pl.BlockSpec((1, rows, Co), lambda b, ib: (b, ib, 0)),
        ),
        compiler_params=pltpu.CompilerParams(
            dimension_semantics=("parallel", "parallel"),
            vmem_limit_bytes=_VMEM_LIMIT),
    )(edge_flat, ctx_i, ctx_j, w_e_c, wt_c, bt_f, wf_c, gamma, beta)

    return out.reshape(B, N, N, Co)


# ----------------------------------------------------------------------------
# Pure-JAX reference (mirrors the PyTorch forward exactly) for verification.
# ----------------------------------------------------------------------------
def edge_transition_ref(node_embed, edge_embed, params, eps=1e-5):
    proj = node_embed @ params["w0"] + params["b0"]             # (B, N, Cb)
    B, N, Cb = proj.shape
    bias_i = jnp.broadcast_to(proj[:, :, None, :], (B, N, N, Cb))
    bias_j = jnp.broadcast_to(proj[:, None, :, :], (B, N, N, Cb))
    h0 = jnp.concatenate([edge_embed, bias_i, bias_j], axis=-1)  # (B, N, N, H)
    h = h0
    for l in range(params["wt"].shape[0]):
        h = jax.nn.relu(h @ params["wt"][l] + params["bt"][l])
    y = (h + h0) @ params["wf"] + params["bf"]
    mean = y.mean(-1, keepdims=True)
    var = ((y - mean) ** 2).mean(-1, keepdims=True)             # biased, like torch
    y = (y - mean) / jnp.sqrt(var + eps)
    return y * params["gamma"] + params["beta"]


if __name__ == "__main__":
    # Make the XLA reference / wrapper matmuls full f32 precision on TPU so the
    # comparison is meaningful.
    jax.config.update("jax_default_matmul_precision", "highest")

    # Small shapes consistent with the module:
    #   node_embed_size=32, node_dilation=2 -> Cb=16; edge_embed_in=32 -> H=64;
    #   edge_embed_out=32; num_layers=2; batch=2, num_res=8.
    B, N = 2, 8
    node_embed_size, node_dilation = 32, 2
    edge_embed_in, edge_embed_out, num_layers = 32, 32, 2
    Cb = node_embed_size // node_dilation
    H = 2 * Cb + edge_embed_in

    key = jax.random.PRNGKey(0)
    ks = jax.random.split(key, 10)
    node_embed = jax.random.normal(ks[0], (B, N, node_embed_size), jnp.float32)
    edge_embed = jax.random.normal(ks[1], (B, N, N, edge_embed_in), jnp.float32)

    # Random weights, stored (in, out).  (PyTorch's "final" init zeroes the last
    # layer which would make the output trivially the LayerNorm bias; random
    # weights keep the numerical check meaningful.  Init schemes don't change
    # the forward math.)
    def _s(fan):
        return 1.0 / np.sqrt(fan)

    params = {
        "w0": jax.random.normal(ks[2], (node_embed_size, Cb), jnp.float32) * _s(node_embed_size),
        "b0": 0.1 * jax.random.normal(ks[3], (Cb,), jnp.float32),
        "wt": jax.random.normal(ks[4], (num_layers, H, H), jnp.float32) * _s(H),
        "bt": 0.1 * jax.random.normal(ks[5], (num_layers, H), jnp.float32),
        "wf": jax.random.normal(ks[6], (H, edge_embed_out), jnp.float32) * _s(H),
        "bf": 0.1 * jax.random.normal(ks[7], (edge_embed_out,), jnp.float32),
        "gamma": 1.0 + 0.1 * jax.random.normal(ks[8], (edge_embed_out,), jnp.float32),
        "beta": 0.1 * jax.random.normal(ks[9], (edge_embed_out,), jnp.float32),
    }

    ref = edge_transition_ref(node_embed, edge_embed, params)

    # f32-compute run: validates kernel semantics tightly.
    out_f32 = edge_transition_pallas(node_embed, edge_embed, params,
                                     compute_dtype=jnp.float32)
    out_f32 = jax.block_until_ready(out_f32)
    np.testing.assert_allclose(np.asarray(out_f32), np.asarray(ref),
                               rtol=2e-2, atol=2e-2)

    # bf16-compute run: the performance default (native-rate MXU, f32 accum).
    out_bf16 = edge_transition_pallas(node_embed, edge_embed, params,
                                      compute_dtype=jnp.bfloat16)
    out_bf16 = jax.block_until_ready(out_bf16)
    np.testing.assert_allclose(np.asarray(out_bf16), np.asarray(ref),
                               rtol=6e-2, atol=6e-2)

    print("KERNEL_OK")
</pallas_src>

<mosaic_0001>
module attributes {stable_mosaic.version = 11 : i64} {
  func.func @_edge_transition_kernel(%arg0: i32, %arg1: i32, %arg2: memref<1x64x32xf32, #tpu.memory_space<vmem>>, %arg3: memref<1x8x96xf32, #tpu.memory_space<vmem>>, %arg4: memref<1x8x96xf32, #tpu.memory_space<vmem>>, %arg5: memref<32x96xf32, #tpu.memory_space<vmem>>, %arg6: memref<2x64x64xf32, #tpu.memory_space<vmem>>, %arg7: memref<2x64xf32, #tpu.memory_space<vmem>>, %arg8: memref<64x32xf32, #tpu.memory_space<vmem>>, %arg9: memref<1x32xf32, #tpu.memory_space<vmem>>, %arg10: memref<1x32xf32, #tpu.memory_space<vmem>>, %arg11: memref<1x64x32xf32, #tpu.memory_space<vmem>>) attributes {dimension_semantics = [#tpu.dimension_semantics<parallel>, #tpu.dimension_semantics<parallel>], iteration_bounds = array<i64: 2, 1>, scalar_prefetch = 0 : i64, scratch_operands = 0 : i64, tpu.core_type = #tpu.core_type<tc>, window_params = [{transform_indices = @transform_0, window_bounds = array<i64: 1, 64, 32>}, {transform_indices = @transform_1, window_bounds = array<i64: 1, 8, 96>}, {transform_indices = @transform_2, window_bounds = array<i64: 1, 8, 96>}, {pipeline_mode = #tpu.pipeline_mode<synchronous>, transform_indices = @transform_3, window_bounds = array<i64: 32, 96>}, {pipeline_mode = #tpu.pipeline_mode<synchronous>, transform_indices = @transform_4, window_bounds = array<i64: 2, 64, 64>}, {pipeline_mode = #tpu.pipeline_mode<synchronous>, transform_indices = @transform_5, window_bounds = array<i64: 2, 64>}, {pipeline_mode = #tpu.pipeline_mode<synchronous>, transform_indices = @transform_6, window_bounds = array<i64: 64, 32>}, {pipeline_mode = #tpu.pipeline_mode<synchronous>, transform_indices = @transform_7, window_bounds = array<i64: 1, 32>}, {pipeline_mode = #tpu.pipeline_mode<synchronous>, transform_indices = @transform_8, window_bounds = array<i64: 1, 32>}, {transform_indices = @transform_9, window_bounds = array<i64: 1, 64, 32>}]} {
    %c0 = arith.constant 0 : index
    %c0_0 = arith.constant 0 : index
    %c0_1 = arith.constant 0 : index
    %0 = vector.load %arg2[%c0, %c0_0, %c0_1] : memref<1x64x32xf32, #tpu.memory_space<vmem>>, vector<1x64x32xf32>
    %1 = vector.shape_cast %0 : vector<1x64x32xf32> to vector<64x32xf32>
    %c0_2 = arith.constant 0 : index
    %c0_3 = arith.constant 0 : index
    %2 = vector.load %arg5[%c0_2, %c0_3] : memref<32x96xf32, #tpu.memory_space<vmem>>, vector<32x96xf32>
    %cst = arith.constant dense<0.000000e+00> : vector<64x96xf32>
    %3 = tpu.matmul %1, %2, %cst {dimension_numbers = #tpu.dot_dimension_numbers<[1], [0], [0], [1], [0, 0, 1, 1], [], []>, precision = #tpu.contract_precision<fp32>} : vector<64x32xf32>, vector<32x96xf32>, vector<64x96xf32> -> vector<64x96xf32>
    %4 = vector.shape_cast %3 : vector<64x96xf32> to vector<8x8x96xf32>
    %c0_4 = arith.constant 0 : index
    %c0_5 = arith.constant 0 : index
    %c0_6 = arith.constant 0 : index
    %5 = vector.load %arg3[%c0_4, %c0_5, %c0_6] : memref<1x8x96xf32, #tpu.memory_space<vmem>>, vector<1x8x96xf32>
    %6 = vector.shape_cast %5 : vector<1x8x96xf32> to vector<8x96xf32>
    %7 = vector.shape_cast %6 : vector<8x96xf32> to vector<8x1x96xf32>
    %8 = vector.broadcast %7 : vector<8x1x96xf32> to vector<8x8x96xf32>
    %9 = arith.addf %4, %8 : vector<8x8x96xf32>
    %c0_7 = arith.constant 0 : index
    %c0_8 = arith.constant 0 : index
    %c0_9 = arith.constant 0 : index
    %10 = vector.load %arg4[%c0_7, %c0_8, %c0_9] : memref<1x8x96xf32, #tpu.memory_space<vmem>>, vector<1x8x96xf32>
    %11 = vector.shape_cast %10 : vector<1x8x96xf32> to vector<8x96xf32>
    %12 = vector.shape_cast %11 : vector<8x96xf32> to vector<1x8x96xf32>
    %13 = vector.broadcast %12 : vector<1x8x96xf32> to vector<8x8x96xf32>
    %14 = arith.addf %9, %13 : vector<8x8x96xf32>
    %15 = vector.shape_cast %14 : vector<8x8x96xf32> to vector<64x96xf32>
    %16 = vector.extract_strided_slice %15 {offsets = [0, 0], sizes = [64, 64], strides = [1, 1]} : vector<64x96xf32> to vector<64x64xf32>
    %cst_10 = arith.constant 0.000000e+00 : f32
    %17 = vector.broadcast %cst_10 : f32 to vector<64x64xf32>
    %18 = arith.maximumf %16, %17 : vector<64x64xf32>
    %c1 = arith.constant 1 : index
    %c0_11 = arith.constant 0 : index
    %c0_12 = arith.constant 0 : index
    %19 = vector.load %arg6[%c1, %c0_11, %c0_12] : memref<2x64x64xf32, #tpu.memory_space<vmem>>, vector<1x64x64xf32>
    %20 = vector.shape_cast %19 : vector<1x64x64xf32> to vector<64x64xf32>
    %cst_13 = arith.constant dense<0.000000e+00> : vector<64x64xf32>
    %21 = tpu.matmul %18, %20, %cst_13 {dimension_numbers = #tpu.dot_dimension_numbers<[1], [0], [0], [1], [0, 0, 1, 1], [], []>, precision = #tpu.contract_precision<fp32>} : vector<64x64xf32>, vector<64x64xf32>, vector<64x64xf32> -> vector<64x64xf32>
    %c1_14 = arith.constant 1 : index
    %c0_15 = arith.constant 0 : index
    %22 = vector.load %arg7[%c1_14, %c0_15] : memref<2x64xf32, #tpu.memory_space<vmem>>, vector<1x64xf32>
    %23 = vector.broadcast %22 : vector<1x64xf32> to vector<64x64xf32>
    %24 = arith.addf %21, %23 : vector<64x64xf32>
    %cst_16 = arith.constant 0.000000e+00 : f32
    %25 = vector.broadcast %cst_16 : f32 to vector<64x64xf32>
    %26 = arith.maximumf %24, %25 : vector<64x64xf32>
    %c0_17 = arith.constant 0 : index
    %c0_18 = arith.constant 0 : index
    %27 = vector.load %arg8[%c0_17, %c0_18] : memref<64x32xf32, #tpu.memory_space<vmem>>, vector<64x32xf32>
    %cst_19 = arith.constant dense<0.000000e+00> : vector<64x32xf32>
    %28 = tpu.matmul %26, %27, %cst_19 {dimension_numbers = #tpu.dot_dimension_numbers<[1], [0], [0], [1], [0, 0, 1, 1], [], []>, precision = #tpu.contract_precision<fp32>} : vector<64x64xf32>, vector<64x32xf32>, vector<64x32xf32> -> vector<64x32xf32>
    %29 = vector.extract_strided_slice %15 {offsets = [0, 64], sizes = [64, 32], strides = [1, 1]} : vector<64x96xf32> to vector<64x32xf32>
    %30 = arith.addf %28, %29 : vector<64x32xf32>
    %cst_20 = arith.constant dense<0.000000e+00> : vector<64xf32>
    %31 = vector.multi_reduction <add>, %30, %cst_20 [1] : vector<64x32xf32> to vector<64xf32>
    %32 = vector.shape_cast %31 : vector<64xf32> to vector<64x1xf32>
    %33 = arith.mulf %30, %30 : vector<64x32xf32>
    %cst_21 = arith.constant dense<0.000000e+00> : vector<64xf32>
    %34 = vector.multi_reduction <add>, %33, %cst_21 [1] : vector<64x32xf32> to vector<64xf32>
    %35 = vector.shape_cast %34 : vector<64xf32> to vector<64x1xf32>
    %cst_22 = arith.constant 3.125000e-02 : f32
    %36 = vector.broadcast %cst_22 : f32 to vector<64x1xf32>
    %37 = arith.mulf %32, %36 : vector<64x1xf32>
    %cst_23 = arith.constant 3.125000e-02 : f32
    %38 = vector.broadcast %cst_23 : f32 to vector<64x1xf32>
    %39 = arith.mulf %35, %38 : vector<64x1xf32>
    %40 = arith.mulf %37, %37 : vector<64x1xf32>
    %41 = arith.subf %39, %40 : vector<64x1xf32>
    %cst_24 = arith.constant 0.000000e+00 : f32
    %42 = vector.broadcast %cst_24 : f32 to vector<64x1xf32>
    %43 = arith.maximumf %41, %42 : vector<64x1xf32>
    %44 = vector.broadcast %37 : vector<64x1xf32> to vector<64x32xf32>
    %45 = arith.subf %30, %44 : vector<64x32xf32>
    %cst_25 = arith.constant 9.99999974E-6 : f32
    %46 = vector.broadcast %cst_25 : f32 to vector<64x1xf32>
    %47 = arith.addf %43, %46 : vector<64x1xf32>
    %48 = math.rsqrt %47 : vector<64x1xf32>
    %49 = vector.broadcast %48 : vector<64x1xf32> to vector<64x32xf32>
    %50 = arith.mulf %45, %49 : vector<64x32xf32>
    %c0_26 = arith.constant 0 : index
    %c0_27 = arith.constant 0 : index
    %51 = vector.load %arg9[%c0_26, %c0_27] : memref<1x32xf32, #tpu.memory_space<vmem>>, vector<1x32xf32>
    %52 = vector.broadcast %51 : vector<1x32xf32> to vector<64x32xf32>
    %53 = arith.mulf %50, %52 : vector<64x32xf32>
    %c0_28 = arith.constant 0 : index
    %c0_29 = arith.constant 0 : index
    %54 = vector.load %arg10[%c0_28, %c0_29] : memref<1x32xf32, #tpu.memory_space<vmem>>, vector<1x32xf32>
    %55 = vector.broadcast %54 : vector<1x32xf32> to vector<64x32xf32>
    %56 = arith.addf %53, %55 : vector<64x32xf32>
    %c0_30 = arith.constant 0 : index
    %c0_31 = arith.constant 0 : index
    %c0_32 = arith.constant 0 : index
    %57 = vector.load %arg11[%c0_30, %c0_31, %c0_32] : memref<1x64x32xf32, #tpu.memory_space<vmem>>, vector<1x64x32xf32>
    %58 = vector.shape_cast %57 : vector<1x64x32xf32> to vector<64x32xf32>
    %59 = vector.shape_cast %56 : vector<64x32xf32> to vector<1x64x32xf32>
    tpu.vector_store %arg11[%c0_30, %c0_31, %c0_32], %59 {strides = array<i32>} : memref<1x64x32xf32, #tpu.memory_space<vmem>>, vector<1x64x32xf32>,
    return
  }
  func.func @transform_0(%arg0: i32, %arg1: i32) -> (i32, i32, i32) {
    %c0_i32 = arith.constant 0 : i32
    %c0_i32_0 = arith.constant 0 : i32
    return %arg0, %arg1, %c0_i32 : i32, i32, i32
  }
  func.func @transform_1(%arg0: i32, %arg1: i32) -> (i32, i32, i32) {
    %c0_i32 = arith.constant 0 : i32
    %c0_i32_0 = arith.constant 0 : i32
    return %arg0, %arg1, %c0_i32 : i32, i32, i32
  }
  func.func @transform_2(%arg0: i32, %arg1: i32) -> (i32, i32, i32) {
    %c0_i32 = arith.constant 0 : i32
    %c0_i32_0 = arith.constant 0 : i32
    %c0_i32_1 = arith.constant 0 : i32
    return %arg0, %c0_i32, %c0_i32_0 : i32, i32, i32
  }
  func.func @transform_3(%arg0: i32, %arg1: i32) -> (i32, i32) {
    %c0_i32 = arith.constant 0 : i32
    %c0_i32_0 = arith.constant 0 : i32
    %c0_i32_1 = arith.constant 0 : i32
    return %c0_i32, %c0_i32_0 : i32, i32
  }
  func.func @transform_4(%arg0: i32, %arg1: i32) -> (i32, i32, i32) {
    %c0_i32 = arith.constant 0 : i32
    %c0_i32_0 = arith.constant 0 : i32
    %c0_i32_1 = arith.constant 0 : i32
    %c0_i32_2 = arith.constant 0 : i32
    return %c0_i32, %c0_i32_0, %c0_i32_1 : i32, i32, i32
  }
  func.func @transform_5(%arg0: i32, %arg1: i32) -> (i32, i32) {
    %c0_i32 = arith.constant 0 : i32
    %c0_i32_0 = arith.constant 0 : i32
    %c0_i32_1 = arith.constant 0 : i32
    return %c0_i32, %c0_i32_0 : i32, i32
  }
  func.func @transform_6(%arg0: i32, %arg1: i32) -> (i32, i32) {
    %c0_i32 = arith.constant 0 : i32
    %c0_i32_0 = arith.constant 0 : i32
    %c0_i32_1 = arith.constant 0 : i32
    return %c0_i32, %c0_i32_0 : i32, i32
  }
  func.func @transform_7(%arg0: i32, %arg1: i32) -> (i32, i32) {
    %c0_i32 = arith.constant 0 : i32
    %c0_i32_0 = arith.constant 0 : i32
    %c0_i32_1 = arith.constant 0 : i32
    return %c0_i32, %c0_i32_0 : i32, i32
  }
  func.func @transform_8(%arg0: i32, %arg1: i32) -> (i32, i32) {
    %c0_i32 = arith.constant 0 : i32
    %c0_i32_0 = arith.constant 0 : i32
    %c0_i32_1 = arith.constant 0 : i32
    return %c0_i32, %c0_i32_0 : i32, i32
  }
  func.func @transform_9(%arg0: i32, %arg1: i32) -> (i32, i32, i32) {
    %c0_i32 = arith.constant 0 : i32
    %c0_i32_0 = arith.constant 0 : i32
    return %arg0, %arg1, %c0_i32 : i32, i32, i32
  }
}

</mosaic_0001>

<llo_original>
// kernel: edge_transition_pallas.1
$region0: #{edge_transition_pallas.1}
  #allocation0 [shape = 'u32[]', space=smem, size = 0x4, offset = 0x4, fixed_abs, tag = 'smem constant byte address 0x4 - core index']
  #allocation1 [shape = 'u32[144,128]{1,0:T(1,128)}', space=vmem, size = 0x12000, scoped, tag = 'internal scratch']
  %s0 = inlined_call_operand.vmem [shape: f32[2,64,32], index: 0, kind: input, shape index: {}]
  %s1 = inlined_call_operand.vmem [shape: f32[2,8,96], index: 1, kind: input, shape index: {}]
  %s2 = inlined_call_operand.vmem [shape: f32[2,8,96], index: 2, kind: input, shape index: {}]
  %s3 = inlined_call_operand.vmem [shape: f32[32,96], index: 3, kind: input, shape index: {}]
  %s4 = inlined_call_operand.vmem [shape: f32[2,64,64], index: 4, kind: input, shape index: {}]
  %s5 = inlined_call_operand.vmem [shape: f32[2,64], index: 5, kind: input, shape index: {}]
  %s6 = inlined_call_operand.vmem [shape: f32[64,32], index: 6, kind: input, shape index: {}]
  %s7 = inlined_call_operand.vmem [shape: f32[1,32], index: 7, kind: input, shape index: {}]
  %s8 = inlined_call_operand.vmem [shape: f32[1,32], index: 8, kind: input, shape index: {}]
  %s9 = inlined_call_operand.hbm [shape: f32[2,64,32], index: 9, kind: output, shape index: {}]
  %s10 = sld [smem:[#allocation0]]
  $region69: #{edge_transition_pallas.1} parent=0
    _
  %s12 = ssub.s32 1, %s10
  %s13 = scalar_select 0, %s12, %s10
  $region1: #{edge_transition_pallas.1} parent=0
    #allocation2 [shape = 'u8[65536]{0}', space=vmem, size = 0x10000, scoped, tag = 'output window, operand 0']
    #allocation3 [shape = 's32[2]{0}', space=sflag, size = 0x8, scoped, tag = 'scoped memory for edge_transition_pallas.1']
    %14 = vsyncpa [#allocation3], 0
    %s15 = scalar_lea.sflag [#allocation3], 1
    %16 = vsyncpa %s15, 0
    loop: start=0, step=1, limit=4
    $region2: #{edge_transition_pallas.1} parent=1 // loop_pre_header
      _
    $region3: #{edge_transition_pallas.1} parent=1 // loop_header
      %s18 = sphi 0, %s22
      %p19 = scmp.ge.s32.totalorder %s18, 4
      %s25 = sphi 0, %s37
      %s26 = sphi 0, %s33
      %s27 = sphi 0, %s25
      %s28 = sphi 0, %s26
      %s29 = sphi 0, %s27
      %s30 = sphi 0, %s28
      %s42 = sphi 0, %s44
      %s45 = sphi 0, %s42
      %s46 = sphi 0, %s45
      %s62 = sphi 0, %s46
      %s70 = sphi 0, %s72
      %s73 = sphi 0, %s70
      %s74 = sphi 0, %s73
      %s90 = sphi 0, %s74
      %s96 = sphi 0, %s98
      %s99 = sphi 0, %s96
      %s100 = sphi 0, %s99
      %s116 = sphi 0, %s100
      %s120 = sphi 0, %s120
      %s122 = sphi 0, %s120
      %s123 = sphi 0, %s122
      %s137 = sphi 0, %s123
      %s141 = sphi 0, %s141
      %s143 = sphi 0, %s141
      %s144 = sphi 0, %s143
      %s158 = sphi 0, %s144
      %s162 = sphi 0, %s162
      %s164 = sphi 0, %s162
      %s165 = sphi 0, %s164
      %s179 = sphi 0, %s165
      %s183 = sphi 0, %s183
      %s185 = sphi 0, %s183
      %s186 = sphi 0, %s185
      %s200 = sphi 0, %s186
      %s204 = sphi 0, %s204
      %s206 = sphi 0, %s204
      %s207 = sphi 0, %s206
      %s221 = sphi 0, %s207
      %s225 = sphi 0, %s225
      %s227 = sphi 0, %s225
      %s228 = sphi 0, %s227
      %s242 = sphi 0, %s228
      %s250 = sphi 0, %s252
      %s253 = sphi 0, %s250
      %s254 = sphi 0, %s253
      %s270 = sphi 0, %s254
    $region4: #{edge_transition_pallas.1} parent=1 // loop_header_branch
      %21 = sbr.rel (%p19) target = $region8
    $region5: #{edge_transition_pallas.1} parent=1 // loop_body
      %s23 = ssub.s32 %s18, 1
      %s24 = ssub.s32 %s18, 2
      %s31 = sadd.s32 1, %s26
      %p32 = scmp.ge.s32.totalorder %s31, 1
      %s33 = scalar_select %p32, 0, %s31
      %s34 = sadd.s32 1, %s25
      %s35 = scalar_select %p32, %s34, %s25
      %p36 = scmp.ge.s32.totalorder %s35, 2
      %s37 = scalar_select %p36, 0, %s35
      %s38 = ssub.s32 %s25, %s37
      %s39 = ssub.s32 %s26, %s33
      %s40 = sor.u32 %s38, %s39
      %p41 = scmp.eq.s32.totalorder %s40, 0
      %s43 = sadd.s32 %s42, 1
      %s44 = scalar_select %p41, %s42, %s43
      %p47 = pneg %p41
      %p48 = scmp.eq.s32.totalorder %s18, 1
      %p49 = por %p47, %p48
      %p50 = scmp.ne.s32.totalorder %s42, %s45
      %p51 = scmp.eq.s32.totalorder %s18, 0
      %p52 = por %p50, %p51
      %p53 = scmp.ne.s32.totalorder %s42, %s45
      %p54 = scmp.eq.s32.totalorder %s23, 1
      %p55 = por %p53, %p54
      %p56 = scmp.ne.s32.totalorder %s45, %s46
      %p57 = scmp.eq.s32.totalorder %s23, 0
      %p58 = por %p56, %p57
      %p59 = scmp.ne.s32.totalorder %s45, %s46
      %p60 = scmp.eq.s32.totalorder %s24, 1
      %p61 = por %p59, %p60
      %p63 = scmp.ne.s32.totalorder %s46, %s62
      %p64 = scmp.eq.s32.totalorder %s24, 0
      %p65 = por %p63, %p64
      %s66 = ssub.s32 %s25, %s37
      %s67 = ssub.s32 %s26, %s33
      %s68 = sor.u32 %s66, %s67
      %p69 = scmp.eq.s32.totalorder %s68, 0
      %s71 = sadd.s32 %s70, 1
      %s72 = scalar_select %p69, %s70, %s71
      %p75 = pneg %p69
      %p76 = scmp.eq.s32.totalorder %s18, 1
      %p77 = por %p75, %p76
      %p78 = scmp.ne.s32.totalorder %s70, %s73
      %p79 = scmp.eq.s32.totalorder %s18, 0
      %p80 = por %p78, %p79
      %p81 = scmp.ne.s32.totalorder %s70, %s73
      %p82 = scmp.eq.s32.totalorder %s23, 1
      %p83 = por %p81, %p82
      %p84 = scmp.ne.s32.totalorder %s73, %s74
      %p85 = scmp.eq.s32.totalorder %s23, 0
      %p86 = por %p84, %p85
      %p87 = scmp.ne.s32.totalorder %s73, %s74
      %p88 = scmp.eq.s32.totalorder %s24, 1
      %p89 = por %p87, %p88
      %p91 = scmp.ne.s32.totalorder %s74, %s90
      %p92 = scmp.eq.s32.totalorder %s24, 0
      %p93 = por %p91, %p92
      %s94 = ssub.s32 %s25, %s37
      %p95 = scmp.eq.s32.totalorder %s94, 0
      %s97 = sadd.s32 %s96, 1
      %s98 = scalar_select %p95, %s96, %s97
      %p101 = pneg %p95
      %p102 = scmp.eq.s32.totalorder %s18, 1
      %p103 = por %p101, %p102
      %p104 = scmp.ne.s32.totalorder %s96, %s99
      %p105 = scmp.eq.s32.totalorder %s18, 0
      %p106 = por %p104, %p105
      %p107 = scmp.ne.s32.totalorder %s96, %s99
      %p108 = scmp.eq.s32.totalorder %s23, 1
      %p109 = por %p107, %p108
      %p110 = scmp.ne.s32.totalorder %s99, %s100
      %p111 = scmp.eq.s32.totalorder %s23, 0
      %p112 = por %p110, %p111
      %p113 = scmp.ne.s32.totalorder %s99, %s100
      %p114 = scmp.eq.s32.totalorder %s24, 1
      %p115 = por %p113, %p114
      %p117 = scmp.ne.s32.totalorder %s100, %s116
      %p118 = scmp.eq.s32.totalorder %s24, 0
      %p119 = por %p117, %p118
      %s121 = sadd.s32 %s120, 1
      %p124 = scmp.eq.s32.totalorder %s18, 1
      %p125 = scmp.ne.s32.totalorder %s120, %s122
      %p126 = scmp.eq.s32.totalorder %s18, 0
      %p127 = por %p125, %p126
      %p128 = scmp.ne.s32.totalorder %s120, %s122
      %p129 = scmp.eq.s32.totalorder %s23, 1
      %p130 = por %p128, %p129
      %p131 = scmp.ne.s32.totalorder %s122, %s123
      %p132 = scmp.eq.s32.totalorder %s23, 0
      %p133 = por %p131, %p132
      %p134 = scmp.ne.s32.totalorder %s122, %s123
      %p135 = scmp.eq.s32.totalorder %s24, 1
      %p136 = por %p134, %p135
      %p138 = scmp.ne.s32.totalorder %s123, %s137
      %p139 = scmp.eq.s32.totalorder %s24, 0
      %p140 = por %p138, %p139
      %s142 = sadd.s32 %s141, 1
      %p145 = scmp.eq.s32.totalorder %s18, 1
      %p146 = scmp.ne.s32.totalorder %s141, %s143
      %p147 = scmp.eq.s32.totalorder %s18, 0
      %p148 = por %p146, %p147
      %p149 = scmp.ne.s32.totalorder %s141, %s143
      %p150 = scmp.eq.s32.totalorder %s23, 1
      %p151 = por %p149, %p150
      %p152 = scmp.ne.s32.totalorder %s143, %s144
      %p153 = scmp.eq.s32.totalorder %s23, 0
      %p154 = por %p152, %p153
      %p155 = scmp.ne.s32.totalorder %s143, %s144
      %p156 = scmp.eq.s32.totalorder %s24, 1
      %p157 = por %p155, %p156
      %p159 = scmp.ne.s32.totalorder %s144, %s158
      %p160 = scmp.eq.s32.totalorder %s24, 0
      %p161 = por %p159, %p160
      %s163 = sadd.s32 %s162, 1
      %p166 = scmp.eq.s32.totalorder %s18, 1
      %p167 = scmp.ne.s32.totalorder %s162, %s164
      %p168 = scmp.eq.s32.totalorder %s18, 0
      %p169 = por %p167, %p168
      %p170 = scmp.ne.s32.totalorder %s162, %s164
      %p171 = scmp.eq.s32.totalorder %s23, 1
      %p172 = por %p170, %p171
      %p173 = scmp.ne.s32.totalorder %s164, %s165
      %p174 = scmp.eq.s32.totalorder %s23, 0
      %p175 = por %p173, %p174
      %p176 = scmp.ne.s32.totalorder %s164, %s165
      %p177 = scmp.eq.s32.totalorder %s24, 1
      %p178 = por %p176, %p177
      %p180 = scmp.ne.s32.totalorder %s165, %s179
      %p181 = scmp.eq.s32.totalorder %s24, 0
      %p182 = por %p180, %p181
      %s184 = sadd.s32 %s183, 1
      %p187 = scmp.eq.s32.totalorder %s18, 1
      %p188 = scmp.ne.s32.totalorder %s183, %s185
      %p189 = scmp.eq.s32.totalorder %s18, 0
      %p190 = por %p188, %p189
      %p191 = scmp.ne.s32.totalorder %s183, %s185
      %p192 = scmp.eq.s32.totalorder %s23, 1
      %p193 = por %p191, %p192
      %p194 = scmp.ne.s32.totalorder %s185, %s186
      %p195 = scmp.eq.s32.totalorder %s23, 0
      %p196 = por %p194, %p195
      %p197 = scmp.ne.s32.totalorder %s185, %s186
      %p198 = scmp.eq.s32.totalorder %s24, 1
      %p199 = por %p197, %p198
      %p201 = scmp.ne.s32.totalorder %s186, %s200
      %p202 = scmp.eq.s32.totalorder %s24, 0
      %p203 = por %p201, %p202
      %s205 = sadd.s32 %s204, 1
      %p208 = scmp.eq.s32.totalorder %s18, 1
      %p209 = scmp.ne.s32.totalorder %s204, %s206
      %p210 = scmp.eq.s32.totalorder %s18, 0
      %p211 = por %p209, %p210
      %p212 = scmp.ne.s32.totalorder %s204, %s206
      %p213 = scmp.eq.s32.totalorder %s23, 1
      %p214 = por %p212, %p213
      %p215 = scmp.ne.s32.totalorder %s206, %s207
      %p216 = scmp.eq.s32.totalorder %s23, 0
      %p217 = por %p215, %p216
      %p218 = scmp.ne.s32.totalorder %s206, %s207
      %p219 = scmp.eq.s32.totalorder %s24, 1
      %p220 = por %p218, %p219
      %p222 = scmp.ne.s32.totalorder %s207, %s221
      %p223 = scmp.eq.s32.totalorder %s24, 0
      %p224 = por %p222, %p223
      %s226 = sadd.s32 %s225, 1
      %p229 = scmp.eq.s32.totalorder %s18, 1
      %p230 = scmp.ne.s32.totalorder %s225, %s227
      %p231 = scmp.eq.s32.totalorder %s18, 0
      %p232 = por %p230, %p231
      %p233 = scmp.ne.s32.totalorder %s225, %s227
      %p234 = scmp.eq.s32.totalorder %s23, 1
      %p235 = por %p233, %p234
      %p236 = scmp.ne.s32.totalorder %s227, %s228
      %p237 = scmp.eq.s32.totalorder %s23, 0
      %p238 = por %p236, %p237
      %p239 = scmp.ne.s32.totalorder %s227, %s228
      %p240 = scmp.eq.s32.totalorder %s24, 1
      %p241 = por %p239, %p240
      %p243 = scmp.ne.s32.totalorder %s228, %s242
      %p244 = scmp.eq.s32.totalorder %s24, 0
      %p245 = por %p243, %p244
      %s246 = ssub.s32 %s25, %s37
      %s247 = ssub.s32 %s26, %s33
      %s248 = sor.u32 %s246, %s247
      %p249 = scmp.eq.s32.totalorder %s248, 0
      %s251 = sadd.s32 %s250, 1
      %s252 = scalar_select %p249, %s250, %s251
      %p255 = pneg %p249
      %p256 = scmp.eq.s32.totalorder %s18, 1
      %p257 = por %p255, %p256
      %p258 = scmp.ne.s32.totalorder %s250, %s253
      %p259 = scmp.eq.s32.totalorder %s18, 0
      %p260 = por %p258, %p259
      %p261 = scmp.ne.s32.totalorder %s250, %s253
      %p262 = scmp.eq.s32.totalorder %s23, 1
      %p263 = por %p261, %p262
      %p264 = scmp.ne.s32.totalorder %s253, %s254
      %p265 = scmp.eq.s32.totalorder %s23, 0
      %p266 = por %p264, %p265
      %p267 = scmp.ne.s32.totalorder %s253, %s254
      %p268 = scmp.eq.s32.totalorder %s24, 1
      %p269 = por %p267, %p268
      %p271 = scmp.ne.s32.totalorder %s254, %s270
      %p272 = scmp.eq.s32.totalorder %s24, 0
      %p273 = por %p271, %p272
      %p274 = scmp.le.s32.totalorder 1, %s18
      %p275 = scmp.lt.s32.totalorder %s18, 3
      %p276 = pnand %p274, %p275
      %p277 = pneg %p276
      // Predicated region
      $region9: #{edge_transition_pallas.1} parent=5 // pred_check
        _
      $region10: #{edge_transition_pallas.1} parent=5 // pred_check_branch
        %279 = sbr.rel (%p276) target = $region12
      $region11: #{edge_transition_pallas.1} parent=5 // pred_region
        %s280 = ssub.s32 %s18, 1
        // Predicated region
        $region13: #{edge_transition_pallas.1} parent=11 // pred_check
          %p281 = pneg %p133
        $region14: #{edge_transition_pallas.1} parent=11 // pred_check_branch
          %283 = sbr.rel (%p281) target = $region16
        $region15: #{edge_transition_pallas.1} parent=11 // pred_region
          _
        $region16: #{edge_transition_pallas.1} parent=11 // pred_fallthru
          _
        // Predicated region
        $region17: #{edge_transition_pallas.1} parent=11 // pred_check
          %p284 = pneg %p154
        $region18: #{edge_transition_pallas.1} parent=11 // pred_check_branch
          %286 = sbr.rel (%p284) target = $region20
        $region19: #{edge_transition_pallas.1} parent=11 // pred_region
          _
        $region20: #{edge_transition_pallas.1} parent=11 // pred_fallthru
          _
        // Predicated region
        $region21: #{edge_transition_pallas.1} parent=11 // pred_check
          %p287 = pneg %p175
        $region22: #{edge_transition_pallas.1} parent=11 // pred_check_branch
          %289 = sbr.rel (%p287) target = $region24
        $region23: #{edge_transition_pallas.1} parent=11 // pred_region
          _
        $region24: #{edge_transition_pallas.1} parent=11 // pred_fallthru
          _
        // Predicated region
        $region25: #{edge_transition_pallas.1} parent=11 // pred_check
          %p290 = pneg %p196
        $region26: #{edge_transition_pallas.1} parent=11 // pred_check_branch
          %292 = sbr.rel (%p290) target = $region28
        $region27: #{edge_transition_pallas.1} parent=11 // pred_region
          _
        $region28: #{edge_transition_pallas.1} parent=11 // pred_fallthru
          _
        // Predicated region
        $region29: #{edge_transition_pallas.1} parent=11 // pred_check
          %p293 = pneg %p217
        $region30: #{edge_transition_pallas.1} parent=11 // pred_check_branch
          %295 = sbr.rel (%p293) target = $region32
        $region31: #{edge_transition_pallas.1} parent=11 // pred_region
          _
        $region32: #{edge_transition_pallas.1} parent=11 // pred_fallthru
          _
        // Predicated region
        $region33: #{edge_transition_pallas.1} parent=11 // pred_check
          %p296 = pneg %p238
        $region34: #{edge_transition_pallas.1} parent=11 // pred_check_branch
          %298 = sbr.rel (%p296) target = $region36
        $region35: #{edge_transition_pallas.1} parent=11 // pred_region
          _
        $region36: #{edge_transition_pallas.1} parent=11 // pred_fallthru
          _
      $region12: #{edge_transition_pallas.1} parent=5 // pred_fallthru
        _
      %p299 = scmp.lt.s32.totalorder %s18, 2
      // Predicated region
      $region37: #{edge_transition_pallas.1} parent=5 // pred_check
        %p300 = pneg %p299
      $region38: #{edge_transition_pallas.1} parent=5 // pred_check_branch
        %302 = sbr.rel (%p300) target = $region40
      $region39: #{edge_transition_pallas.1} parent=5 // pred_region
        // Predicated region
        $region41: #{edge_transition_pallas.1} parent=39 // pred_check
          %p303 = pneg %p52
        $region42: #{edge_transition_pallas.1} parent=39 // pred_check_branch
          %305 = sbr.rel (%p303) target = $region44
        $region43: #{edge_transition_pallas.1} parent=39 // pred_region
          %s306 = smul.u32 8, %s26
          %p307 = scmp.lt.s32.totalorder %s25, 1
          %s308 = scalar_select %p307, %s25, 1
          %p309 = scmp.lt.s32.totalorder %s306, 7
          %s310 = scalar_select %p309, %s306, 7
          %s311 = smul.addr %s308, 8
          %s312 = sadd.s32 %s310, %s311
          %s313 = smul.addr %s312, 8
          %s314 = scalar_lea.vmem %s0, %s313
          %s315 = smul.u32 8, %s26
        $region44: #{edge_transition_pallas.1} parent=39 // pred_fallthru
          _
        // Predicated region
        $region45: #{edge_transition_pallas.1} parent=39 // pred_check
          %p316 = pneg %p80
        $region46: #{edge_transition_pallas.1} parent=39 // pred_check_branch
          %318 = sbr.rel (%p316) target = $region48
        $region47: #{edge_transition_pallas.1} parent=39 // pred_region
          %p319 = scmp.lt.s32.totalorder %s25, 1
          %s320 = scalar_select %p319, %s25, 1
          %p321 = scmp.lt.s32.totalorder %s26, 0
          %s322 = scalar_select %p321, %s26, 0
          %s323 = sadd.s32 %s322, %s320
          %s324 = smul.addr %s323, 8
          %s325 = scalar_lea.vmem %s1, %s324
        $region48: #{edge_transition_pallas.1} parent=39 // pred_fallthru
          _
        // Predicated region
        $region49: #{edge_transition_pallas.1} parent=39 // pred_check
          %p326 = pneg %p106
        $region50: #{edge_transition_pallas.1} parent=39 // pred_check_branch
          %328 = sbr.rel (%p326) target = $region52
        $region51: #{edge_transition_pallas.1} parent=39 // pred_region
          %p329 = scmp.lt.s32.totalorder %s25, 1
          %s330 = scalar_select %p329, %s25, 1
          %s331 = smul.addr %s330, 8
          %s332 = scalar_lea.vmem %s2, %s331
        $region52: #{edge_transition_pallas.1} parent=39 // pred_fallthru
          _
      $region40: #{edge_transition_pallas.1} parent=5 // pred_fallthru
        _
      %p333 = scmp.le.s32.totalorder 1, %s18
      %p334 = scmp.lt.s32.totalorder %s18, 3
      %p335 = pnand %p333, %p334
      %p336 = pneg %p335
      // Predicated region
      $region53: #{edge_transition_pallas.1} parent=5 // pred_check
        _
      $region54: #{edge_transition_pallas.1} parent=5 // pred_check_branch
        %338 = sbr.rel (%p335) target = $region56
      $region55: #{edge_transition_pallas.1} parent=5 // pred_region
        %s339 = ssub.s32 %s18, 1
        %s340 = smul.u32 8, %s28
        %p341 = scmp.lt.s32.totalorder %s27, 1
        %s342 = scalar_select %p341, %s27, 1
        %p343 = scmp.lt.s32.totalorder %s340, 7
        %s344 = scalar_select %p343, %s340, 7
        %s345 = smul.addr %s342, 8
        %s346 = sadd.s32 %s344, %s345
        %s347 = smul.addr %s346, 8
        %s348 = scalar_lea.vmem %s0, %s347
        %p349 = pneg %p58
        %p350 = pneg %p55
        %p351 = scmp.lt.s32.totalorder %s27, 1
        %s352 = scalar_select %p351, %s27, 1
        %p353 = scmp.lt.s32.totalorder %s28, 0
        %s354 = scalar_select %p353, %s28, 0
        %s355 = sadd.s32 %s354, %s352
        %s356 = smul.addr %s355, 8
        %s357 = scalar_lea.vmem %s1, %s356
        %p358 = pneg %p86
        %p359 = pneg %p83
        %p360 = scmp.lt.s32.totalorder %s27, 1
        %s361 = scalar_select %p360, %s27, 1
        %s362 = smul.addr %s361, 8
        %s363 = scalar_lea.vmem %s2, %s362
        %p364 = pneg %p112
        %p365 = pneg %p109
        %p366 = pneg %p133
        %p367 = pneg %p130
        %p368 = pneg %p154
        %p369 = pneg %p151
        %p370 = pneg %p175
        %p371 = pneg %p172
        %p372 = pneg %p196
        %p373 = pneg %p193
        %p374 = pneg %p217
        %p375 = pneg %p214
        %p376 = pneg %p238
        %p377 = pneg %p235
        %p378 = pneg %p266
        %p379 = pneg %p263
        %s380 = sand.u32 %s253, 1
        %s381 = scalar_lea.sflag [#allocation3], %s380
        %s382 = sand.u32 %s253, 1
        %s383 = smul.addr %s382, 64
        %s384 = scalar_lea.vmem [#allocation2], %s383
        %s385 = smul.u32 8, %s28
        %p386 = scmp.lt.s32.totalorder %s27, 1
        %s387 = scalar_select %p386, %s27, 1
        %p388 = scmp.lt.s32.totalorder %s385, 7
        %s389 = scalar_select %p388, %s385, 7
        %s390 = smul.addr %s387, 8
        %s391 = sadd.s32 %s389, %s390
        %s392 = smul.addr %s391, 8
        %s393 = scalar_lea.vmem %s0, %s392
        %s394 = smul.u32 8, %s28
        %p395 = scmp.lt.s32.totalorder %s27, 1
        %s396 = scalar_select %p395, %s27, 1
        %p397 = scmp.lt.s32.totalorder %s28, 0
        %s398 = scalar_select %p397, %s28, 0
        %s399 = sadd.s32 %s398, %s396
        %s400 = smul.addr %s399, 8
        %s401 = scalar_lea.vmem %s1, %s400
        %p402 = scmp.lt.s32.totalorder %s27, 1
        %s403 = scalar_select %p402, %s27, 1
        %s404 = smul.addr %s403, 8
        %s405 = scalar_lea.vmem %s2, %s404
        %s406 = smul.u32 8, %s28
        %v407 = vld [vmem:[%s393] sm:$0xff]
        %v408 = vld [vmem:[%s393 + $0x8] sm:$0xff]
        %v409 = vld [vmem:[%s393 + $0x10] sm:$0xff]
        %v410 = vld [vmem:[%s393 + $0x18] sm:$0xff]
        %v411 = vld [vmem:[%s393 + $0x20] sm:$0xff]
        %v412 = vld [vmem:[%s393 + $0x28] sm:$0xff]
        %v413 = vld [vmem:[%s393 + $0x30] sm:$0xff]
        %v414 = vld [vmem:[%s393 + $0x38] sm:$0xff]
        %v415 = vld [vmem:[%s3] sm:$0xff]
        %v416 = vld [vmem:[%s3 + $0x8] sm:$0xff]
        %v417 = vld [vmem:[%s3 + $0x10] sm:$0xff]
        %v418 = vld [vmem:[%s3 + $0x18] sm:$0xff]
        %vm419 = vcmask 261120
        %v421 = vsel %vm419, %v407, 0
        %v424 = vsel %vm419, %v408, 0
        %v427 = vsel %vm419, %v409, 0
        %v430 = vsel %vm419, %v410, 0
        %v433 = vsel %vm419, %v411, 0
        %v436 = vsel %vm419, %v412, 0
        %v439 = vsel %vm419, %v413, 0
        %v442 = vsel %vm419, %v414, 0
        %444 = vmatprep.subr.mxu0 0.0
        %v445 = vand.u32 %v415, 4294901760
        %446 = vmatpush1.msra.mxu0 %v445
        %447 = vmatprep.subr.mxu0 0.0
        %v448 = vand.u32 %v416, 4294901760
        %449 = vmatpush1.msra.mxu0 %v448
        %450 = vmatprep.subr.mxu0 0.0
        %v451 = vand.u32 %v417, 4294901760
        %452 = vmatpush1.msra.mxu0 %v451
        %453 = vmatprep.subr.mxu0 0.0
        %v454 = vand.u32 %v418, 4294901760
        %455 = vmatpush1.msra.mxu0 %v454
        %456 = vmatprep.subr.mxu0 0.0
        %457 = vmatpush1.msra.mxu0 0.0
        %458 = vmatprep.subr.mxu0 0.0
        %459 = vmatpush1.msra.mxu0 0.0
        %460 = vmatprep.subr.mxu0 0.0
        %461 = vmatpush1.msra.mxu0 0.0
        %462 = vmatprep.subr.mxu0 0.0
        %463 = vmatpush1.msra.mxu0 0.0
        %464 = vmatprep.subr.mxu0 0.0
        %465 = vmatpush1.msra.mxu0 0.0
        %466 = vmatprep.subr.mxu0 0.0
        %467 = vmatpush1.msra.mxu0 0.0
        %468 = vmatprep.subr.mxu0 0.0
        %469 = vmatpush1.msra.mxu0 0.0
        %470 = vmatprep.subr.mxu0 0.0
        %471 = vmatpush1.msra.mxu0 0.0
        %472 = vmatprep.subr.mxu0 0.0
        %473 = vmatpush1.msra.mxu0 0.0
        %474 = vmatprep.subr.mxu0 0.0
        %475 = vmatpush1.msra.mxu0 0.0
        %476 = vmatprep.subr.mxu0 0.0
        %477 = vmatpush1.msra.mxu0 0.0
        %478 = vmatprep.subr.mxu0 0.0
        %479 = vmatpush1.msra.mxu0 0.0
        %480 = vmatprep.subr.mxu0 0.0
        %481 = vmatpush1.msra.mxu0 0.0
        %482 = vmatprep.subr.mxu0 0.0
        %483 = vmatpush1.msra.mxu0 0.0
        %484 = vmatprep.subr.mxu0 0.0
        %485 = vmatpush1.msra.mxu0 0.0
        %486 = vmatprep.subr.mxu0 0.0
        %487 = vmatpush1.msra.mxu0 0.0
        %488 = vmatprep.subr.mxu0 0.0
        %489 = vmatpush1.msra.mxu0 0.0
        %490 = vmatprep.subr.mxu0 0.0
        %491 = vmatpush1.msra.mxu0 0.0
        %492 = vmatprep.subr.mxu0 0.0
        %493 = vmatpush1.msra.mxu0 0.0
        %494 = vmatprep.subr.mxu0 0.0
        %495 = vmatpush1.msra.mxu0 0.0
        %496 = vmatprep.subr.mxu0 0.0
        %497 = vmatpush1.msra.mxu0 0.0
        %498 = vmatprep.subr.mxu0 0.0
        %499 = vmatpush1.msra.mxu0 0.0
        %500 = vmatprep.subr.mxu0 0.0
        %501 = vmatpush1.msra.mxu0 0.0
        %502 = vmatprep.subr.mxu0 0.0
        %503 = vmatpush1.msra.mxu0 0.0
        %504 = vmatprep.subr.mxu0 0.0
        %505 = vmatpush1.msra.mxu0 0.0
        %506 = vmatprep.subr.mxu0 0.0
        %507 = vmatpush1.msra.mxu0 0.0
        %508 = vmatprep.subr.mxu0 0.0
        %509 = vmatpush1.msra.mxu0 0.0
        %510 = vmatprep.subr.mxu0 0.0
        %511 = vmatpush1.msra.mxu0 0.0
        %512 = vmatprep.mubr.f32.mxu0 0.0
        %v513 = vand.u32 %v421, 4294901760
        %v514 = vsub.f32 %v421, %v513
        %v515 = vand.u32 %v514, 4294901760
        %v516 = vsub.f32 %v514, %v515
        %v517 = vand.u32 %v516, 4294901760
        %518 = vmatmul.mubr.f32.gmra.mrb[0].mxu0 %v517
        %v519 = vpop.f32.mrb[0].mxu0
        %v520 = vadd.f32 0.0, %v519
        %v521 = vpop.f32.mrb[0].mxu0
        %522 = vmatprep.mubr.f32.mxu0 0.0
        %v523 = vand.u32 %v424, 4294901760
        %v524 = vsub.f32 %v424, %v523
        %v525 = vand.u32 %v524, 4294901760
        %v526 = vsub.f32 %v524, %v525
        %v527 = vand.u32 %v526, 4294901760
        %528 = vmatmul.mubr.f32.gmra.mrb[0].mxu0 %v527
        %v529 = vpop.f32.mrb[0].mxu0
        %v530 = vadd.f32 0.0, %v529
        %v531 = vpop.f32.mrb[0].mxu0
        %532 = vmatprep.mubr.f32.mxu0 0.0
        %v533 = vand.u32 %v427, 4294901760
        %v534 = vsub.f32 %v427, %v533
        %v535 = vand.u32 %v534, 4294901760
        %v536 = vsub.f32 %v534, %v535
        %v537 = vand.u32 %v536, 4294901760
        %538 = vmatmul.mubr.f32.gmra.mrb[0].mxu0 %v537
        %v539 = vpop.f32.mrb[0].mxu0
        %v540 = vadd.f32 0.0, %v539
        %v541 = vpop.f32.mrb[0].mxu0
        %542 = vmatprep.mubr.f32.mxu0 0.0
        %v543 = vand.u32 %v430, 4294901760
        %v544 = vsub.f32 %v430, %v543
        %v545 = vand.u32 %v544, 4294901760
        %v546 = vsub.f32 %v544, %v545
        %v547 = vand.u32 %v546, 4294901760
        %548 = vmatmul.mubr.f32.gmra.mrb[0].mxu0 %v547
        %v549 = vpop.f32.mrb[0].mxu0
        %v550 = vadd.f32 0.0, %v549
        %v551 = vpop.f32.mrb[0].mxu0
        %552 = vmatprep.mubr.f32.mxu0 0.0
        %v553 = vand.u32 %v433, 4294901760
        %v554 = vsub.f32 %v433, %v553
        %v555 = vand.u32 %v554, 4294901760
        %v556 = vsub.f32 %v554, %v555
        %v557 = vand.u32 %v556, 4294901760
        %558 = vmatmul.mubr.f32.gmra.mrb[0].mxu0 %v557
        %v559 = vpop.f32.mrb[0].mxu0
        %v560 = vadd.f32 0.0, %v559
        %v561 = vpop.f32.mrb[0].mxu0
        %562 = vmatprep.mubr.f32.mxu0 0.0
        %v563 = vand.u32 %v436, 4294901760
        %v564 = vsub.f32 %v436, %v563
        %v565 = vand.u32 %v564, 4294901760
        %v566 = vsub.f32 %v564, %v565
        %v567 = vand.u32 %v566, 4294901760
        %568 = vmatmul.mubr.f32.gmra.mrb[0].mxu0 %v567
        %v569 = vpop.f32.mrb[0].mxu0
        %v570 = vadd.f32 0.0, %v569
        %v571 = vpop.f32.mrb[0].mxu0
        %572 = vmatprep.mubr.f32.mxu0 0.0
        %v573 = vand.u32 %v439, 4294901760
        %v574 = vsub.f32 %v439, %v573
        %v575 = vand.u32 %v574, 4294901760
        %v576 = vsub.f32 %v574, %v575
        %v577 = vand.u32 %v576, 4294901760
        %578 = vmatmul.mubr.f32.gmra.mrb[0].mxu0 %v577
        %v579 = vpop.f32.mrb[0].mxu0
        %v580 = vadd.f32 0.0, %v579
        %v581 = vpop.f32.mrb[0].mxu0
        %582 = vmatprep.mubr.f32.mxu0 0.0
        %v583 = vand.u32 %v442, 4294901760
        %v584 = vsub.f32 %v442, %v583
        %v585 = vand.u32 %v584, 4294901760
        %v586 = vsub.f32 %v584, %v585
        %v587 = vand.u32 %v586, 4294901760
        %588 = vmatmul.mubr.f32.gmra.mrb[0].mxu0 %v587
        %v589 = vpop.f32.mrb[0].mxu0
        %v590 = vadd.f32 0.0, %v589
        %v591 = vpop.f32.mrb[0].mxu0
        %592 = vdwg.mxu0
        %593 = vmatprep.subr.mxu0 0.0
        %v594 = vand.u32 %v415, 4294901760
        %v595 = vsub.f32 %v415, %v594
        %v596 = vand.u32 %v595, 4294901760
        %v597 = vsub.f32 %v595, %v596
        %v598 = vand.u32 %v597, 4294901760
        %599 = vmatpush1.msra.mxu0 %v598
        %600 = vmatprep.subr.mxu0 0.0
        %v601 = vand.u32 %v416, 4294901760
        %v602 = vsub.f32 %v416, %v601
        %v603 = vand.u32 %v602, 4294901760
        %v604 = vsub.f32 %v602, %v603
        %v605 = vand.u32 %v604, 4294901760
        %606 = vmatpush1.msra.mxu0 %v605
        %607 = vmatprep.subr.mxu0 0.0
        %v608 = vand.u32 %v417, 4294901760
        %v609 = vsub.f32 %v417, %v608
        %v610 = vand.u32 %v609, 4294901760
        %v611 = vsub.f32 %v609, %v610
        %v612 = vand.u32 %v611, 4294901760
        %613 = vmatpush1.msra.mxu0 %v612
        %614 = vmatprep.subr.mxu0 0.0
        %v615 = vand.u32 %v418, 4294901760
        %v616 = vsub.f32 %v418, %v615
        %v617 = vand.u32 %v616, 4294901760
        %v618 = vsub.f32 %v616, %v617
        %v619 = vand.u32 %v618, 4294901760
        %620 = vmatpush1.msra.mxu0 %v619
        %621 = vmatprep.subr.mxu0 0.0
        %622 = vmatpush1.msra.mxu0 0.0
        %623 = vmatprep.subr.mxu0 0.0
        %624 = vmatpush1.msra.mxu0 0.0
        %625 = vmatprep.subr.mxu0 0.0
        %626 = vmatpush1.msra.mxu0 0.0
        %627 = vmatprep.subr.mxu0 0.0
        %628 = vmatpush1.msra.mxu0 0.0
        %629 = vmatprep.subr.mxu0 0.0
        %630 = vmatpush1.msra.mxu0 0.0
        %631 = vmatprep.subr.mxu0 0.0
        %632 = vmatpush1.msra.mxu0 0.0
        %633 = vmatprep.subr.mxu0 0.0
        %634 = vmatpush1.msra.mxu0 0.0
        %635 = vmatprep.subr.mxu0 0.0
        %636 = vmatpush1.msra.mxu0 0.0
        %637 = vmatprep.subr.mxu0 0.0
        %638 = vmatpush1.msra.mxu0 0.0
        %639 = vmatprep.subr.mxu0 0.0
        %640 = vmatpush1.msra.mxu0 0.0
        %641 = vmatprep.subr.mxu0 0.0
        %642 = vmatpush1.msra.mxu0 0.0
        %643 = vmatprep.subr.mxu0 0.0
        %644 = vmatpush1.msra.mxu0 0.0
        %645 = vmatprep.subr.mxu0 0.0
        %646 = vmatpush1.msra.mxu0 0.0
        %647 = vmatprep.subr.mxu0 0.0
        %648 = vmatpush1.msra.mxu0 0.0
        %649 = vmatprep.subr.mxu0 0.0
        %650 = vmatpush1.msra.mxu0 0.0
        %651 = vmatprep.subr.mxu0 0.0
        %652 = vmatpush1.msra.mxu0 0.0
        %653 = vmatprep.subr.mxu0 0.0
        %654 = vmatpush1.msra.mxu0 0.0
        %655 = vmatprep.subr.mxu0 0.0
        %656 = vmatpush1.msra.mxu0 0.0
        %657 = vmatprep.subr.mxu0 0.0
        %658 = vmatpush1.msra.mxu0 0.0
        %659 = vmatprep.subr.mxu0 0.0
        %660 = vmatpush1.msra.mxu0 0.0
        %661 = vmatprep.subr.mxu0 0.0
        %662 = vmatpush1.msra.mxu0 0.0
        %663 = vmatprep.subr.mxu0 0.0
        %664 = vmatpush1.msra.mxu0 0.0
        %665 = vmatprep.subr.mxu0 0.0
        %666 = vmatpush1.msra.mxu0 0.0
        %667 = vmatprep.subr.mxu0 0.0
        %668 = vmatpush1.msra.mxu0 0.0
        %669 = vmatprep.subr.mxu0 0.0
        %670 = vmatpush1.msra.mxu0 0.0
        %671 = vmatprep.subr.mxu0 0.0
        %672 = vmatpush1.msra.mxu0 0.0
        %673 = vmatprep.subr.mxu0 0.0
        %674 = vmatpush1.msra.mxu0 0.0
        %675 = vmatprep.subr.mxu0 0.0
        %676 = vmatpush1.msra.mxu0 0.0
        %677 = vmatprep.mubr.f32.mxu0 0.0
        %v678 = vand.u32 %v421, 4294901760
        %679 = vmatmul.mubr.f32.gmra.mrb[0].mxu0 %v678
        %v680 = vpop.f32.mrb[0].mxu0
        %v681 = vadd.f32 %v520, %v680
        %v682 = vpop.f32.mrb[0].mxu0
        %683 = vmatprep.mubr.f32.mxu0 0.0
        %v684 = vand.u32 %v424, 4294901760
        %685 = vmatmul.mubr.f32.gmra.mrb[0].mxu0 %v684
        %v686 = vpop.f32.mrb[0].mxu0
        %v687 = vadd.f32 %v530, %v686
        %v688 = vpop.f32.mrb[0].mxu0
        %689 = vmatprep.mubr.f32.mxu0 0.0
        %v690 = vand.u32 %v427, 4294901760
        %691 = vmatmul.mubr.f32.gmra.mrb[0].mxu0 %v690
        %v692 = vpop.f32.mrb[0].mxu0
        %v693 = vadd.f32 %v540, %v692
        %v694 = vpop.f32.mrb[0].mxu0
        %695 = vmatprep.mubr.f32.mxu0 0.0
        %v696 = vand.u32 %v430, 4294901760
        %697 = vmatmul.mubr.f32.gmra.mrb[0].mxu0 %v696
        %v698 = vpop.f32.mrb[0].mxu0
        %v699 = vadd.f32 %v550, %v698
        %v700 = vpop.f32.mrb[0].mxu0
        %701 = vmatprep.mubr.f32.mxu0 0.0
        %v702 = vand.u32 %v433, 4294901760
        %703 = vmatmul.mubr.f32.gmra.mrb[0].mxu0 %v702
        %v704 = vpop.f32.mrb[0].mxu0
        %v705 = vadd.f32 %v560, %v704
        %v706 = vpop.f32.mrb[0].mxu0
        %707 = vmatprep.mubr.f32.mxu0 0.0
        %v708 = vand.u32 %v436, 4294901760
        %709 = vmatmul.mubr.f32.gmra.mrb[0].mxu0 %v708
        %v710 = vpop.f32.mrb[0].mxu0
        %v711 = vadd.f32 %v570, %v710
        %v712 = vpop.f32.mrb[0].mxu0
        %713 = vmatprep.mubr.f32.mxu0 0.0
        %v714 = vand.u32 %v439, 4294901760
        %715 = vmatmul.mubr.f32.gmra.mrb[0].mxu0 %v714
        %v716 = vpop.f32.mrb[0].mxu0
        %v717 = vadd.f32 %v580, %v716
        %v718 = vpop.f32.mrb[0].mxu0
        %719 = vmatprep.mubr.f32.mxu0 0.0
        %v720 = vand.u32 %v442, 4294901760
        %721 = vmatmul.mubr.f32.gmra.mrb[0].mxu0 %v720
        %v722 = vpop.f32.mrb[0].mxu0
        %v723 = vadd.f32 %v590, %v722
        %v724 = vpop.f32.mrb[0].mxu0
        %725 = vdwg.mxu0
        %726 = vmatprep.subr.mxu0 0.0
        %v727 = vand.u32 %v415, 4294901760
        %v728 = vsub.f32 %v415, %v727
        %729 = vmatpush1.msra.mxu0 %v728
        %730 = vmatprep.subr.mxu0 0.0
        %v731 = vand.u32 %v416, 4294901760
        %v732 = vsub.f32 %v416, %v731
        %733 = vmatpush1.msra.mxu0 %v732
        %734 = vmatprep.subr.mxu0 0.0
        %v735 = vand.u32 %v417, 4294901760
        %v736 = vsub.f32 %v417, %v735
        %737 = vmatpush1.msra.mxu0 %v736
        %738 = vmatprep.subr.mxu0 0.0
        %v739 = vand.u32 %v418, 4294901760
        %v740 = vsub.f32 %v418, %v739
        %741 = vmatpush1.msra.mxu0 %v740
        %742 = vmatprep.subr.mxu0 0.0
        %743 = vmatpush1.msra.mxu0 0.0
        %744 = vmatprep.subr.mxu0 0.0
        %745 = vmatpush1.msra.mxu0 0.0
        %746 = vmatprep.subr.mxu0 0.0
        %747 = vmatpush1.msra.mxu0 0.0
        %748 = vmatprep.subr.mxu0 0.0
        %749 = vmatpush1.msra.mxu0 0.0
        %750 = vmatprep.subr.mxu0 0.0
        %751 = vmatpush1.msra.mxu0 0.0
        %752 = vmatprep.subr.mxu0 0.0
        %753 = vmatpush1.msra.mxu0 0.0
        %754 = vmatprep.subr.mxu0 0.0
        %755 = vmatpush1.msra.mxu0 0.0
        %756 = vmatprep.subr.mxu0 0.0
        %757 = vmatpush1.msra.mxu0 0.0
        %758 = vmatprep.subr.mxu0 0.0
        %759 = vmatpush1.msra.mxu0 0.0
        %760 = vmatprep.subr.mxu0 0.0
        %761 = vmatpush1.msra.mxu0 0.0
        %762 = vmatprep.subr.mxu0 0.0
        %763 = vmatpush1.msra.mxu0 0.0
        %764 = vmatprep.subr.mxu0 0.0
        %765 = vmatpush1.msra.mxu0 0.0
        %766 = vmatprep.subr.mxu0 0.0
        %767 = vmatpush1.msra.mxu0 0.0
        %768 = vmatprep.subr.mxu0 0.0
        %769 = vmatpush1.msra.mxu0 0.0
        %770 = vmatprep.subr.mxu0 0.0
        %771 = vmatpush1.msra.mxu0 0.0
        %772 = vmatprep.subr.mxu0 0.0
        %773 = vmatpush1.msra.mxu0 0.0
        %774 = vmatprep.subr.mxu0 0.0
        %775 = vmatpush1.msra.mxu0 0.0
        %776 = vmatprep.subr.mxu0 0.0
        %777 = vmatpush1.msra.mxu0 0.0
        %778 = vmatprep.subr.mxu0 0.0
        %779 = vmatpush1.msra.mxu0 0.0
        %780 = vmatprep.subr.mxu0 0.0
        %781 = vmatpush1.msra.mxu0 0.0
        %782 = vmatprep.subr.mxu0 0.0
        %783 = vmatpush1.msra.mxu0 0.0
        %784 = vmatprep.subr.mxu0 0.0
        %785 = vmatpush1.msra.mxu0 0.0
        %786 = vmatprep.subr.mxu0 0.0
        %787 = vmatpush1.msra.mxu0 0.0
        %788 = vmatprep.subr.mxu0 0.0
        %789 = vmatpush1.msra.mxu0 0.0
        %790 = vmatprep.subr.mxu0 0.0
        %791 = vmatpush1.msra.mxu0 0.0
        %792 = vmatprep.subr.mxu0 0.0
        %793 = vmatpush1.msra.mxu0 0.0
        %794 = vmatprep.subr.mxu0 0.0
        %795 = vmatpush1.msra.mxu0 0.0
        %796 = vmatprep.subr.mxu0 0.0
        %797 = vmatpush1.msra.mxu0 0.0
        %798 = vmatprep.mubr.f32.mxu0 0.0
        %v799 = vand.u32 %v421, 4294901760
        %v800 = vsub.f32 %v421, %v799
        %801 = vmatmul.mubr.f32.gmra.mrb[0].mxu0 %v800
        %v802 = vpop.f32.mrb[0].mxu0
        %v803 = vadd.f32 %v681, %v802
        %v804 = vpop.f32.mrb[0].mxu0
        %805 = vmatprep.mubr.f32.mxu0 0.0
        %v806 = vand.u32 %v424, 4294901760
        %v807 = vsub.f32 %v424, %v806
        %808 = vmatmul.mubr.f32.gmra.mrb[0].mxu0 %v807
        %v809 = vpop.f32.mrb[0].mxu0
        %v810 = vadd.f32 %v687, %v809
        %v811 = vpop.f32.mrb[0].mxu0
        %812 = vmatprep.mubr.f32.mxu0 0.0
        %v813 = vand.u32 %v427, 4294901760
        %v814 = vsub.f32 %v427, %v813
        %815 = vmatmul.mubr.f32.gmra.mrb[0].mxu0 %v814
        %v816 = vpop.f32.mrb[0].mxu0
        %v817 = vadd.f32 %v693, %v816
        %v818 = vpop.f32.mrb[0].mxu0
        %819 = vmatprep.mubr.f32.mxu0 0.0
        %v820 = vand.u32 %v430, 4294901760
        %v821 = vsub.f32 %v430, %v820
        %822 = vmatmul.mubr.f32.gmra.mrb[0].mxu0 %v821
        %v823 = vpop.f32.mrb[0].mxu0
        %v824 = vadd.f32 %v699, %v823
        %v825 = vpop.f32.mrb[0].mxu0
        %826 = vmatprep.mubr.f32.mxu0 0.0
        %v827 = vand.u32 %v433, 4294901760
        %v828 = vsub.f32 %v433, %v827
        %829 = vmatmul.mubr.f32.gmra.mrb[0].mxu0 %v828
        %v830 = vpop.f32.mrb[0].mxu0
        %v831 = vadd.f32 %v705, %v830
        %v832 = vpop.f32.mrb[0].mxu0
        %833 = vmatprep.mubr.f32.mxu0 0.0
        %v834 = vand.u32 %v436, 4294901760
        %v835 = vsub.f32 %v436, %v834
        %836 = vmatmul.mubr.f32.gmra.mrb[0].mxu0 %v835
        %v837 = vpop.f32.mrb[0].mxu0
        %v838 = vadd.f32 %v711, %v837
        %v839 = vpop.f32.mrb[0].mxu0
        %840 = vmatprep.mubr.f32.mxu0 0.0
        %v841 = vand.u32 %v439, 4294901760
        %v842 = vsub.f32 %v439, %v841
        %843 = vmatmul.mubr.f32.gmra.mrb[0].mxu0 %v842
        %v844 = vpop.f32.mrb[0].mxu0
        %v845 = vadd.f32 %v717, %v844
        %v846 = vpop.f32.mrb[0].mxu0
        %847 = vmatprep.mubr.f32.mxu0 0.0
        %v848 = vand.u32 %v442, 4294901760
        %v849 = vsub.f32 %v442, %v848
        %850 = vmatmul.mubr.f32.gmra.mrb[0].mxu0 %v849
        %v851 = vpop.f32.mrb[0].mxu0
        %v852 = vadd.f32 %v723, %v851
        %v853 = vpop.f32.mrb[0].mxu0
        %854 = vdwg.mxu0
        %855 = vmatprep.subr.mxu0 0.0
        %v856 = vand.u32 %v415, 4294901760
        %857 = vmatpush1.msra.mxu0 %v856
        %858 = vmatprep.subr.mxu0 0.0
        %v859 = vand.u32 %v416, 4294901760
        %860 = vmatpush1.msra.mxu0 %v859
        %861 = vmatprep.subr.mxu0 0.0
        %v862 = vand.u32 %v417, 4294901760
        %863 = vmatpush1.msra.mxu0 %v862
        %864 = vmatprep.subr.mxu0 0.0
        %v865 = vand.u32 %v418, 4294901760
        %866 = vmatpush1.msra.mxu0 %v865
        %867 = vmatprep.subr.mxu0 0.0
        %868 = vmatpush1.msra.mxu0 0.0
        %869 = vmatprep.subr.mxu0 0.0
        %870 = vmatpush1.msra.mxu0 0.0
        %871 = vmatprep.subr.mxu0 0.0
        %872 = vmatpush1.msra.mxu0 0.0
        %873 = vmatprep.subr.mxu0 0.0
        %874 = vmatpush1.msra.mxu0 0.0
        %875 = vmatprep.subr.mxu0 0.0
        %876 = vmatpush1.msra.mxu0 0.0
        %877 = vmatprep.subr.mxu0 0.0
        %878 = vmatpush1.msra.mxu0 0.0
        %879 = vmatprep.subr.mxu0 0.0
        %880 = vmatpush1.msra.mxu0 0.0
        %881 = vmatprep.subr.mxu0 0.0
        %882 = vmatpush1.msra.mxu0 0.0
        %883 = vmatprep.subr.mxu0 0.0
        %884 = vmatpush1.msra.mxu0 0.0
        %885 = vmatprep.subr.mxu0 0.0
        %886 = vmatpush1.msra.mxu0 0.0
        %887 = vmatprep.subr.mxu0 0.0
        %888 = vmatpush1.msra.mxu0 0.0
        %889 = vmatprep.subr.mxu0 0.0
        %890 = vmatpush1.msra.mxu0 0.0
        %891 = vmatprep.subr.mxu0 0.0
        %892 = vmatpush1.msra.mxu0 0.0
        %893 = vmatprep.subr.mxu0 0.0
        %894 = vmatpush1.msra.mxu0 0.0
        %895 = vmatprep.subr.mxu0 0.0
        %896 = vmatpush1.msra.mxu0 0.0
        %897 = vmatprep.subr.mxu0 0.0
        %898 = vmatpush1.msra.mxu0 0.0
        %899 = vmatprep.subr.mxu0 0.0
        %900 = vmatpush1.msra.mxu0 0.0
        %901 = vmatprep.subr.mxu0 0.0
        %902 = vmatpush1.msra.mxu0 0.0
        %903 = vmatprep.subr.mxu0 0.0
        %904 = vmatpush1.msra.mxu0 0.0
        %905 = vmatprep.subr.mxu0 0.0
        %906 = vmatpush1.msra.mxu0 0.0
        %907 = vmatprep.subr.mxu0 0.0
        %908 = vmatpush1.msra.mxu0 0.0
        %909 = vmatprep.subr.mxu0 0.0
        %910 = vmatpush1.msra.mxu0 0.0
        %911 = vmatprep.subr.mxu0 0.0
        %912 = vmatpush1.msra.mxu0 0.0
        %913 = vmatprep.subr.mxu0 0.0
        %914 = vmatpush1.msra.mxu0 0.0
        %915 = vmatprep.subr.mxu0 0.0
        %916 = vmatpush1.msra.mxu0 0.0
        %917 = vmatprep.subr.mxu0 0.0
        %918 = vmatpush1.msra.mxu0 0.0
        %919 = vmatprep.subr.mxu0 0.0
        %920 = vmatpush1.msra.mxu0 0.0
        %921 = vmatprep.subr.mxu0 0.0
        %922 = vmatpush1.msra.mxu0 0.0
        %923 = vmatprep.mubr.f32.mxu0 0.0
        %v924 = vand.u32 %v421, 4294901760
        %v925 = vsub.f32 %v421, %v924
        %v926 = vand.u32 %v925, 4294901760
        %927 = vmatmul.mubr.f32.gmra.mrb[0].mxu0 %v926
        %v928 = vpop.f32.mrb[0].mxu0
        %v929 = vadd.f32 %v803, %v928
        %v930 = vpop.f32.mrb[0].mxu0
        %931 = vmatprep.mubr.f32.mxu0 0.0
        %v932 = vand.u32 %v424, 4294901760
        %v933 = vsub.f32 %v424, %v932
        %v934 = vand.u32 %v933, 4294901760
        %935 = vmatmul.mubr.f32.gmra.mrb[0].mxu0 %v934
        %v936 = vpop.f32.mrb[0].mxu0
        %v937 = vadd.f32 %v810, %v936
        %v938 = vpop.f32.mrb[0].mxu0
        %939 = vmatprep.mubr.f32.mxu0 0.0
        %v940 = vand.u32 %v427, 4294901760
        %v941 = vsub.f32 %v427, %v940
        %v942 = vand.u32 %v941, 4294901760
        %943 = vmatmul.mubr.f32.gmra.mrb[0].mxu0 %v942
        %v944 = vpop.f32.mrb[0].mxu0
        %v945 = vadd.f32 %v817, %v944
        %v946 = vpop.f32.mrb[0].mxu0
        %947 = vmatprep.mubr.f32.mxu0 0.0
        %v948 = vand.u32 %v430, 4294901760
        %v949 = vsub.f32 %v430, %v948
        %v950 = vand.u32 %v949, 4294901760
        %951 = vmatmul.mubr.f32.gmra.mrb[0].mxu0 %v950
        %v952 = vpop.f32.mrb[0].mxu0
        %v953 = vadd.f32 %v824, %v952
        %v954 = vpop.f32.mrb[0].mxu0
        %955 = vmatprep.mubr.f32.mxu0 0.0
        %v956 = vand.u32 %v433, 4294901760
        %v957 = vsub.f32 %v433, %v956
        %v958 = vand.u32 %v957, 4294901760
        %959 = vmatmul.mubr.f32.gmra.mrb[0].mxu0 %v958
        %v960 = vpop.f32.mrb[0].mxu0
        %v961 = vadd.f32 %v831, %v960
        %v962 = vpop.f32.mrb[0].mxu0
        %963 = vmatprep.mubr.f32.mxu0 0.0
        %v964 = vand.u32 %v436, 4294901760
        %v965 = vsub.f32 %v436, %v964
        %v966 = vand.u32 %v965, 4294901760
        %967 = vmatmul.mubr.f32.gmra.mrb[0].mxu0 %v966
        %v968 = vpop.f32.mrb[0].mxu0
        %v969 = vadd.f32 %v838, %v968
        %v970 = vpop.f32.mrb[0].mxu0
        %971 = vmatprep.mubr.f32.mxu0 0.0
        %v972 = vand.u32 %v439, 4294901760
        %v973 = vsub.f32 %v439, %v972
        %v974 = vand.u32 %v973, 4294901760
        %975 = vmatmul.mubr.f32.gmra.mrb[0].mxu0 %v974
        %v976 = vpop.f32.mrb[0].mxu0
        %v977 = vadd.f32 %v845, %v976
        %v978 = vpop.f32.mrb[0].mxu0
        %979 = vmatprep.mubr.f32.mxu0 0.0
        %v980 = vand.u32 %v442, 4294901760
        %v981 = vsub.f32 %v442, %v980
        %v982 = vand.u32 %v981, 4294901760
        %983 = vmatmul.mubr.f32.gmra.mrb[0].mxu0 %v982
        %v984 = vpop.f32.mrb[0].mxu0
        %v985 = vadd.f32 %v852, %v984
        %v986 = vpop.f32.mrb[0].mxu0
        %987 = vdwg.mxu0
        %988 = vmatprep.subr.mxu0 0.0
        %v989 = vand.u32 %v415, 4294901760
        %v990 = vsub.f32 %v415, %v989
        %v991 = vand.u32 %v990, 4294901760
        %992 = vmatpush1.msra.mxu0 %v991
        %993 = vmatprep.subr.mxu0 0.0
        %v994 = vand.u32 %v416, 4294901760
        %v995 = vsub.f32 %v416, %v994
        %v996 = vand.u32 %v995, 4294901760
        %997 = vmatpush1.msra.mxu0 %v996
        %998 = vmatprep.subr.mxu0 0.0
        %v999 = vand.u32 %v417, 4294901760
        %v1000 = vsub.f32 %v417, %v999
        %v1001 = vand.u32 %v1000, 4294901760
        %1002 = vmatpush1.msra.mxu0 %v1001
        %1003 = vmatprep.subr.mxu0 0.0
        %v1004 = vand.u32 %v418, 4294901760
        %v1005 = vsub.f32 %v418, %v1004
        %v1006 = vand.u32 %v1005, 4294901760
        %1007 = vmatpush1.msra.mxu0 %v1006
        %1008 = vmatprep.subr.mxu0 0.0
        %1009 = vmatpush1.msra.mxu0 0.0
        %1010 = vmatprep.subr.mxu0 0.0
        %1011 = vmatpush1.msra.mxu0 0.0
        %1012 = vmatprep.subr.mxu0 0.0
        %1013 = vmatpush1.msra.mxu0 0.0
        %1014 = vmatprep.subr.mxu0 0.0
        %1015 = vmatpush1.msra.mxu0 0.0
        %1016 = vmatprep.subr.mxu0 0.0
        %1017 = vmatpush1.msra.mxu0 0.0
        %1018 = vmatprep.subr.mxu0 0.0
        %1019 = vmatpush1.msra.mxu0 0.0
        %1020 = vmatprep.subr.mxu0 0.0
        %1021 = vmatpush1.msra.mxu0 0.0
        %1022 = vmatprep.subr.mxu0 0.0
        %1023 = vmatpush1.msra.mxu0 0.0
        %1024 = vmatprep.subr.mxu0 0.0
        %1025 = vmatpush1.msra.mxu0 0.0
        %1026 = vmatprep.subr.mxu0 0.0
        %1027 = vmatpush1.msra.mxu0 0.0
        %1028 = vmatprep.subr.mxu0 0.0
        %1029 = vmatpush1.msra.mxu0 0.0
        %1030 = vmatprep.subr.mxu0 0.0
        %1031 = vmatpush1.msra.mxu0 0.0
        %1032 = vmatprep.subr.mxu0 0.0
        %1033 = vmatpush1.msra.mxu0 0.0
        %1034 = vmatprep.subr.mxu0 0.0
        %1035 = vmatpush1.msra.mxu0 0.0
        %1036 = vmatprep.subr.mxu0 0.0
        %1037 = vmatpush1.msra.mxu0 0.0
        %1038 = vmatprep.subr.mxu0 0.0
        %1039 = vmatpush1.msra.mxu0 0.0
        %1040 = vmatprep.subr.mxu0 0.0
        %1041 = vmatpush1.msra.mxu0 0.0
        %1042 = vmatprep.subr.mxu0 0.0
        %1043 = vmatpush1.msra.mxu0 0.0
        %1044 = vmatprep.subr.mxu0 0.0
        %1045 = vmatpush1.msra.mxu0 0.0
        %1046 = vmatprep.subr.mxu0 0.0
        %1047 = vmatpush1.msra.mxu0 0.0
        %1048 = vmatprep.subr.mxu0 0.0
        %1049 = vmatpush1.msra.mxu0 0.0
        %1050 = vmatprep.subr.mxu0 0.0
        %1051 = vmatpush1.msra.mxu0 0.0
        %1052 = vmatprep.subr.mxu0 0.0
        %1053 = vmatpush1.msra.mxu0 0.0
        %1054 = vmatprep.subr.mxu0 0.0
        %1055 = vmatpush1.msra.mxu0 0.0
        %1056 = vmatprep.subr.mxu0 0.0
        %1057 = vmatpush1.msra.mxu0 0.0
        %1058 = vmatprep.subr.mxu0 0.0
        %1059 = vmatpush1.msra.mxu0 0.0
        %1060 = vmatprep.subr.mxu0 0.0
        %1061 = vmatpush1.msra.mxu0 0.0
        %1062 = vmatprep.subr.mxu0 0.0
        %1063 = vmatpush1.msra.mxu0 0.0
        %1064 = vmatprep.mubr.f32.mxu0 0.0
        %v1065 = vand.u32 %v421, 4294901760
        %1066 = vmatmul.mubr.f32.gmra.mrb[0].mxu0 %v1065
        %v1067 = vpop.f32.mrb[0].mxu0
        %v1068 = vadd.f32 %v929, %v1067
        %v1069 = vpop.f32.mrb[0].mxu0
        %1070 = vmatprep.mubr.f32.mxu0 0.0
        %v1071 = vand.u32 %v424, 4294901760
        %1072 = vmatmul.mubr.f32.gmra.mrb[0].mxu0 %v1071
        %v1073 = vpop.f32.mrb[0].mxu0
        %v1074 = vadd.f32 %v937, %v1073
        %v1075 = vpop.f32.mrb[0].mxu0
        %1076 = vmatprep.mubr.f32.mxu0 0.0
        %v1077 = vand.u32 %v427, 4294901760
        %1078 = vmatmul.mubr.f32.gmra.mrb[0].mxu0 %v1077
        %v1079 = vpop.f32.mrb[0].mxu0
        %v1080 = vadd.f32 %v945, %v1079
        %v1081 = vpop.f32.mrb[0].mxu0
        %1082 = vmatprep.mubr.f32.mxu0 0.0
        %v1083 = vand.u32 %v430, 4294901760
        %1084 = vmatmul.mubr.f32.gmra.mrb[0].mxu0 %v1083
        %v1085 = vpop.f32.mrb[0].mxu0
        %v1086 = vadd.f32 %v953, %v1085
        %v1087 = vpop.f32.mrb[0].mxu0
        %1088 = vmatprep.mubr.f32.mxu0 0.0
        %v1089 = vand.u32 %v433, 4294901760
        %1090 = vmatmul.mubr.f32.gmra.mrb[0].mxu0 %v1089
        %v1091 = vpop.f32.mrb[0].mxu0
        %v1092 = vadd.f32 %v961, %v1091
        %v1093 = vpop.f32.mrb[0].mxu0
        %1094 = vmatprep.mubr.f32.mxu0 0.0
        %v1095 = vand.u32 %v436, 4294901760
        %1096 = vmatmul.mubr.f32.gmra.mrb[0].mxu0 %v1095
        %v1097 = vpop.f32.mrb[0].mxu0
        %v1098 = vadd.f32 %v969, %v1097
        %v1099 = vpop.f32.mrb[0].mxu0
        %1100 = vmatprep.mubr.f32.mxu0 0.0
        %v1101 = vand.u32 %v439, 4294901760
        %1102 = vmatmul.mubr.f32.gmra.mrb[0].mxu0 %v1101
        %v1103 = vpop.f32.mrb[0].mxu0
        %v1104 = vadd.f32 %v977, %v1103
        %v1105 = vpop.f32.mrb[0].mxu0
        %1106 = vmatprep.mubr.f32.mxu0 0.0
        %v1107 = vand.u32 %v442, 4294901760
        %1108 = vmatmul.mubr.f32.gmra.mrb[0].mxu0 %v1107
        %v1109 = vpop.f32.mrb[0].mxu0
        %v1110 = vadd.f32 %v985, %v1109
        %v1111 = vpop.f32.mrb[0].mxu0
        %1112 = vdwg.mxu0
        %1113 = vmatprep.subr.mxu0 0.0
        %v1114 = vand.u32 %v415, 4294901760
        %1115 = vmatpush1.msra.mxu0 %v1114
        %1116 = vmatprep.subr.mxu0 0.0
        %v1117 = vand.u32 %v416, 4294901760
        %1118 = vmatpush1.msra.mxu0 %v1117
        %1119 = vmatprep.subr.mxu0 0.0
        %v1120 = vand.u32 %v417, 4294901760
        %1121 = vmatpush1.msra.mxu0 %v1120
        %1122 = vmatprep.subr.mxu0 0.0
        %v1123 = vand.u32 %v418, 4294901760
        %1124 = vmatpush1.msra.mxu0 %v1123
        %1125 = vmatprep.subr.mxu0 0.0
        %1126 = vmatpush1.msra.mxu0 0.0
        %1127 = vmatprep.subr.mxu0 0.0
        %1128 = vmatpush1.msra.mxu0 0.0
        %1129 = vmatprep.subr.mxu0 0.0
        %1130 = vmatpush1.msra.mxu0 0.0
        %1131 = vmatprep.subr.mxu0 0.0
        %1132 = vmatpush1.msra.mxu0 0.0
        %1133 = vmatprep.subr.mxu0 0.0
        %1134 = vmatpush1.msra.mxu0 0.0
        %1135 = vmatprep.subr.mxu0 0.0
        %1136 = vmatpush1.msra.mxu0 0.0
        %1137 = vmatprep.subr.mxu0 0.0
        %1138 = vmatpush1.msra.mxu0 0.0
        %1139 = vmatprep.subr.mxu0 0.0
        %1140 = vmatpush1.msra.mxu0 0.0
        %1141 = vmatprep.subr.mxu0 0.0
        %1142 = vmatpush1.msra.mxu0 0.0
        %1143 = vmatprep.subr.mxu0 0.0
        %1144 = vmatpush1.msra.mxu0 0.0
        %1145 = vmatprep.subr.mxu0 0.0
        %1146 = vmatpush1.msra.mxu0 0.0
        %1147 = vmatprep.subr.mxu0 0.0
        %1148 = vmatpush1.msra.mxu0 0.0
        %1149 = vmatprep.subr.mxu0 0.0
        %1150 = vmatpush1.msra.mxu0 0.0
        %1151 = vmatprep.subr.mxu0 0.0
        %1152 = vmatpush1.msra.mxu0 0.0
        %1153 = vmatprep.subr.mxu0 0.0
        %1154 = vmatpush1.msra.mxu0 0.0
        %1155 = vmatprep.subr.mxu0 0.0
        %1156 = vmatpush1.msra.mxu0 0.0
        %1157 = vmatprep.subr.mxu0 0.0
        %1158 = vmatpush1.msra.mxu0 0.0
        %1159 = vmatprep.subr.mxu0 0.0
        %1160 = vmatpush1.msra.mxu0 0.0
        %1161 = vmatprep.subr.mxu0 0.0
        %1162 = vmatpush1.msra.mxu0 0.0
        %1163 = vmatprep.subr.mxu0 0.0
        %1164 = vmatpush1.msra.mxu0 0.0
        %1165 = vmatprep.subr.mxu0 0.0
        %1166 = vmatpush1.msra.mxu0 0.0
        %1167 = vmatprep.subr.mxu0 0.0
        %1168 = vmatpush1.msra.mxu0 0.0
        %1169 = vmatprep.subr.mxu0 0.0
        %1170 = vmatpush1.msra.mxu0 0.0
        %1171 = vmatprep.subr.mxu0 0.0
        %1172 = vmatpush1.msra.mxu0 0.0
        %1173 = vmatprep.subr.mxu0 0.0
        %1174 = vmatpush1.msra.mxu0 0.0
        %1175 = vmatprep.subr.mxu0 0.0
        %1176 = vmatpush1.msra.mxu0 0.0
        %1177 = vmatprep.subr.mxu0 0.0
        %1178 = vmatpush1.msra.mxu0 0.0
        %1179 = vmatprep.subr.mxu0 0.0
        %1180 = vmatpush1.msra.mxu0 0.0
        %1181 = vmatprep.mubr.f32.mxu0 0.0
        %v1182 = vand.u32 %v421, 4294901760
        %1183 = vmatmul.mubr.f32.gmra.mrb[0].mxu0 %v1182
        %v1184 = vpop.f32.mrb[0].mxu0
        %v1185 = vadd.f32 %v1068, %v1184
        %v1186 = vpop.f32.mrb[0].mxu0
        %1187 = vmatprep.mubr.f32.mxu0 0.0
        %v1188 = vand.u32 %v424, 4294901760
        %1189 = vmatmul.mubr.f32.gmra.mrb[0].mxu0 %v1188
        %v1190 = vpop.f32.mrb[0].mxu0
        %v1191 = vadd.f32 %v1074, %v1190
        %v1192 = vpop.f32.mrb[0].mxu0
        %1193 = vmatprep.mubr.f32.mxu0 0.0
        %v1194 = vand.u32 %v427, 4294901760
        %1195 = vmatmul.mubr.f32.gmra.mrb[0].mxu0 %v1194
        %v1196 = vpop.f32.mrb[0].mxu0
        %v1197 = vadd.f32 %v1080, %v1196
        %v1198 = vpop.f32.mrb[0].mxu0
        %1199 = vmatprep.mubr.f32.mxu0 0.0
        %v1200 = vand.u32 %v430, 4294901760
        %1201 = vmatmul.mubr.f32.gmra.mrb[0].mxu0 %v1200
        %v1202 = vpop.f32.mrb[0].mxu0
        %v1203 = vadd.f32 %v1086, %v1202
        %v1204 = vpop.f32.mrb[0].mxu0
        %1205 = vmatprep.mubr.f32.mxu0 0.0
        %v1206 = vand.u32 %v433, 4294901760
        %1207 = vmatmul.mubr.f32.gmra.mrb[0].mxu0 %v1206
        %v1208 = vpop.f32.mrb[0].mxu0
        %v1209 = vadd.f32 %v1092, %v1208
        %v1210 = vpop.f32.mrb[0].mxu0
        %1211 = vmatprep.mubr.f32.mxu0 0.0
        %v1212 = vand.u32 %v436, 4294901760
        %1213 = vmatmul.mubr.f32.gmra.mrb[0].mxu0 %v1212
        %v1214 = vpop.f32.mrb[0].mxu0
        %v1215 = vadd.f32 %v1098, %v1214
        %v1216 = vpop.f32.mrb[0].mxu0
        %1217 = vmatprep.mubr.f32.mxu0 0.0
        %v1218 = vand.u32 %v439, 4294901760
        %1219 = vmatmul.mubr.f32.gmra.mrb[0].mxu0 %v1218
        %v1220 = vpop.f32.mrb[0].mxu0
        %v1221 = vadd.f32 %v1104, %v1220
        %v1222 = vpop.f32.mrb[0].mxu0
        %1223 = vmatprep.mubr.f32.mxu0 0.0
        %v1224 = vand.u32 %v442, 4294901760
        %1225 = vmatmul.mubr.f32.gmra.mrb[0].mxu0 %v1224
        %v1226 = vpop.f32.mrb[0].mxu0
        %v1227 = vadd.f32 %v1110, %v1226
        %v1228 = vpop.f32.mrb[0].mxu0
        %1229 = vdwg.mxu0
        %v1230 = vld [vmem:[%s401] sm:$0xff]
        %v1232 = vcombine.high %v1230, %v1230
        %v1234 = vunpack.c.l.s4 1966171168
        %v1235 = vunpack.c.0.s8 %v1234
        %v1236 = vlaneseq
        %v1237 = vshrl.u32 %v1236, 7
        %v1238 = vsub.s32 %v1235, %v1237
        %v1239 = vrot.slane %v1230, %v1238
        %v1241 = vunpack.c.l.s4 1966171168
        %v1242 = vunpack.c.0.s8 %v1241
        %v1243 = vlaneseq
        %v1244 = vshrl.u32 %v1243, 7
        %v1245 = vsub.s32 %v1242, %v1244
        %v1246 = vrot.slane %v1232, %v1245
        %v1247 = vcombine.high %v1239, %v1239
        %v1248 = vcombine.high %v1246, %v1246
        %v1250 = vunpack.c.l.s4 1966171168
        %v1251 = vunpack.c.0.s8 %v1250
        %v1252 = vlaneseq
        %v1253 = vshrl.u32 %v1252, 7
        %v1254 = vsub.s32 %v1251, %v1253
        %v1255 = vrot.slane %v1239, %v1254
        %v1257 = vunpack.c.l.s4 1966171168
        %v1258 = vunpack.c.0.s8 %v1257
        %v1259 = vlaneseq
        %v1260 = vshrl.u32 %v1259, 7
        %v1261 = vsub.s32 %v1258, %v1260
        %v1262 = vrot.slane %v1246, %v1261
        %v1264 = vunpack.c.l.s4 1966171168
        %v1265 = vunpack.c.0.s8 %v1264
        %v1266 = vlaneseq
        %v1267 = vshrl.u32 %v1266, 7
        %v1268 = vsub.s32 %v1265, %v1267
        %v1269 = vrot.slane %v1247, %v1268
        %v1271 = vunpack.c.l.s4 1966171168
        %v1272 = vunpack.c.0.s8 %v1271
        %v1273 = vlaneseq
        %v1274 = vshrl.u32 %v1273, 7
        %v1275 = vsub.s32 %v1272, %v1274
        %v1276 = vrot.slane %v1248, %v1275
        %v1277 = vcombine.high %v1255, %v1255
        %v1278 = vcombine.high %v1262, %v1262
        %v1279 = vcombine.high %v1269, %v1269
        %v1280 = vcombine.high %v1276, %v1276
        %v1281 = vlaneseq
        %v1282 = vshrl.u32 %v1281, 7
        %v1283 = vsub.s32 0, %v1282
        %v1284 = vrot.slane %v1255, %v1283
        %v1285 = vlaneseq
        %v1286 = vshrl.u32 %v1285, 7
        %v1287 = vsub.s32 0, %v1286
        %v1288 = vrot.slane %v1269, %v1287
        %v1289 = vlaneseq
        %v1290 = vshrl.u32 %v1289, 7
        %v1291 = vsub.s32 0, %v1290
        %v1292 = vrot.slane %v1277, %v1291
        %v1293 = vlaneseq
        %v1294 = vshrl.u32 %v1293, 7
        %v1295 = vsub.s32 0, %v1294
        %v1296 = vrot.slane %v1279, %v1295
        %v1297 = vlaneseq
        %v1298 = vshrl.u32 %v1297, 7
        %v1299 = vsub.s32 0, %v1298
        %v1300 = vrot.slane %v1262, %v1299
        %v1301 = vlaneseq
        %v1302 = vshrl.u32 %v1301, 7
        %v1303 = vsub.s32 0, %v1302
        %v1304 = vrot.slane %v1276, %v1303
        %v1305 = vlaneseq
        %v1306 = vshrl.u32 %v1305, 7
        %v1307 = vsub.s32 0, %v1306
        %v1308 = vrot.slane %v1278, %v1307
        %v1309 = vlaneseq
        %v1310 = vshrl.u32 %v1309, 7
        %v1311 = vsub.s32 0, %v1310
        %v1312 = vrot.slane %v1280, %v1311
        %v1321 = vadd.f32 %v1185, %v1284
        %v1322 = vadd.f32 %v1191, %v1288
        %v1323 = vadd.f32 %v1197, %v1292
        %v1324 = vadd.f32 %v1203, %v1296
        %v1325 = vadd.f32 %v1209, %v1300
        %v1326 = vadd.f32 %v1215, %v1304
        %v1327 = vadd.f32 %v1221, %v1308
        %v1328 = vadd.f32 %v1227, %v1312
        %v1329 = vld [vmem:[%s405] sm:$0xff]
        %v1330 = vadd.f32 %v1321, %v1329
        %v1331 = vadd.f32 %v1322, %v1329
        %v1332 = vadd.f32 %v1323, %v1329
        %v1333 = vadd.f32 %v1324, %v1329
        %v1334 = vadd.f32 %v1325, %v1329
        %v1335 = vadd.f32 %v1326, %v1329
        %v1336 = vadd.f32 %v1327, %v1329
        %v1337 = vadd.f32 %v1328, %v1329
        %v1338 = vmax.f32 %v1330, 0.0
        %v1339 = vmax.f32 %v1331, 0.0
        %v1340 = vmax.f32 %v1332, 0.0
        %v1341 = vmax.f32 %v1333, 0.0
        %v1342 = vmax.f32 %v1334, 0.0
        %v1343 = vmax.f32 %v1335, 0.0
        %v1344 = vmax.f32 %v1336, 0.0
        %v1345 = vmax.f32 %v1337, 0.0
        %s1346 = scalar_lea.vmem %s4, 64
        %v1347 = vld [vmem:[%s1346] sm:$0xff]
        %v1348 = vld [vmem:[%s1346 + $0x8] sm:$0xff]
        %v1349 = vld [vmem:[%s1346 + $0x10] sm:$0xff]
        %v1350 = vld [vmem:[%s1346 + $0x18] sm:$0xff]
        %v1351 = vld [vmem:[%s1346 + $0x20] sm:$0xff]
        %v1352 = vld [vmem:[%s1346 + $0x28] sm:$0xff]
        %v1353 = vld [vmem:[%s1346 + $0x30] sm:$0xff]
        %v1354 = vld [vmem:[%s1346 + $0x38] sm:$0xff]
        %v1355 = vld [vmem:[%s5 + $0x1] sm:$0x1]
        %v1356 = vlaneseq
        %v1357 = vshrl.u32 %v1356, 7
        %v1358 = vsub.s32 0, %v1357
        %v1359 = vrot.slane %v1355, %v1358
        %vm1360 = vcmask 523264
        %v1362 = vsel %vm1360, %v1338, 0
        %v1365 = vsel %vm1360, %v1339, 0
        %v1368 = vsel %vm1360, %v1340, 0
        %v1371 = vsel %vm1360, %v1341, 0
        %v1374 = vsel %vm1360, %v1342, 0
        %v1377 = vsel %vm1360, %v1343, 0
        %v1380 = vsel %vm1360, %v1344, 0
        %v1383 = vsel %vm1360, %v1345, 0
        %1385 = vmatprep.subr.mxu0 0.0
        %v1386 = vand.u32 %v1347, 4294901760
        %1387 = vmatpush1.msra.mxu0 %v1386
        %1388 = vmatprep.subr.mxu0 0.0
        %v1389 = vand.u32 %v1348, 4294901760
        %1390 = vmatpush1.msra.mxu0 %v1389
        %1391 = vmatprep.subr.mxu0 0.0
        %v1392 = vand.u32 %v1349, 4294901760
        %1393 = vmatpush1.msra.mxu0 %v1392
        %1394 = vmatprep.subr.mxu0 0.0
        %v1395 = vand.u32 %v1350, 4294901760
        %1396 = vmatpush1.msra.mxu0 %v1395
        %1397 = vmatprep.subr.mxu0 0.0
        %v1398 = vand.u32 %v1351, 4294901760
        %1399 = vmatpush1.msra.mxu0 %v1398
        %1400 = vmatprep.subr.mxu0 0.0
        %v1401 = vand.u32 %v1352, 4294901760
        %1402 = vmatpush1.msra.mxu0 %v1401
        %1403 = vmatprep.subr.mxu0 0.0
        %v1404 = vand.u32 %v1353, 4294901760
        %1405 = vmatpush1.msra.mxu0 %v1404
        %1406 = vmatprep.subr.mxu0 0.0
        %v1407 = vand.u32 %v1354, 4294901760
        %1408 = vmatpush1.msra.mxu0 %v1407
        %1409 = vmatprep.subr.mxu0 0.0
        %1410 = vmatpush1.msra.mxu0 0.0
        %1411 = vmatprep.subr.mxu0 0.0
        %1412 = vmatpush1.msra.mxu0 0.0
        %1413 = vmatprep.subr.mxu0 0.0
        %1414 = vmatpush1.msra.mxu0 0.0
        %1415 = vmatprep.subr.mxu0 0.0
        %1416 = vmatpush1.msra.mxu0 0.0
        %1417 = vmatprep.subr.mxu0 0.0
        %1418 = vmatpush1.msra.mxu0 0.0
        %1419 = vmatprep.subr.mxu0 0.0
        %1420 = vmatpush1.msra.mxu0 0.0
        %1421 = vmatprep.subr.mxu0 0.0
        %1422 = vmatpush1.msra.mxu0 0.0
        %1423 = vmatprep.subr.mxu0 0.0
        %1424 = vmatpush1.msra.mxu0 0.0
        %1425 = vmatprep.subr.mxu0 0.0
        %1426 = vmatpush1.msra.mxu0 0.0
        %1427 = vmatprep.subr.mxu0 0.0
        %1428 = vmatpush1.msra.mxu0 0.0
        %1429 = vmatprep.subr.mxu0 0.0
        %1430 = vmatpush1.msra.mxu0 0.0
        %1431 = vmatprep.subr.mxu0 0.0
        %1432 = vmatpush1.msra.mxu0 0.0
        %1433 = vmatprep.subr.mxu0 0.0
        %1434 = vmatpush1.msra.mxu0 0.0
        %1435 = vmatprep.subr.mxu0 0.0
        %1436 = vmatpush1.msra.mxu0 0.0
        %1437 = vmatprep.subr.mxu0 0.0
        %1438 = vmatpush1.msra.mxu0 0.0
        %1439 = vmatprep.subr.mxu0 0.0
        %1440 = vmatpush1.msra.mxu0 0.0
        %1441 = vmatprep.subr.mxu0 0.0
        %1442 = vmatpush1.msra.mxu0 0.0
        %1443 = vmatprep.subr.mxu0 0.0
        %1444 = vmatpush1.msra.mxu0 0.0
        %1445 = vmatprep.subr.mxu0 0.0
        %1446 = vmatpush1.msra.mxu0 0.0
        %1447 = vmatprep.subr.mxu0 0.0
        %1448 = vmatpush1.msra.mxu0 0.0
        %1449 = vmatprep.subr.mxu0 0.0
        %1450 = vmatpush1.msra.mxu0 0.0
        %1451 = vmatprep.subr.mxu0 0.0
        %1452 = vmatpush1.msra.mxu0 0.0
        %1453 = vmatprep.subr.mxu0 0.0
        %1454 = vmatpush1.msra.mxu0 0.0
        %1455 = vmatprep.subr.mxu0 0.0
        %1456 = vmatpush1.msra.mxu0 0.0
        %1457 = vmatprep.mubr.f32.mxu0 0.0
        %v1458 = vand.u32 %v1362, 4294901760
        %v1459 = vsub.f32 %v1362, %v1458
        %v1460 = vand.u32 %v1459, 4294901760
        %v1461 = vsub.f32 %v1459, %v1460
        %v1462 = vand.u32 %v1461, 4294901760
        %1463 = vmatmul.mubr.f32.gmra.mrb[0].mxu0 %v1462
        %v1464 = vpop.f32.mrb[0].mxu0
        %v1465 = vadd.f32 %v1359, %v1464
        %v1466 = vpop.f32.mrb[0].mxu0
        %1467 = vmatprep.mubr.f32.mxu0 0.0
        %v1468 = vand.u32 %v1365, 4294901760
        %v1469 = vsub.f32 %v1365, %v1468
        %v1470 = vand.u32 %v1469, 4294901760
        %v1471 = vsub.f32 %v1469, %v1470
        %v1472 = vand.u32 %v1471, 4294901760
        %1473 = vmatmul.mubr.f32.gmra.mrb[0].mxu0 %v1472
        %v1474 = vpop.f32.mrb[0].mxu0
        %v1475 = vadd.f32 %v1359, %v1474
        %v1476 = vpop.f32.mrb[0].mxu0
        %1477 = vmatprep.mubr.f32.mxu0 0.0
        %v1478 = vand.u32 %v1368, 4294901760
        %v1479 = vsub.f32 %v1368, %v1478
        %v1480 = vand.u32 %v1479, 4294901760
        %v1481 = vsub.f32 %v1479, %v1480
        %v1482 = vand.u32 %v1481, 4294901760
        %1483 = vmatmul.mubr.f32.gmra.mrb[0].mxu0 %v1482
        %v1484 = vpop.f32.mrb[0].mxu0
        %v1485 = vadd.f32 %v1359, %v1484
        %v1486 = vpop.f32.mrb[0].mxu0
        %1487 = vmatprep.mubr.f32.mxu0 0.0
        %v1488 = vand.u32 %v1371, 4294901760
        %v1489 = vsub.f32 %v1371, %v1488
        %v1490 = vand.u32 %v1489, 4294901760
        %v1491 = vsub.f32 %v1489, %v1490
        %v1492 = vand.u32 %v1491, 4294901760
        %1493 = vmatmul.mubr.f32.gmra.mrb[0].mxu0 %v1492
        %v1494 = vpop.f32.mrb[0].mxu0
        %v1495 = vadd.f32 %v1359, %v1494
        %v1496 = vpop.f32.mrb[0].mxu0
        %1497 = vmatprep.mubr.f32.mxu0 0.0
        %v1498 = vand.u32 %v1374, 4294901760
        %v1499 = vsub.f32 %v1374, %v1498
        %v1500 = vand.u32 %v1499, 4294901760
        %v1501 = vsub.f32 %v1499, %v1500
        %v1502 = vand.u32 %v1501, 4294901760
        %1503 = vmatmul.mubr.f32.gmra.mrb[0].mxu0 %v1502
        %v1504 = vpop.f32.mrb[0].mxu0
        %v1505 = vadd.f32 %v1359, %v1504
        %v1506 = vpop.f32.mrb[0].mxu0
        %1507 = vmatprep.mubr.f32.mxu0 0.0
        %v1508 = vand.u32 %v1377, 4294901760
        %v1509 = vsub.f32 %v1377, %v1508
        %v1510 = vand.u32 %v1509, 4294901760
        %v1511 = vsub.f32 %v1509, %v1510
        %v1512 = vand.u32 %v1511, 4294901760
        %1513 = vmatmul.mubr.f32.gmra.mrb[0].mxu0 %v1512
        %v1514 = vpop.f32.mrb[0].mxu0
        %v1515 = vadd.f32 %v1359, %v1514
        %v1516 = vpop.f32.mrb[0].mxu0
        %1517 = vmatprep.mubr.f32.mxu0 0.0
        %v1518 = vand.u32 %v1380, 4294901760
        %v1519 = vsub.f32 %v1380, %v1518
        %v1520 = vand.u32 %v1519, 4294901760
        %v1521 = vsub.f32 %v1519, %v1520
        %v1522 = vand.u32 %v1521, 4294901760
        %1523 = vmatmul.mubr.f32.gmra.mrb[0].mxu0 %v1522
        %v1524 = vpop.f32.mrb[0].mxu0
        %v1525 = vadd.f32 %v1359, %v1524
        %v1526 = vpop.f32.mrb[0].mxu0
        %1527 = vmatprep.mubr.f32.mxu0 0.0
        %v1528 = vand.u32 %v1383, 4294901760
        %v1529 = vsub.f32 %v1383, %v1528
        %v1530 = vand.u32 %v1529, 4294901760
        %v1531 = vsub.f32 %v1529, %v1530
        %v1532 = vand.u32 %v1531, 4294901760
        %1533 = vmatmul.mubr.f32.gmra.mrb[0].mxu0 %v1532
        %v1534 = vpop.f32.mrb[0].mxu0
        %v1535 = vadd.f32 %v1359, %v1534
        %v1536 = vpop.f32.mrb[0].mxu0
        %1537 = vdwg.mxu0
        %1538 = vmatprep.subr.mxu0 0.0
        %v1539 = vand.u32 %v1347, 4294901760
        %v1540 = vsub.f32 %v1347, %v1539
        %v1541 = vand.u32 %v1540, 4294901760
        %v1542 = vsub.f32 %v1540, %v1541
        %v1543 = vand.u32 %v1542, 4294901760
        %1544 = vmatpush1.msra.mxu0 %v1543
        %1545 = vmatprep.subr.mxu0 0.0
        %v1546 = vand.u32 %v1348, 4294901760
        %v1547 = vsub.f32 %v1348, %v1546
        %v1548 = vand.u32 %v1547, 4294901760
        %v1549 = vsub.f32 %v1547, %v1548
        %v1550 = vand.u32 %v1549, 4294901760
        %1551 = vmatpush1.msra.mxu0 %v1550
        %1552 = vmatprep.subr.mxu0 0.0
        %v1553 = vand.u32 %v1349, 4294901760
        %v1554 = vsub.f32 %v1349, %v1553
        %v1555 = vand.u32 %v1554, 4294901760
        %v1556 = vsub.f32 %v1554, %v1555
        %v1557 = vand.u32 %v1556, 4294901760
        %1558 = vmatpush1.msra.mxu0 %v1557
        %1559 = vmatprep.subr.mxu0 0.0
        %v1560 = vand.u32 %v1350, 4294901760
        %v1561 = vsub.f32 %v1350, %v1560
        %v1562 = vand.u32 %v1561, 4294901760
        %v1563 = vsub.f32 %v1561, %v1562
        %v1564 = vand.u32 %v1563, 4294901760
        %1565 = vmatpush1.msra.mxu0 %v1564
        %1566 = vmatprep.subr.mxu0 0.0
        %v1567 = vand.u32 %v1351, 4294901760
        %v1568 = vsub.f32 %v1351, %v1567
        %v1569 = vand.u32 %v1568, 4294901760
        %v1570 = vsub.f32 %v1568, %v1569
        %v1571 = vand.u32 %v1570, 4294901760
        %1572 = vmatpush1.msra.mxu0 %v1571
        %1573 = vmatprep.subr.mxu0 0.0
        %v1574 = vand.u32 %v1352, 4294901760
        %v1575 = vsub.f32 %v1352, %v1574
        %v1576 = vand.u32 %v1575, 4294901760
        %v1577 = vsub.f32 %v1575, %v1576
        %v1578 = vand.u32 %v1577, 4294901760
        %1579 = vmatpush1.msra.mxu0 %v1578
        %1580 = vmatprep.subr.mxu0 0.0
        %v1581 = vand.u32 %v1353, 4294901760
        %v1582 = vsub.f32 %v1353, %v1581
        %v1583 = vand.u32 %v1582, 4294901760
        %v1584 = vsub.f32 %v1582, %v1583
        %v1585 = vand.u32 %v1584, 4294901760
        %1586 = vmatpush1.msra.mxu0 %v1585
        %1587 = vmatprep.subr.mxu0 0.0
        %v1588 = vand.u32 %v1354, 4294901760
        %v1589 = vsub.f32 %v1354, %v1588
        %v1590 = vand.u32 %v1589, 4294901760
        %v1591 = vsub.f32 %v1589, %v1590
        %v1592 = vand.u32 %v1591, 4294901760
        %1593 = vmatpush1.msra.mxu0 %v1592
        %1594 = vmatprep.subr.mxu0 0.0
        %1595 = vmatpush1.msra.mxu0 0.0
        %1596 = vmatprep.subr.mxu0 0.0
        %1597 = vmatpush1.msra.mxu0 0.0
        %1598 = vmatprep.subr.mxu0 0.0
        %1599 = vmatpush1.msra.mxu0 0.0
        %1600 = vmatprep.subr.mxu0 0.0
        %1601 = vmatpush1.msra.mxu0 0.0
        %1602 = vmatprep.subr.mxu0 0.0
        %1603 = vmatpush1.msra.mxu0 0.0
        %1604 = vmatprep.subr.mxu0 0.0
        %1605 = vmatpush1.msra.mxu0 0.0
        %1606 = vmatprep.subr.mxu0 0.0
        %1607 = vmatpush1.msra.mxu0 0.0
        %1608 = vmatprep.subr.mxu0 0.0
        %1609 = vmatpush1.msra.mxu0 0.0
        %1610 = vmatprep.subr.mxu0 0.0
        %1611 = vmatpush1.msra.mxu0 0.0
        %1612 = vmatprep.subr.mxu0 0.0
        %1613 = vmatpush1.msra.mxu0 0.0
        %1614 = vmatprep.subr.mxu0 0.0
        %1615 = vmatpush1.msra.mxu0 0.0
        %1616 = vmatprep.subr.mxu0 0.0
        %1617 = vmatpush1.msra.mxu0 0.0
        %1618 = vmatprep.subr.mxu0 0.0
        %1619 = vmatpush1.msra.mxu0 0.0
        %1620 = vmatprep.subr.mxu0 0.0
        %1621 = vmatpush1.msra.mxu0 0.0
        %1622 = vmatprep.subr.mxu0 0.0
        %1623 = vmatpush1.msra.mxu0 0.0
        %1624 = vmatprep.subr.mxu0 0.0
        %1625 = vmatpush1.msra.mxu0 0.0
        %1626 = vmatprep.subr.mxu0 0.0
        %1627 = vmatpush1.msra.mxu0 0.0
        %1628 = vmatprep.subr.mxu0 0.0
        %1629 = vmatpush1.msra.mxu0 0.0
        %1630 = vmatprep.subr.mxu0 0.0
        %1631 = vmatpush1.msra.mxu0 0.0
        %1632 = vmatprep.subr.mxu0 0.0
        %1633 = vmatpush1.msra.mxu0 0.0
        %1634 = vmatprep.subr.mxu0 0.0
        %1635 = vmatpush1.msra.mxu0 0.0
        %1636 = vmatprep.subr.mxu0 0.0
        %1637 = vmatpush1.msra.mxu0 0.0
        %1638 = vmatprep.subr.mxu0 0.0
        %1639 = vmatpush1.msra.mxu0 0.0
        %1640 = vmatprep.subr.mxu0 0.0
        %1641 = vmatpush1.msra.mxu0 0.0
        %1642 = vmatprep.mubr.f32.mxu0 0.0
        %v1643 = vand.u32 %v1362, 4294901760
        %1644 = vmatmul.mubr.f32.gmra.mrb[0].mxu0 %v1643
        %v1645 = vpop.f32.mrb[0].mxu0
        %v1646 = vadd.f32 %v1465, %v1645
        %v1647 = vpop.f32.mrb[0].mxu0
        %1648 = vmatprep.mubr.f32.mxu0 0.0
        %v1649 = vand.u32 %v1365, 4294901760
        %1650 = vmatmul.mubr.f32.gmra.mrb[0].mxu0 %v1649
        %v1651 = vpop.f32.mrb[0].mxu0
        %v1652 = vadd.f32 %v1475, %v1651
        %v1653 = vpop.f32.mrb[0].mxu0
        %1654 = vmatprep.mubr.f32.mxu0 0.0
        %v1655 = vand.u32 %v1368, 4294901760
        %1656 = vmatmul.mubr.f32.gmra.mrb[0].mxu0 %v1655
        %v1657 = vpop.f32.mrb[0].mxu0
        %v1658 = vadd.f32 %v1485, %v1657
        %v1659 = vpop.f32.mrb[0].mxu0
        %1660 = vmatprep.mubr.f32.mxu0 0.0
        %v1661 = vand.u32 %v1371, 4294901760
        %1662 = vmatmul.mubr.f32.gmra.mrb[0].mxu0 %v1661
        %v1663 = vpop.f32.mrb[0].mxu0
        %v1664 = vadd.f32 %v1495, %v1663
        %v1665 = vpop.f32.mrb[0].mxu0
        %1666 = vmatprep.mubr.f32.mxu0 0.0
        %v1667 = vand.u32 %v1374, 4294901760
        %1668 = vmatmul.mubr.f32.gmra.mrb[0].mxu0 %v1667
        %v1669 = vpop.f32.mrb[0].mxu0
        %v1670 = vadd.f32 %v1505, %v1669
        %v1671 = vpop.f32.mrb[0].mxu0
        %1672 = vmatprep.mubr.f32.mxu0 0.0
        %v1673 = vand.u32 %v1377, 4294901760
        %1674 = vmatmul.mubr.f32.gmra.mrb[0].mxu0 %v1673
        %v1675 = vpop.f32.mrb[0].mxu0
        %v1676 = vadd.f32 %v1515, %v1675
        %v1677 = vpop.f32.mrb[0].mxu0
        %1678 = vmatprep.mubr.f32.mxu0 0.0
        %v1679 = vand.u32 %v1380, 4294901760
        %1680 = vmatmul.mubr.f32.gmra.mrb[0].mxu0 %v1679
        %v1681 = vpop.f32.mrb[0].mxu0
        %v1682 = vadd.f32 %v1525, %v1681
        %v1683 = vpop.f32.mrb[0].mxu0
        %1684 = vmatprep.mubr.f32.mxu0 0.0
        %v1685 = vand.u32 %v1383, 4294901760
        %1686 = vmatmul.mubr.f32.gmra.mrb[0].mxu0 %v1685
        %v1687 = vpop.f32.mrb[0].mxu0
        %v1688 = vadd.f32 %v1535, %v1687
        %v1689 = vpop.f32.mrb[0].mxu0
        %1690 = vdwg.mxu0
        %1691 = vmatprep.subr.mxu0 0.0
        %v1692 = vand.u32 %v1347, 4294901760
        %v1693 = vsub.f32 %v1347, %v1692
        %1694 = vmatpush1.msra.mxu0 %v1693
        %1695 = vmatprep.subr.mxu0 0.0
        %v1696 = vand.u32 %v1348, 4294901760
        %v1697 = vsub.f32 %v1348, %v1696
        %1698 = vmatpush1.msra.mxu0 %v1697
        %1699 = vmatprep.subr.mxu0 0.0
        %v1700 = vand.u32 %v1349, 4294901760
        %v1701 = vsub.f32 %v1349, %v1700
        %1702 = vmatpush1.msra.mxu0 %v1701
        %1703 = vmatprep.subr.mxu0 0.0
        %v1704 = vand.u32 %v1350, 4294901760
        %v1705 = vsub.f32 %v1350, %v1704
        %1706 = vmatpush1.msra.mxu0 %v1705
        %1707 = vmatprep.subr.mxu0 0.0
        %v1708 = vand.u32 %v1351, 4294901760
        %v1709 = vsub.f32 %v1351, %v1708
        %1710 = vmatpush1.msra.mxu0 %v1709
        %1711 = vmatprep.subr.mxu0 0.0
        %v1712 = vand.u32 %v1352, 4294901760
        %v1713 = vsub.f32 %v1352, %v1712
        %1714 = vmatpush1.msra.mxu0 %v1713
        %1715 = vmatprep.subr.mxu0 0.0
        %v1716 = vand.u32 %v1353, 4294901760
        %v1717 = vsub.f32 %v1353, %v1716
        %1718 = vmatpush1.msra.mxu0 %v1717
        %1719 = vmatprep.subr.mxu0 0.0
        %v1720 = vand.u32 %v1354, 4294901760
        %v1721 = vsub.f32 %v1354, %v1720
        %1722 = vmatpush1.msra.mxu0 %v1721
        %1723 = vmatprep.subr.mxu0 0.0
        %1724 = vmatpush1.msra.mxu0 0.0
        %1725 = vmatprep.subr.mxu0 0.0
        %1726 = vmatpush1.msra.mxu0 0.0
        %1727 = vmatprep.subr.mxu0 0.0
        %1728 = vmatpush1.msra.mxu0 0.0
        %1729 = vmatprep.subr.mxu0 0.0
        %1730 = vmatpush1.msra.mxu0 0.0
        %1731 = vmatprep.subr.mxu0 0.0
        %1732 = vmatpush1.msra.mxu0 0.0
        %1733 = vmatprep.subr.mxu0 0.0
        %1734 = vmatpush1.msra.mxu0 0.0
        %1735 = vmatprep.subr.mxu0 0.0
        %1736 = vmatpush1.msra.mxu0 0.0
        %1737 = vmatprep.subr.mxu0 0.0
        %1738 = vmatpush1.msra.mxu0 0.0
        %1739 = vmatprep.subr.mxu0 0.0
        %1740 = vmatpush1.msra.mxu0 0.0
        %1741 = vmatprep.subr.mxu0 0.0
        %1742 = vmatpush1.msra.mxu0 0.0
        %1743 = vmatprep.subr.mxu0 0.0
        %1744 = vmatpush1.msra.mxu0 0.0
        %1745 = vmatprep.subr.mxu0 0.0
        %1746 = vmatpush1.msra.mxu0 0.0
        %1747 = vmatprep.subr.mxu0 0.0
        %1748 = vmatpush1.msra.mxu0 0.0
        %1749 = vmatprep.subr.mxu0 0.0
        %1750 = vmatpush1.msra.mxu0 0.0
        %1751 = vmatprep.subr.mxu0 0.0
        %1752 = vmatpush1.msra.mxu0 0.0
        %1753 = vmatprep.subr.mxu0 0.0
        %1754 = vmatpush1.msra.mxu0 0.0
        %1755 = vmatprep.subr.mxu0 0.0
        %1756 = vmatpush1.msra.mxu0 0.0
        %1757 = vmatprep.subr.mxu0 0.0
        %1758 = vmatpush1.msra.mxu0 0.0
        %1759 = vmatprep.subr.mxu0 0.0
        %1760 = vmatpush1.msra.mxu0 0.0
        %1761 = vmatprep.subr.mxu0 0.0
        %1762 = vmatpush1.msra.mxu0 0.0
        %1763 = vmatprep.subr.mxu0 0.0
        %1764 = vmatpush1.msra.mxu0 0.0
        %1765 = vmatprep.subr.mxu0 0.0
        %1766 = vmatpush1.msra.mxu0 0.0
        %1767 = vmatprep.subr.mxu0 0.0
        %1768 = vmatpush1.msra.mxu0 0.0
        %1769 = vmatprep.subr.mxu0 0.0
        %1770 = vmatpush1.msra.mxu0 0.0
        %1771 = vmatprep.mubr.f32.mxu0 0.0
        %v1772 = vand.u32 %v1362, 4294901760
        %v1773 = vsub.f32 %v1362, %v1772
        %1774 = vmatmul.mubr.f32.gmra.mrb[0].mxu0 %v1773
        %v1775 = vpop.f32.mrb[0].mxu0
        %v1776 = vadd.f32 %v1646, %v1775
        %v1777 = vpop.f32.mrb[0].mxu0
        %1778 = vmatprep.mubr.f32.mxu0 0.0
        %v1779 = vand.u32 %v1365, 4294901760
        %v1780 = vsub.f32 %v1365, %v1779
        %1781 = vmatmul.mubr.f32.gmra.mrb[0].mxu0 %v1780
        %v1782 = vpop.f32.mrb[0].mxu0
        %v1783 = vadd.f32 %v1652, %v1782
        %v1784 = vpop.f32.mrb[0].mxu0
        %1785 = vmatprep.mubr.f32.mxu0 0.0
        %v1786 = vand.u32 %v1368, 4294901760
        %v1787 = vsub.f32 %v1368, %v1786
        %1788 = vmatmul.mubr.f32.gmra.mrb[0].mxu0 %v1787
        %v1789 = vpop.f32.mrb[0].mxu0
        %v1790 = vadd.f32 %v1658, %v1789
        %v1791 = vpop.f32.mrb[0].mxu0
        %1792 = vmatprep.mubr.f32.mxu0 0.0
        %v1793 = vand.u32 %v1371, 4294901760
        %v1794 = vsub.f32 %v1371, %v1793
        %1795 = vmatmul.mubr.f32.gmra.mrb[0].mxu0 %v1794
        %v1796 = vpop.f32.mrb[0].mxu0
        %v1797 = vadd.f32 %v1664, %v1796
        %v1798 = vpop.f32.mrb[0].mxu0
        %1799 = vmatprep.mubr.f32.mxu0 0.0
        %v1800 = vand.u32 %v1374, 4294901760
        %v1801 = vsub.f32 %v1374, %v1800
        %1802 = vmatmul.mubr.f32.gmra.mrb[0].mxu0 %v1801
        %v1803 = vpop.f32.mrb[0].mxu0
        %v1804 = vadd.f32 %v1670, %v1803
        %v1805 = vpop.f32.mrb[0].mxu0
        %1806 = vmatprep.mubr.f32.mxu0 0.0
        %v1807 = vand.u32 %v1377, 4294901760
        %v1808 = vsub.f32 %v1377, %v1807
        %1809 = vmatmul.mubr.f32.gmra.mrb[0].mxu0 %v1808
        %v1810 = vpop.f32.mrb[0].mxu0
        %v1811 = vadd.f32 %v1676, %v1810
        %v1812 = vpop.f32.mrb[0].mxu0
        %1813 = vmatprep.mubr.f32.mxu0 0.0
        %v1814 = vand.u32 %v1380, 4294901760
        %v1815 = vsub.f32 %v1380, %v1814
        %1816 = vmatmul.mubr.f32.gmra.mrb[0].mxu0 %v1815
        %v1817 = vpop.f32.mrb[0].mxu0
        %v1818 = vadd.f32 %v1682, %v1817
        %v1819 = vpop.f32.mrb[0].mxu0
        %1820 = vmatprep.mubr.f32.mxu0 0.0
        %v1821 = vand.u32 %v1383, 4294901760
        %v1822 = vsub.f32 %v1383, %v1821
        %1823 = vmatmul.mubr.f32.gmra.mrb[0].mxu0 %v1822
        %v1824 = vpop.f32.mrb[0].mxu0
        %v1825 = vadd.f32 %v1688, %v1824
        %v1826 = vpop.f32.mrb[0].mxu0
        %1827 = vdwg.mxu0
        %1828 = vmatprep.subr.mxu0 0.0
        %v1829 = vand.u32 %v1347, 4294901760
        %1830 = vmatpush1.msra.mxu0 %v1829
        %1831 = vmatprep.subr.mxu0 0.0
        %v1832 = vand.u32 %v1348, 4294901760
        %1833 = vmatpush1.msra.mxu0 %v1832
        %1834 = vmatprep.subr.mxu0 0.0
        %v1835 = vand.u32 %v1349, 4294901760
        %1836 = vmatpush1.msra.mxu0 %v1835
        %1837 = vmatprep.subr.mxu0 0.0
        %v1838 = vand.u32 %v1350, 4294901760
        %1839 = vmatpush1.msra.mxu0 %v1838
        %1840 = vmatprep.subr.mxu0 0.0
        %v1841 = vand.u32 %v1351, 4294901760
        %1842 = vmatpush1.msra.mxu0 %v1841
        %1843 = vmatprep.subr.mxu0 0.0
        %v1844 = vand.u32 %v1352, 4294901760
        %1845 = vmatpush1.msra.mxu0 %v1844
        %1846 = vmatprep.subr.mxu0 0.0
        %v1847 = vand.u32 %v1353, 4294901760
        %1848 = vmatpush1.msra.mxu0 %v1847
        %1849 = vmatprep.subr.mxu0 0.0
        %v1850 = vand.u32 %v1354, 4294901760
        %1851 = vmatpush1.msra.mxu0 %v1850
        %1852 = vmatprep.subr.mxu0 0.0
        %1853 = vmatpush1.msra.mxu0 0.0
        %1854 = vmatprep.subr.mxu0 0.0
        %1855 = vmatpush1.msra.mxu0 0.0
        %1856 = vmatprep.subr.mxu0 0.0
        %1857 = vmatpush1.msra.mxu0 0.0
        %1858 = vmatprep.subr.mxu0 0.0
        %1859 = vmatpush1.msra.mxu0 0.0
        %1860 = vmatprep.subr.mxu0 0.0
        %1861 = vmatpush1.msra.mxu0 0.0
        %1862 = vmatprep.subr.mxu0 0.0
        %1863 = vmatpush1.msra.mxu0 0.0
        %1864 = vmatprep.subr.mxu0 0.0
        %1865 = vmatpush1.msra.mxu0 0.0
        %1866 = vmatprep.subr.mxu0 0.0
        %1867 = vmatpush1.msra.mxu0 0.0
        %1868 = vmatprep.subr.mxu0 0.0
        %1869 = vmatpush1.msra.mxu0 0.0
        %1870 = vmatprep.subr.mxu0 0.0
        %1871 = vmatpush1.msra.mxu0 0.0
        %1872 = vmatprep.subr.mxu0 0.0
        %1873 = vmatpush1.msra.mxu0 0.0
        %1874 = vmatprep.subr.mxu0 0.0
        %1875 = vmatpush1.msra.mxu0 0.0
        %1876 = vmatprep.subr.mxu0 0.0
        %1877 = vmatpush1.msra.mxu0 0.0
        %1878 = vmatprep.subr.mxu0 0.0
        %1879 = vmatpush1.msra.mxu0 0.0
        %1880 = vmatprep.subr.mxu0 0.0
        %1881 = vmatpush1.msra.mxu0 0.0
        %1882 = vmatprep.subr.mxu0 0.0
        %1883 = vmatpush1.msra.mxu0 0.0
        %1884 = vmatprep.subr.mxu0 0.0
        %1885 = vmatpush1.msra.mxu0 0.0
        %1886 = vmatprep.subr.mxu0 0.0
        %1887 = vmatpush1.msra.mxu0 0.0
        %1888 = vmatprep.subr.mxu0 0.0
        %1889 = vmatpush1.msra.mxu0 0.0
        %1890 = vmatprep.subr.mxu0 0.0
        %1891 = vmatpush1.msra.mxu0 0.0
        %1892 = vmatprep.subr.mxu0 0.0
        %1893 = vmatpush1.msra.mxu0 0.0
        %1894 = vmatprep.subr.mxu0 0.0
        %1895 = vmatpush1.msra.mxu0 0.0
        %1896 = vmatprep.subr.mxu0 0.0
        %1897 = vmatpush1.msra.mxu0 0.0
        %1898 = vmatprep.subr.mxu0 0.0
        %1899 = vmatpush1.msra.mxu0 0.0
        %1900 = vmatprep.mubr.f32.mxu0 0.0
        %v1901 = vand.u32 %v1362, 4294901760
        %v1902 = vsub.f32 %v1362, %v1901
        %v1903 = vand.u32 %v1902, 4294901760
        %1904 = vmatmul.mubr.f32.gmra.mrb[0].mxu0 %v1903
        %v1905 = vpop.f32.mrb[0].mxu0
        %v1906 = vadd.f32 %v1776, %v1905
        %v1907 = vpop.f32.mrb[0].mxu0
        %1908 = vmatprep.mubr.f32.mxu0 0.0
        %v1909 = vand.u32 %v1365, 4294901760
        %v1910 = vsub.f32 %v1365, %v1909
        %v1911 = vand.u32 %v1910, 4294901760
        %1912 = vmatmul.mubr.f32.gmra.mrb[0].mxu0 %v1911
        %v1913 = vpop.f32.mrb[0].mxu0
        %v1914 = vadd.f32 %v1783, %v1913
        %v1915 = vpop.f32.mrb[0].mxu0
        %1916 = vmatprep.mubr.f32.mxu0 0.0
        %v1917 = vand.u32 %v1368, 4294901760
        %v1918 = vsub.f32 %v1368, %v1917
        %v1919 = vand.u32 %v1918, 4294901760
        %1920 = vmatmul.mubr.f32.gmra.mrb[0].mxu0 %v1919
        %v1921 = vpop.f32.mrb[0].mxu0
        %v1922 = vadd.f32 %v1790, %v1921
        %v1923 = vpop.f32.mrb[0].mxu0
        %1924 = vmatprep.mubr.f32.mxu0 0.0
        %v1925 = vand.u32 %v1371, 4294901760
        %v1926 = vsub.f32 %v1371, %v1925
        %v1927 = vand.u32 %v1926, 4294901760
        %1928 = vmatmul.mubr.f32.gmra.mrb[0].mxu0 %v1927
        %v1929 = vpop.f32.mrb[0].mxu0
        %v1930 = vadd.f32 %v1797, %v1929
        %v1931 = vpop.f32.mrb[0].mxu0
        %1932 = vmatprep.mubr.f32.mxu0 0.0
        %v1933 = vand.u32 %v1374, 4294901760
        %v1934 = vsub.f32 %v1374, %v1933
        %v1935 = vand.u32 %v1934, 4294901760
        %1936 = vmatmul.mubr.f32.gmra.mrb[0].mxu0 %v1935
        %v1937 = vpop.f32.mrb[0].mxu0
        %v1938 = vadd.f32 %v1804, %v1937
        %v1939 = vpop.f32.mrb[0].mxu0
        %1940 = vmatprep.mubr.f32.mxu0 0.0
        %v1941 = vand.u32 %v1377, 4294901760
        %v1942 = vsub.f32 %v1377, %v1941
        %v1943 = vand.u32 %v1942, 4294901760
        %1944 = vmatmul.mubr.f32.gmra.mrb[0].mxu0 %v1943
        %v1945 = vpop.f32.mrb[0].mxu0
        %v1946 = vadd.f32 %v1811, %v1945
        %v1947 = vpop.f32.mrb[0].mxu0
        %1948 = vmatprep.mubr.f32.mxu0 0.0
        %v1949 = vand.u32 %v1380, 4294901760
        %v1950 = vsub.f32 %v1380, %v1949
        %v1951 = vand.u32 %v1950, 4294901760
        %1952 = vmatmul.mubr.f32.gmra.mrb[0].mxu0 %v1951
        %v1953 = vpop.f32.mrb[0].mxu0
        %v1954 = vadd.f32 %v1818, %v1953
        %v1955 = vpop.f32.mrb[0].mxu0
        %1956 = vmatprep.mubr.f32.mxu0 0.0
        %v1957 = vand.u32 %v1383, 4294901760
        %v1958 = vsub.f32 %v1383, %v1957
        %v1959 = vand.u32 %v1958, 4294901760
        %1960 = vmatmul.mubr.f32.gmra.mrb[0].mxu0 %v1959
        %v1961 = vpop.f32.mrb[0].mxu0
        %v1962 = vadd.f32 %v1825, %v1961
        %v1963 = vpop.f32.mrb[0].mxu0
        %1964 = vdwg.mxu0
        %1965 = vmatprep.subr.mxu0 0.0
        %v1966 = vand.u32 %v1347, 4294901760
        %v1967 = vsub.f32 %v1347, %v1966
        %v1968 = vand.u32 %v1967, 4294901760
        %1969 = vmatpush1.msra.mxu0 %v1968
        %1970 = vmatprep.subr.mxu0 0.0
        %v1971 = vand.u32 %v1348, 4294901760
        %v1972 = vsub.f32 %v1348, %v1971
        %v1973 = vand.u32 %v1972, 4294901760
        %1974 = vmatpush1.msra.mxu0 %v1973
        %1975 = vmatprep.subr.mxu0 0.0
        %v1976 = vand.u32 %v1349, 4294901760
        %v1977 = vsub.f32 %v1349, %v1976
        %v1978 = vand.u32 %v1977, 4294901760
        %1979 = vmatpush1.msra.mxu0 %v1978
        %1980 = vmatprep.subr.mxu0 0.0
        %v1981 = vand.u32 %v1350, 4294901760
        %v1982 = vsub.f32 %v1350, %v1981
        %v1983 = vand.u32 %v1982, 4294901760
        %1984 = vmatpush1.msra.mxu0 %v1983
        %1985 = vmatprep.subr.mxu0 0.0
        %v1986 = vand.u32 %v1351, 4294901760
        %v1987 = vsub.f32 %v1351, %v1986
        %v1988 = vand.u32 %v1987, 4294901760
        %1989 = vmatpush1.msra.mxu0 %v1988
        %1990 = vmatprep.subr.mxu0 0.0
        %v1991 = vand.u32 %v1352, 4294901760
        %v1992 = vsub.f32 %v1352, %v1991
        %v1993 = vand.u32 %v1992, 4294901760
        %1994 = vmatpush1.msra.mxu0 %v1993
        %1995 = vmatprep.subr.mxu0 0.0
        %v1996 = vand.u32 %v1353, 4294901760
        %v1997 = vsub.f32 %v1353, %v1996
        %v1998 = vand.u32 %v1997, 4294901760
        %1999 = vmatpush1.msra.mxu0 %v1998
        %2000 = vmatprep.subr.mxu0 0.0
        %v2001 = vand.u32 %v1354, 4294901760
        %v2002 = vsub.f32 %v1354, %v2001
        %v2003 = vand.u32 %v2002, 4294901760
        %2004 = vmatpush1.msra.mxu0 %v2003
        %2005 = vmatprep.subr.mxu0 0.0
        %2006 = vmatpush1.msra.mxu0 0.0
        %2007 = vmatprep.subr.mxu0 0.0
        %2008 = vmatpush1.msra.mxu0 0.0
        %2009 = vmatprep.subr.mxu0 0.0
        %2010 = vmatpush1.msra.mxu0 0.0
        %2011 = vmatprep.subr.mxu0 0.0
        %2012 = vmatpush1.msra.mxu0 0.0
        %2013 = vmatprep.subr.mxu0 0.0
        %2014 = vmatpush1.msra.mxu0 0.0
        %2015 = vmatprep.subr.mxu0 0.0
        %2016 = vmatpush1.msra.mxu0 0.0
        %2017 = vmatprep.subr.mxu0 0.0
        %2018 = vmatpush1.msra.mxu0 0.0
        %2019 = vmatprep.subr.mxu0 0.0
        %2020 = vmatpush1.msra.mxu0 0.0
        %2021 = vmatprep.subr.mxu0 0.0
        %2022 = vmatpush1.msra.mxu0 0.0
        %2023 = vmatprep.subr.mxu0 0.0
        %2024 = vmatpush1.msra.mxu0 0.0
        %2025 = vmatprep.subr.mxu0 0.0
        %2026 = vmatpush1.msra.mxu0 0.0
        %2027 = vmatprep.subr.mxu0 0.0
        %2028 = vmatpush1.msra.mxu0 0.0
        %2029 = vmatprep.subr.mxu0 0.0
        %2030 = vmatpush1.msra.mxu0 0.0
        %2031 = vmatprep.subr.mxu0 0.0
        %2032 = vmatpush1.msra.mxu0 0.0
        %2033 = vmatprep.subr.mxu0 0.0
        %2034 = vmatpush1.msra.mxu0 0.0
        %2035 = vmatprep.subr.mxu0 0.0
        %2036 = vmatpush1.msra.mxu0 0.0
        %2037 = vmatprep.subr.mxu0 0.0
        %2038 = vmatpush1.msra.mxu0 0.0
        %2039 = vmatprep.subr.mxu0 0.0
        %2040 = vmatpush1.msra.mxu0 0.0
        %2041 = vmatprep.subr.mxu0 0.0
        %2042 = vmatpush1.msra.mxu0 0.0
        %2043 = vmatprep.subr.mxu0 0.0
        %2044 = vmatpush1.msra.mxu0 0.0
        %2045 = vmatprep.subr.mxu0 0.0
        %2046 = vmatpush1.msra.mxu0 0.0
        %2047 = vmatprep.subr.mxu0 0.0
        %2048 = vmatpush1.msra.mxu0 0.0
        %2049 = vmatprep.subr.mxu0 0.0
        %2050 = vmatpush1.msra.mxu0 0.0
        %2051 = vmatprep.subr.mxu0 0.0
        %2052 = vmatpush1.msra.mxu0 0.0
        %2053 = vmatprep.mubr.f32.mxu0 0.0
        %v2054 = vand.u32 %v1362, 4294901760
        %2055 = vmatmul.mubr.f32.gmra.mrb[0].mxu0 %v2054
        %v2056 = vpop.f32.mrb[0].mxu0
        %v2057 = vadd.f32 %v1906, %v2056
        %v2058 = vpop.f32.mrb[0].mxu0
        %2059 = vmatprep.mubr.f32.mxu0 0.0
        %v2060 = vand.u32 %v1365, 4294901760
        %2061 = vmatmul.mubr.f32.gmra.mrb[0].mxu0 %v2060
        %v2062 = vpop.f32.mrb[0].mxu0
        %v2063 = vadd.f32 %v1914, %v2062
        %v2064 = vpop.f32.mrb[0].mxu0
        %2065 = vmatprep.mubr.f32.mxu0 0.0
        %v2066 = vand.u32 %v1368, 4294901760
        %2067 = vmatmul.mubr.f32.gmra.mrb[0].mxu0 %v2066
        %v2068 = vpop.f32.mrb[0].mxu0
        %v2069 = vadd.f32 %v1922, %v2068
        %v2070 = vpop.f32.mrb[0].mxu0
        %2071 = vmatprep.mubr.f32.mxu0 0.0
        %v2072 = vand.u32 %v1371, 4294901760
        %2073 = vmatmul.mubr.f32.gmra.mrb[0].mxu0 %v2072
        %v2074 = vpop.f32.mrb[0].mxu0
        %v2075 = vadd.f32 %v1930, %v2074
        %v2076 = vpop.f32.mrb[0].mxu0
        %2077 = vmatprep.mubr.f32.mxu0 0.0
        %v2078 = vand.u32 %v1374, 4294901760
        %2079 = vmatmul.mubr.f32.gmra.mrb[0].mxu0 %v2078
        %v2080 = vpop.f32.mrb[0].mxu0
        %v2081 = vadd.f32 %v1938, %v2080
        %v2082 = vpop.f32.mrb[0].mxu0
        %2083 = vmatprep.mubr.f32.mxu0 0.0
        %v2084 = vand.u32 %v1377, 4294901760
        %2085 = vmatmul.mubr.f32.gmra.mrb[0].mxu0 %v2084
        %v2086 = vpop.f32.mrb[0].mxu0
        %v2087 = vadd.f32 %v1946, %v2086
        %v2088 = vpop.f32.mrb[0].mxu0
        %2089 = vmatprep.mubr.f32.mxu0 0.0
        %v2090 = vand.u32 %v1380, 4294901760
        %2091 = vmatmul.mubr.f32.gmra.mrb[0].mxu0 %v2090
        %v2092 = vpop.f32.mrb[0].mxu0
        %v2093 = vadd.f32 %v1954, %v2092
        %v2094 = vpop.f32.mrb[0].mxu0
        %2095 = vmatprep.mubr.f32.mxu0 0.0
        %v2096 = vand.u32 %v1383, 4294901760
        %2097 = vmatmul.mubr.f32.gmra.mrb[0].mxu0 %v2096
        %v2098 = vpop.f32.mrb[0].mxu0
        %v2099 = vadd.f32 %v1962, %v2098
        %v2100 = vpop.f32.mrb[0].mxu0
        %2101 = vdwg.mxu0
        %2102 = vmatprep.subr.mxu0 0.0
        %v2103 = vand.u32 %v1347, 4294901760
        %2104 = vmatpush1.msra.mxu0 %v2103
        %2105 = vmatprep.subr.mxu0 0.0
        %v2106 = vand.u32 %v1348, 4294901760
        %2107 = vmatpush1.msra.mxu0 %v2106
        %2108 = vmatprep.subr.mxu0 0.0
        %v2109 = vand.u32 %v1349, 4294901760
        %2110 = vmatpush1.msra.mxu0 %v2109
        %2111 = vmatprep.subr.mxu0 0.0
        %v2112 = vand.u32 %v1350, 4294901760
        %2113 = vmatpush1.msra.mxu0 %v2112
        %2114 = vmatprep.subr.mxu0 0.0
        %v2115 = vand.u32 %v1351, 4294901760
        %2116 = vmatpush1.msra.mxu0 %v2115
        %2117 = vmatprep.subr.mxu0 0.0
        %v2118 = vand.u32 %v1352, 4294901760
        %2119 = vmatpush1.msra.mxu0 %v2118
        %2120 = vmatprep.subr.mxu0 0.0
        %v2121 = vand.u32 %v1353, 4294901760
        %2122 = vmatpush1.msra.mxu0 %v2121
        %2123 = vmatprep.subr.mxu0 0.0
        %v2124 = vand.u32 %v1354, 4294901760
        %2125 = vmatpush1.msra.mxu0 %v2124
        %2126 = vmatprep.subr.mxu0 0.0
        %2127 = vmatpush1.msra.mxu0 0.0
        %2128 = vmatprep.subr.mxu0 0.0
        %2129 = vmatpush1.msra.mxu0 0.0
        %2130 = vmatprep.subr.mxu0 0.0
        %2131 = vmatpush1.msra.mxu0 0.0
        %2132 = vmatprep.subr.mxu0 0.0
        %2133 = vmatpush1.msra.mxu0 0.0
        %2134 = vmatprep.subr.mxu0 0.0
        %2135 = vmatpush1.msra.mxu0 0.0
        %2136 = vmatprep.subr.mxu0 0.0
        %2137 = vmatpush1.msra.mxu0 0.0
        %2138 = vmatprep.subr.mxu0 0.0
        %2139 = vmatpush1.msra.mxu0 0.0
        %2140 = vmatprep.subr.mxu0 0.0
        %2141 = vmatpush1.msra.mxu0 0.0
        %2142 = vmatprep.subr.mxu0 0.0
        %2143 = vmatpush1.msra.mxu0 0.0
        %2144 = vmatprep.subr.mxu0 0.0
        %2145 = vmatpush1.msra.mxu0 0.0
        %2146 = vmatprep.subr.mxu0 0.0
        %2147 = vmatpush1.msra.mxu0 0.0
        %2148 = vmatprep.subr.mxu0 0.0
        %2149 = vmatpush1.msra.mxu0 0.0
        %2150 = vmatprep.subr.mxu0 0.0
        %2151 = vmatpush1.msra.mxu0 0.0
        %2152 = vmatprep.subr.mxu0 0.0
        %2153 = vmatpush1.msra.mxu0 0.0
        %2154 = vmatprep.subr.mxu0 0.0
        %2155 = vmatpush1.msra.mxu0 0.0
        %2156 = vmatprep.subr.mxu0 0.0
        %2157 = vmatpush1.msra.mxu0 0.0
        %2158 = vmatprep.subr.mxu0 0.0
        %2159 = vmatpush1.msra.mxu0 0.0
        %2160 = vmatprep.subr.mxu0 0.0
        %2161 = vmatpush1.msra.mxu0 0.0
        %2162 = vmatprep.subr.mxu0 0.0
        %2163 = vmatpush1.msra.mxu0 0.0
        %2164 = vmatprep.subr.mxu0 0.0
        %2165 = vmatpush1.msra.mxu0 0.0
        %2166 = vmatprep.subr.mxu0 0.0
        %2167 = vmatpush1.msra.mxu0 0.0
        %2168 = vmatprep.subr.mxu0 0.0
        %2169 = vmatpush1.msra.mxu0 0.0
        %2170 = vmatprep.subr.mxu0 0.0
        %2171 = vmatpush1.msra.mxu0 0.0
        %2172 = vmatprep.subr.mxu0 0.0
        %2173 = vmatpush1.msra.mxu0 0.0
        %2174 = vmatprep.mubr.f32.mxu0 0.0
        %v2175 = vand.u32 %v1362, 4294901760
        %2176 = vmatmul.mubr.f32.gmra.mrb[0].mxu0 %v2175
        %v2177 = vpop.f32.mrb[0].mxu0
        %v2178 = vadd.f32 %v2057, %v2177
        %v2179 = vpop.f32.mrb[0].mxu0
        %2180 = vmatprep.mubr.f32.mxu0 0.0
        %v2181 = vand.u32 %v1365, 4294901760
        %2182 = vmatmul.mubr.f32.gmra.mrb[0].mxu0 %v2181
        %v2183 = vpop.f32.mrb[0].mxu0
        %v2184 = vadd.f32 %v2063, %v2183
        %v2185 = vpop.f32.mrb[0].mxu0
        %2186 = vmatprep.mubr.f32.mxu0 0.0
        %v2187 = vand.u32 %v1368, 4294901760
        %2188 = vmatmul.mubr.f32.gmra.mrb[0].mxu0 %v2187
        %v2189 = vpop.f32.mrb[0].mxu0
        %v2190 = vadd.f32 %v2069, %v2189
        %v2191 = vpop.f32.mrb[0].mxu0
        %2192 = vmatprep.mubr.f32.mxu0 0.0
        %v2193 = vand.u32 %v1371, 4294901760
        %2194 = vmatmul.mubr.f32.gmra.mrb[0].mxu0 %v2193
        %v2195 = vpop.f32.mrb[0].mxu0
        %v2196 = vadd.f32 %v2075, %v2195
        %v2197 = vpop.f32.mrb[0].mxu0
        %2198 = vmatprep.mubr.f32.mxu0 0.0
        %v2199 = vand.u32 %v1374, 4294901760
        %2200 = vmatmul.mubr.f32.gmra.mrb[0].mxu0 %v2199
        %v2201 = vpop.f32.mrb[0].mxu0
        %v2202 = vadd.f32 %v2081, %v2201
        %v2203 = vpop.f32.mrb[0].mxu0
        %2204 = vmatprep.mubr.f32.mxu0 0.0
        %v2205 = vand.u32 %v1377, 4294901760
        %2206 = vmatmul.mubr.f32.gmra.mrb[0].mxu0 %v2205
        %v2207 = vpop.f32.mrb[0].mxu0
        %v2208 = vadd.f32 %v2087, %v2207
        %v2209 = vpop.f32.mrb[0].mxu0
        %2210 = vmatprep.mubr.f32.mxu0 0.0
        %v2211 = vand.u32 %v1380, 4294901760
        %2212 = vmatmul.mubr.f32.gmra.mrb[0].mxu0 %v2211
        %v2213 = vpop.f32.mrb[0].mxu0
        %v2214 = vadd.f32 %v2093, %v2213
        %v2215 = vpop.f32.mrb[0].mxu0
        %2216 = vmatprep.mubr.f32.mxu0 0.0
        %v2217 = vand.u32 %v1383, 4294901760
        %2218 = vmatmul.mubr.f32.gmra.mrb[0].mxu0 %v2217
        %v2219 = vpop.f32.mrb[0].mxu0
        %v2220 = vadd.f32 %v2099, %v2219
        %v2221 = vpop.f32.mrb[0].mxu0
        %2222 = vdwg.mxu0
        %v2223 = vmax.f32 %v2178, 0.0
        %v2224 = vmax.f32 %v2184, 0.0
        %v2225 = vmax.f32 %v2190, 0.0
        %v2226 = vmax.f32 %v2196, 0.0
        %v2227 = vmax.f32 %v2202, 0.0
        %v2228 = vmax.f32 %v2208, 0.0
        %v2229 = vmax.f32 %v2214, 0.0
        %v2230 = vmax.f32 %v2220, 0.0
        %v2231 = vld [vmem:[%s6] sm:$0xff]
        %v2232 = vld [vmem:[%s6 + $0x8] sm:$0xff]
        %v2233 = vld [vmem:[%s6 + $0x10] sm:$0xff]
        %v2234 = vld [vmem:[%s6 + $0x18] sm:$0xff]
        %v2235 = vld [vmem:[%s6 + $0x20] sm:$0xff]
        %v2236 = vld [vmem:[%s6 + $0x28] sm:$0xff]
        %v2237 = vld [vmem:[%s6 + $0x30] sm:$0xff]
        %v2238 = vld [vmem:[%s6 + $0x38] sm:$0xff]
        %2247 = vrot.lane.b32.xlu0 %v1330, 64
        %v2248 = vpop.permute.xlu0 %2247
        %2249 = vrot.lane.b32.xlu0 %v1331, 64
        %v2250 = vpop.permute.xlu0 %2249
        %2251 = vrot.lane.b32.xlu0 %v1332, 64
        %v2252 = vpop.permute.xlu0 %2251
        %2253 = vrot.lane.b32.xlu0 %v1333, 64
        %v2254 = vpop.permute.xlu0 %2253
        %2255 = vrot.lane.b32.xlu0 %v1334, 64
        %v2256 = vpop.permute.xlu0 %2255
        %2257 = vrot.lane.b32.xlu0 %v1335, 64
        %v2258 = vpop.permute.xlu0 %2257
        %2259 = vrot.lane.b32.xlu0 %v1336, 64
        %v2260 = vpop.permute.xlu0 %2259
        %2261 = vrot.lane.b32.xlu0 %v1337, 64
        %v2262 = vpop.permute.xlu0 %2261
        %v2272 = vsel %vm1360, %v2223, 0
        %v2275 = vsel %vm1360, %v2224, 0
        %v2278 = vsel %vm1360, %v2225, 0
        %v2281 = vsel %vm1360, %v2226, 0
        %v2284 = vsel %vm1360, %v2227, 0
        %v2287 = vsel %vm1360, %v2228, 0
        %v2290 = vsel %vm1360, %v2229, 0
        %v2293 = vsel %vm1360, %v2230, 0
        %2295 = vmatprep.subr.mxu0 0.0
        %v2296 = vand.u32 %v2231, 4294901760
        %2297 = vmatpush1.msra.mxu0 %v2296
        %2298 = vmatprep.subr.mxu0 0.0
        %v2299 = vand.u32 %v2232, 4294901760
        %2300 = vmatpush1.msra.mxu0 %v2299
        %2301 = vmatprep.subr.mxu0 0.0
        %v2302 = vand.u32 %v2233, 4294901760
        %2303 = vmatpush1.msra.mxu0 %v2302
        %2304 = vmatprep.subr.mxu0 0.0
        %v2305 = vand.u32 %v2234, 4294901760
        %2306 = vmatpush1.msra.mxu0 %v2305
        %2307 = vmatprep.subr.mxu0 0.0
        %v2308 = vand.u32 %v2235, 4294901760
        %2309 = vmatpush1.msra.mxu0 %v2308
        %2310 = vmatprep.subr.mxu0 0.0
        %v2311 = vand.u32 %v2236, 4294901760
        %2312 = vmatpush1.msra.mxu0 %v2311
        %2313 = vmatprep.subr.mxu0 0.0
        %v2314 = vand.u32 %v2237, 4294901760
        %2315 = vmatpush1.msra.mxu0 %v2314
        %2316 = vmatprep.subr.mxu0 0.0
        %v2317 = vand.u32 %v2238, 4294901760
        %2318 = vmatpush1.msra.mxu0 %v2317
        %2319 = vmatprep.subr.mxu0 0.0
        %2320 = vmatpush1.msra.mxu0 0.0
        %2321 = vmatprep.subr.mxu0 0.0
        %2322 = vmatpush1.msra.mxu0 0.0
        %2323 = vmatprep.subr.mxu0 0.0
        %2324 = vmatpush1.msra.mxu0 0.0
        %2325 = vmatprep.subr.mxu0 0.0
        %2326 = vmatpush1.msra.mxu0 0.0
        %2327 = vmatprep.subr.mxu0 0.0
        %2328 = vmatpush1.msra.mxu0 0.0
        %2329 = vmatprep.subr.mxu0 0.0
        %2330 = vmatpush1.msra.mxu0 0.0
        %2331 = vmatprep.subr.mxu0 0.0
        %2332 = vmatpush1.msra.mxu0 0.0
        %2333 = vmatprep.subr.mxu0 0.0
        %2334 = vmatpush1.msra.mxu0 0.0
        %2335 = vmatprep.subr.mxu0 0.0
        %2336 = vmatpush1.msra.mxu0 0.0
        %2337 = vmatprep.subr.mxu0 0.0
        %2338 = vmatpush1.msra.mxu0 0.0
        %2339 = vmatprep.subr.mxu0 0.0
        %2340 = vmatpush1.msra.mxu0 0.0
        %2341 = vmatprep.subr.mxu0 0.0
        %2342 = vmatpush1.msra.mxu0 0.0
        %2343 = vmatprep.subr.mxu0 0.0
        %2344 = vmatpush1.msra.mxu0 0.0
        %2345 = vmatprep.subr.mxu0 0.0
        %2346 = vmatpush1.msra.mxu0 0.0
        %2347 = vmatprep.subr.mxu0 0.0
        %2348 = vmatpush1.msra.mxu0 0.0
        %2349 = vmatprep.subr.mxu0 0.0
        %2350 = vmatpush1.msra.mxu0 0.0
        %2351 = vmatprep.subr.mxu0 0.0
        %2352 = vmatpush1.msra.mxu0 0.0
        %2353 = vmatprep.subr.mxu0 0.0
        %2354 = vmatpush1.msra.mxu0 0.0
        %2355 = vmatprep.subr.mxu0 0.0
        %2356 = vmatpush1.msra.mxu0 0.0
        %2357 = vmatprep.subr.mxu0 0.0
        %2358 = vmatpush1.msra.mxu0 0.0
        %2359 = vmatprep.subr.mxu0 0.0
        %2360 = vmatpush1.msra.mxu0 0.0
        %2361 = vmatprep.subr.mxu0 0.0
        %2362 = vmatpush1.msra.mxu0 0.0
        %2363 = vmatprep.subr.mxu0 0.0
        %2364 = vmatpush1.msra.mxu0 0.0
        %2365 = vmatprep.subr.mxu0 0.0
        %2366 = vmatpush1.msra.mxu0 0.0
        %2367 = vmatprep.mubr.f32.mxu0 0.0
        %v2368 = vand.u32 %v2272, 4294901760
        %v2369 = vsub.f32 %v2272, %v2368
        %v2370 = vand.u32 %v2369, 4294901760
        %v2371 = vsub.f32 %v2369, %v2370
        %v2372 = vand.u32 %v2371, 4294901760
        %2373 = vmatmul.mubr.f32.gmra.mrb[0].mxu0 %v2372
        %v2374 = vpop.f32.mrb[0].mxu0
        %v2375 = vadd.f32 %v2248, %v2374
        %v2376 = vpop.f32.mrb[0].mxu0
        %2377 = vmatprep.mubr.f32.mxu0 0.0
        %v2378 = vand.u32 %v2275, 4294901760
        %v2379 = vsub.f32 %v2275, %v2378
        %v2380 = vand.u32 %v2379, 4294901760
        %v2381 = vsub.f32 %v2379, %v2380
        %v2382 = vand.u32 %v2381, 4294901760
        %2383 = vmatmul.mubr.f32.gmra.mrb[0].mxu0 %v2382
        %v2384 = vpop.f32.mrb[0].mxu0
        %v2385 = vadd.f32 %v2250, %v2384
        %v2386 = vpop.f32.mrb[0].mxu0
        %2387 = vmatprep.mubr.f32.mxu0 0.0
        %v2388 = vand.u32 %v2278, 4294901760
        %v2389 = vsub.f32 %v2278, %v2388
        %v2390 = vand.u32 %v2389, 4294901760
        %v2391 = vsub.f32 %v2389, %v2390
        %v2392 = vand.u32 %v2391, 4294901760
        %2393 = vmatmul.mubr.f32.gmra.mrb[0].mxu0 %v2392
        %v2394 = vpop.f32.mrb[0].mxu0
        %v2395 = vadd.f32 %v2252, %v2394
        %v2396 = vpop.f32.mrb[0].mxu0
        %2397 = vmatprep.mubr.f32.mxu0 0.0
        %v2398 = vand.u32 %v2281, 4294901760
        %v2399 = vsub.f32 %v2281, %v2398
        %v2400 = vand.u32 %v2399, 4294901760
        %v2401 = vsub.f32 %v2399, %v2400
        %v2402 = vand.u32 %v2401, 4294901760
        %2403 = vmatmul.mubr.f32.gmra.mrb[0].mxu0 %v2402
        %v2404 = vpop.f32.mrb[0].mxu0
        %v2405 = vadd.f32 %v2254, %v2404
        %v2406 = vpop.f32.mrb[0].mxu0
        %2407 = vmatprep.mubr.f32.mxu0 0.0
        %v2408 = vand.u32 %v2284, 4294901760
        %v2409 = vsub.f32 %v2284, %v2408
        %v2410 = vand.u32 %v2409, 4294901760
        %v2411 = vsub.f32 %v2409, %v2410
        %v2412 = vand.u32 %v2411, 4294901760
        %2413 = vmatmul.mubr.f32.gmra.mrb[0].mxu0 %v2412
        %v2414 = vpop.f32.mrb[0].mxu0
        %v2415 = vadd.f32 %v2256, %v2414
        %v2416 = vpop.f32.mrb[0].mxu0
        %2417 = vmatprep.mubr.f32.mxu0 0.0
        %v2418 = vand.u32 %v2287, 4294901760
        %v2419 = vsub.f32 %v2287, %v2418
        %v2420 = vand.u32 %v2419, 4294901760
        %v2421 = vsub.f32 %v2419, %v2420
        %v2422 = vand.u32 %v2421, 4294901760
        %2423 = vmatmul.mubr.f32.gmra.mrb[0].mxu0 %v2422
        %v2424 = vpop.f32.mrb[0].mxu0
        %v2425 = vadd.f32 %v2258, %v2424
        %v2426 = vpop.f32.mrb[0].mxu0
        %2427 = vmatprep.mubr.f32.mxu0 0.0
        %v2428 = vand.u32 %v2290, 4294901760
        %v2429 = vsub.f32 %v2290, %v2428
        %v2430 = vand.u32 %v2429, 4294901760
        %v2431 = vsub.f32 %v2429, %v2430
        %v2432 = vand.u32 %v2431, 4294901760
        %2433 = vmatmul.mubr.f32.gmra.mrb[0].mxu0 %v2432
        %v2434 = vpop.f32.mrb[0].mxu0
        %v2435 = vadd.f32 %v2260, %v2434
        %v2436 = vpop.f32.mrb[0].mxu0
        %2437 = vmatprep.mubr.f32.mxu0 0.0
        %v2438 = vand.u32 %v2293, 4294901760
        %v2439 = vsub.f32 %v2293, %v2438
        %v2440 = vand.u32 %v2439, 4294901760
        %v2441 = vsub.f32 %v2439, %v2440
        %v2442 = vand.u32 %v2441, 4294901760
        %2443 = vmatmul.mubr.f32.gmra.mrb[0].mxu0 %v2442
        %v2444 = vpop.f32.mrb[0].mxu0
        %v2445 = vadd.f32 %v2262, %v2444
        %v2446 = vpop.f32.mrb[0].mxu0
        %2447 = vdwg.mxu0
        %2448 = vmatprep.subr.mxu0 0.0
        %v2449 = vand.u32 %v2231, 4294901760
        %v2450 = vsub.f32 %v2231, %v2449
        %v2451 = vand.u32 %v2450, 4294901760
        %v2452 = vsub.f32 %v2450, %v2451
        %v2453 = vand.u32 %v2452, 4294901760
        %2454 = vmatpush1.msra.mxu0 %v2453
        %2455 = vmatprep.subr.mxu0 0.0
        %v2456 = vand.u32 %v2232, 4294901760
        %v2457 = vsub.f32 %v2232, %v2456
        %v2458 = vand.u32 %v2457, 4294901760
        %v2459 = vsub.f32 %v2457, %v2458
        %v2460 = vand.u32 %v2459, 4294901760
        %2461 = vmatpush1.msra.mxu0 %v2460
        %2462 = vmatprep.subr.mxu0 0.0
        %v2463 = vand.u32 %v2233, 4294901760
        %v2464 = vsub.f32 %v2233, %v2463
        %v2465 = vand.u32 %v2464, 4294901760
        %v2466 = vsub.f32 %v2464, %v2465
        %v2467 = vand.u32 %v2466, 4294901760
        %2468 = vmatpush1.msra.mxu0 %v2467
        %2469 = vmatprep.subr.mxu0 0.0
        %v2470 = vand.u32 %v2234, 4294901760
        %v2471 = vsub.f32 %v2234, %v2470
        %v2472 = vand.u32 %v2471, 4294901760
        %v2473 = vsub.f32 %v2471, %v2472
        %v2474 = vand.u32 %v2473, 4294901760
        %2475 = vmatpush1.msra.mxu0 %v2474
        %2476 = vmatprep.subr.mxu0 0.0
        %v2477 = vand.u32 %v2235, 4294901760
        %v2478 = vsub.f32 %v2235, %v2477
        %v2479 = vand.u32 %v2478, 4294901760
        %v2480 = vsub.f32 %v2478, %v2479
        %v2481 = vand.u32 %v2480, 4294901760
        %2482 = vmatpush1.msra.mxu0 %v2481
        %2483 = vmatprep.subr.mxu0 0.0
        %v2484 = vand.u32 %v2236, 4294901760
        %v2485 = vsub.f32 %v2236, %v2484
        %v2486 = vand.u32 %v2485, 4294901760
        %v2487 = vsub.f32 %v2485, %v2486
        %v2488 = vand.u32 %v2487, 4294901760
        %2489 = vmatpush1.msra.mxu0 %v2488
        %2490 = vmatprep.subr.mxu0 0.0
        %v2491 = vand.u32 %v2237, 4294901760
        %v2492 = vsub.f32 %v2237, %v2491
        %v2493 = vand.u32 %v2492, 4294901760
        %v2494 = vsub.f32 %v2492, %v2493
        %v2495 = vand.u32 %v2494, 4294901760
        %2496 = vmatpush1.msra.mxu0 %v2495
        %2497 = vmatprep.subr.mxu0 0.0
        %v2498 = vand.u32 %v2238, 4294901760
        %v2499 = vsub.f32 %v2238, %v2498
        %v2500 = vand.u32 %v2499, 4294901760
        %v2501 = vsub.f32 %v2499, %v2500
        %v2502 = vand.u32 %v2501, 4294901760
        %2503 = vmatpush1.msra.mxu0 %v2502
        %2504 = vmatprep.subr.mxu0 0.0
        %2505 = vmatpush1.msra.mxu0 0.0
        %2506 = vmatprep.subr.mxu0 0.0
        %2507 = vmatpush1.msra.mxu0 0.0
        %2508 = vmatprep.subr.mxu0 0.0
        %2509 = vmatpush1.msra.mxu0 0.0
        %2510 = vmatprep.subr.mxu0 0.0
        %2511 = vmatpush1.msra.mxu0 0.0
        %2512 = vmatprep.subr.mxu0 0.0
        %2513 = vmatpush1.msra.mxu0 0.0
        %2514 = vmatprep.subr.mxu0 0.0
        %2515 = vmatpush1.msra.mxu0 0.0
        %2516 = vmatprep.subr.mxu0 0.0
        %2517 = vmatpush1.msra.mxu0 0.0
        %2518 = vmatprep.subr.mxu0 0.0
        %2519 = vmatpush1.msra.mxu0 0.0
        %2520 = vmatprep.subr.mxu0 0.0
        %2521 = vmatpush1.msra.mxu0 0.0
        %2522 = vmatprep.subr.mxu0 0.0
        %2523 = vmatpush1.msra.mxu0 0.0
        %2524 = vmatprep.subr.mxu0 0.0
        %2525 = vmatpush1.msra.mxu0 0.0
        %2526 = vmatprep.subr.mxu0 0.0
        %2527 = vmatpush1.msra.mxu0 0.0
        %2528 = vmatprep.subr.mxu0 0.0
        %2529 = vmatpush1.msra.mxu0 0.0
        %2530 = vmatprep.subr.mxu0 0.0
        %2531 = vmatpush1.msra.mxu0 0.0
        %2532 = vmatprep.subr.mxu0 0.0
        %2533 = vmatpush1.msra.mxu0 0.0
        %2534 = vmatprep.subr.mxu0 0.0
        %2535 = vmatpush1.msra.mxu0 0.0
        %2536 = vmatprep.subr.mxu0 0.0
        %2537 = vmatpush1.msra.mxu0 0.0
        %2538 = vmatprep.subr.mxu0 0.0
        %2539 = vmatpush1.msra.mxu0 0.0
        %2540 = vmatprep.subr.mxu0 0.0
        %2541 = vmatpush1.msra.mxu0 0.0
        %2542 = vmatprep.subr.mxu0 0.0
        %2543 = vmatpush1.msra.mxu0 0.0
        %2544 = vmatprep.subr.mxu0 0.0
        %2545 = vmatpush1.msra.mxu0 0.0
        %2546 = vmatprep.subr.mxu0 0.0
        %2547 = vmatpush1.msra.mxu0 0.0
        %2548 = vmatprep.subr.mxu0 0.0
        %2549 = vmatpush1.msra.mxu0 0.0
        %2550 = vmatprep.subr.mxu0 0.0
        %2551 = vmatpush1.msra.mxu0 0.0
        %2552 = vmatprep.mubr.f32.mxu0 0.0
        %v2553 = vand.u32 %v2272, 4294901760
        %2554 = vmatmul.mubr.f32.gmra.mrb[0].mxu0 %v2553
        %v2555 = vpop.f32.mrb[0].mxu0
        %v2556 = vadd.f32 %v2375, %v2555
        %v2557 = vpop.f32.mrb[0].mxu0
        %2558 = vmatprep.mubr.f32.mxu0 0.0
        %v2559 = vand.u32 %v2275, 4294901760
        %2560 = vmatmul.mubr.f32.gmra.mrb[0].mxu0 %v2559
        %v2561 = vpop.f32.mrb[0].mxu0
        %v2562 = vadd.f32 %v2385, %v2561
        %v2563 = vpop.f32.mrb[0].mxu0
        %2564 = vmatprep.mubr.f32.mxu0 0.0
        %v2565 = vand.u32 %v2278, 4294901760
        %2566 = vmatmul.mubr.f32.gmra.mrb[0].mxu0 %v2565
        %v2567 = vpop.f32.mrb[0].mxu0
        %v2568 = vadd.f32 %v2395, %v2567
        %v2569 = vpop.f32.mrb[0].mxu0
        %2570 = vmatprep.mubr.f32.mxu0 0.0
        %v2571 = vand.u32 %v2281, 4294901760
        %2572 = vmatmul.mubr.f32.gmra.mrb[0].mxu0 %v2571
        %v2573 = vpop.f32.mrb[0].mxu0
        %v2574 = vadd.f32 %v2405, %v2573
        %v2575 = vpop.f32.mrb[0].mxu0
        %2576 = vmatprep.mubr.f32.mxu0 0.0
        %v2577 = vand.u32 %v2284, 4294901760
        %2578 = vmatmul.mubr.f32.gmra.mrb[0].mxu0 %v2577
        %v2579 = vpop.f32.mrb[0].mxu0
        %v2580 = vadd.f32 %v2415, %v2579
        %v2581 = vpop.f32.mrb[0].mxu0
        %2582 = vmatprep.mubr.f32.mxu0 0.0
        %v2583 = vand.u32 %v2287, 4294901760
        %2584 = vmatmul.mubr.f32.gmra.mrb[0].mxu0 %v2583
        %v2585 = vpop.f32.mrb[0].mxu0
        %v2586 = vadd.f32 %v2425, %v2585
        %v2587 = vpop.f32.mrb[0].mxu0
        %2588 = vmatprep.mubr.f32.mxu0 0.0
        %v2589 = vand.u32 %v2290, 4294901760
        %2590 = vmatmul.mubr.f32.gmra.mrb[0].mxu0 %v2589
        %v2591 = vpop.f32.mrb[0].mxu0
        %v2592 = vadd.f32 %v2435, %v2591
        %v2593 = vpop.f32.mrb[0].mxu0
        %2594 = vmatprep.mubr.f32.mxu0 0.0
        %v2595 = vand.u32 %v2293, 4294901760
        %2596 = vmatmul.mubr.f32.gmra.mrb[0].mxu0 %v2595
        %v2597 = vpop.f32.mrb[0].mxu0
        %v2598 = vadd.f32 %v2445, %v2597
        %v2599 = vpop.f32.mrb[0].mxu0
        %2600 = vdwg.mxu0
        %2601 = vmatprep.subr.mxu0 0.0
        %v2602 = vand.u32 %v2231, 4294901760
        %v2603 = vsub.f32 %v2231, %v2602
        %2604 = vmatpush1.msra.mxu0 %v2603
        %2605 = vmatprep.subr.mxu0 0.0
        %v2606 = vand.u32 %v2232, 4294901760
        %v2607 = vsub.f32 %v2232, %v2606
        %2608 = vmatpush1.msra.mxu0 %v2607
        %2609 = vmatprep.subr.mxu0 0.0
        %v2610 = vand.u32 %v2233, 4294901760
        %v2611 = vsub.f32 %v2233, %v2610
        %2612 = vmatpush1.msra.mxu0 %v2611
        %2613 = vmatprep.subr.mxu0 0.0
        %v2614 = vand.u32 %v2234, 4294901760
        %v2615 = vsub.f32 %v2234, %v2614
        %2616 = vmatpush1.msra.mxu0 %v2615
        %2617 = vmatprep.subr.mxu0 0.0
        %v2618 = vand.u32 %v2235, 4294901760
        %v2619 = vsub.f32 %v2235, %v2618
        %2620 = vmatpush1.msra.mxu0 %v2619
        %2621 = vmatprep.subr.mxu0 0.0
        %v2622 = vand.u32 %v2236, 4294901760
        %v2623 = vsub.f32 %v2236, %v2622
        %2624 = vmatpush1.msra.mxu0 %v2623
        %2625 = vmatprep.subr.mxu0 0.0
        %v2626 = vand.u32 %v2237, 4294901760
        %v2627 = vsub.f32 %v2237, %v2626
        %2628 = vmatpush1.msra.mxu0 %v2627
        %2629 = vmatprep.subr.mxu0 0.0
        %v2630 = vand.u32 %v2238, 4294901760
        %v2631 = vsub.f32 %v2238, %v2630
        %2632 = vmatpush1.msra.mxu0 %v2631
        %2633 = vmatprep.subr.mxu0 0.0
        %2634 = vmatpush1.msra.mxu0 0.0
        %2635 = vmatprep.subr.mxu0 0.0
        %2636 = vmatpush1.msra.mxu0 0.0
        %2637 = vmatprep.subr.mxu0 0.0
        %2638 = vmatpush1.msra.mxu0 0.0
        %2639 = vmatprep.subr.mxu0 0.0
        %2640 = vmatpush1.msra.mxu0 0.0
        %2641 = vmatprep.subr.mxu0 0.0
        %2642 = vmatpush1.msra.mxu0 0.0
        %2643 = vmatprep.subr.mxu0 0.0
        %2644 = vmatpush1.msra.mxu0 0.0
        %2645 = vmatprep.subr.mxu0 0.0
        %2646 = vmatpush1.msra.mxu0 0.0
        %2647 = vmatprep.subr.mxu0 0.0
        %2648 = vmatpush1.msra.mxu0 0.0
        %2649 = vmatprep.subr.mxu0 0.0
        %2650 = vmatpush1.msra.mxu0 0.0
        %2651 = vmatprep.subr.mxu0 0.0
        %2652 = vmatpush1.msra.mxu0 0.0
        %2653 = vmatprep.subr.mxu0 0.0
        %2654 = vmatpush1.msra.mxu0 0.0
        %2655 = vmatprep.subr.mxu0 0.0
        %2656 = vmatpush1.msra.mxu0 0.0
        %2657 = vmatprep.subr.mxu0 0.0
        %2658 = vmatpush1.msra.mxu0 0.0
        %2659 = vmatprep.subr.mxu0 0.0
        %2660 = vmatpush1.msra.mxu0 0.0
        %2661 = vmatprep.subr.mxu0 0.0
        %2662 = vmatpush1.msra.mxu0 0.0
        %2663 = vmatprep.subr.mxu0 0.0
        %2664 = vmatpush1.msra.mxu0 0.0
        %2665 = vmatprep.subr.mxu0 0.0
        %2666 = vmatpush1.msra.mxu0 0.0
        %2667 = vmatprep.subr.mxu0 0.0
        %2668 = vmatpush1.msra.mxu0 0.0
        %2669 = vmatprep.subr.mxu0 0.0
        %2670 = vmatpush1.msra.mxu0 0.0
        %2671 = vmatprep.subr.mxu0 0.0
        %2672 = vmatpush1.msra.mxu0 0.0
        %2673 = vmatprep.subr.mxu0 0.0
        %2674 = vmatpush1.msra.mxu0 0.0
        %2675 = vmatprep.subr.mxu0 0.0
        %2676 = vmatpush1.msra.mxu0 0.0
        %2677 = vmatprep.subr.mxu0 0.0
        %2678 = vmatpush1.msra.mxu0 0.0
        %2679 = vmatprep.subr.mxu0 0.0
        %2680 = vmatpush1.msra.mxu0 0.0
        %2681 = vmatprep.mubr.f32.mxu0 0.0
        %v2682 = vand.u32 %v2272, 4294901760
        %v2683 = vsub.f32 %v2272, %v2682
        %2684 = vmatmul.mubr.f32.gmra.mrb[0].mxu0 %v2683
        %v2685 = vpop.f32.mrb[0].mxu0
        %v2686 = vadd.f32 %v2556, %v2685
        %v2687 = vpop.f32.mrb[0].mxu0
        %2688 = vmatprep.mubr.f32.mxu0 0.0
        %v2689 = vand.u32 %v2275, 4294901760
        %v2690 = vsub.f32 %v2275, %v2689
        %2691 = vmatmul.mubr.f32.gmra.mrb[0].mxu0 %v2690
        %v2692 = vpop.f32.mrb[0].mxu0
        %v2693 = vadd.f32 %v2562, %v2692
        %v2694 = vpop.f32.mrb[0].mxu0
        %2695 = vmatprep.mubr.f32.mxu0 0.0
        %v2696 = vand.u32 %v2278, 4294901760
        %v2697 = vsub.f32 %v2278, %v2696
        %2698 = vmatmul.mubr.f32.gmra.mrb[0].mxu0 %v2697
        %v2699 = vpop.f32.mrb[0].mxu0
        %v2700 = vadd.f32 %v2568, %v2699
        %v2701 = vpop.f32.mrb[0].mxu0
        %2702 = vmatprep.mubr.f32.mxu0 0.0
        %v2703 = vand.u32 %v2281, 4294901760
        %v2704 = vsub.f32 %v2281, %v2703
        %2705 = vmatmul.mubr.f32.gmra.mrb[0].mxu0 %v2704
        %v2706 = vpop.f32.mrb[0].mxu0
        %v2707 = vadd.f32 %v2574, %v2706
        %v2708 = vpop.f32.mrb[0].mxu0
        %2709 = vmatprep.mubr.f32.mxu0 0.0
        %v2710 = vand.u32 %v2284, 4294901760
        %v2711 = vsub.f32 %v2284, %v2710
        %2712 = vmatmul.mubr.f32.gmra.mrb[0].mxu0 %v2711
        %v2713 = vpop.f32.mrb[0].mxu0
        %v2714 = vadd.f32 %v2580, %v2713
        %v2715 = vpop.f32.mrb[0].mxu0
        %2716 = vmatprep.mubr.f32.mxu0 0.0
        %v2717 = vand.u32 %v2287, 4294901760
        %v2718 = vsub.f32 %v2287, %v2717
        %2719 = vmatmul.mubr.f32.gmra.mrb[0].mxu0 %v2718
        %v2720 = vpop.f32.mrb[0].mxu0
        %v2721 = vadd.f32 %v2586, %v2720
        %v2722 = vpop.f32.mrb[0].mxu0
        %2723 = vmatprep.mubr.f32.mxu0 0.0
        %v2724 = vand.u32 %v2290, 4294901760
        %v2725 = vsub.f32 %v2290, %v2724
        %2726 = vmatmul.mubr.f32.gmra.mrb[0].mxu0 %v2725
        %v2727 = vpop.f32.mrb[0].mxu0
        %v2728 = vadd.f32 %v2592, %v2727
        %v2729 = vpop.f32.mrb[0].mxu0
        %2730 = vmatprep.mubr.f32.mxu0 0.0
        %v2731 = vand.u32 %v2293, 4294901760
        %v2732 = vsub.f32 %v2293, %v2731
        %2733 = vmatmul.mubr.f32.gmra.mrb[0].mxu0 %v2732
        %v2734 = vpop.f32.mrb[0].mxu0
        %v2735 = vadd.f32 %v2598, %v2734
        %v2736 = vpop.f32.mrb[0].mxu0
        %2737 = vdwg.mxu0
        %2738 = vmatprep.subr.mxu0 0.0
        %v2739 = vand.u32 %v2231, 4294901760
        %2740 = vmatpush1.msra.mxu0 %v2739
        %2741 = vmatprep.subr.mxu0 0.0
        %v2742 = vand.u32 %v2232, 4294901760
        %2743 = vmatpush1.msra.mxu0 %v2742
        %2744 = vmatprep.subr.mxu0 0.0
        %v2745 = vand.u32 %v2233, 4294901760
        %2746 = vmatpush1.msra.mxu0 %v2745
        %2747 = vmatprep.subr.mxu0 0.0
        %v2748 = vand.u32 %v2234, 4294901760
        %2749 = vmatpush1.msra.mxu0 %v2748
        %2750 = vmatprep.subr.mxu0 0.0
        %v2751 = vand.u32 %v2235, 4294901760
        %2752 = vmatpush1.msra.mxu0 %v2751
        %2753 = vmatprep.subr.mxu0 0.0
        %v2754 = vand.u32 %v2236, 4294901760
        %2755 = vmatpush1.msra.mxu0 %v2754
        %2756 = vmatprep.subr.mxu0 0.0
        %v2757 = vand.u32 %v2237, 4294901760
        %2758 = vmatpush1.msra.mxu0 %v2757
        %2759 = vmatprep.subr.mxu0 0.0
        %v2760 = vand.u32 %v2238, 4294901760
        %2761 = vmatpush1.msra.mxu0 %v2760
        %2762 = vmatprep.subr.mxu0 0.0
        %2763 = vmatpush1.msra.mxu0 0.0
        %2764 = vmatprep.subr.mxu0 0.0
        %2765 = vmatpush1.msra.mxu0 0.0
        %2766 = vmatprep.subr.mxu0 0.0
        %2767 = vmatpush1.msra.mxu0 0.0
        %2768 = vmatprep.subr.mxu0 0.0
        %2769 = vmatpush1.msra.mxu0 0.0
        %2770 = vmatprep.subr.mxu0 0.0
        %2771 = vmatpush1.msra.mxu0 0.0
        %2772 = vmatprep.subr.mxu0 0.0
        %2773 = vmatpush1.msra.mxu0 0.0
        %2774 = vmatprep.subr.mxu0 0.0
        %2775 = vmatpush1.msra.mxu0 0.0
        %2776 = vmatprep.subr.mxu0 0.0
        %2777 = vmatpush1.msra.mxu0 0.0
        %2778 = vmatprep.subr.mxu0 0.0
        %2779 = vmatpush1.msra.mxu0 0.0
        %2780 = vmatprep.subr.mxu0 0.0
        %2781 = vmatpush1.msra.mxu0 0.0
        %2782 = vmatprep.subr.mxu0 0.0
        %2783 = vmatpush1.msra.mxu0 0.0
        %2784 = vmatprep.subr.mxu0 0.0
        %2785 = vmatpush1.msra.mxu0 0.0
        %2786 = vmatprep.subr.mxu0 0.0
        %2787 = vmatpush1.msra.mxu0 0.0
        %2788 = vmatprep.subr.mxu0 0.0
        %2789 = vmatpush1.msra.mxu0 0.0
        %2790 = vmatprep.subr.mxu0 0.0
        %2791 = vmatpush1.msra.mxu0 0.0
        %2792 = vmatprep.subr.mxu0 0.0
        %2793 = vmatpush1.msra.mxu0 0.0
        %2794 = vmatprep.subr.mxu0 0.0
        %2795 = vmatpush1.msra.mxu0 0.0
        %2796 = vmatprep.subr.mxu0 0.0
        %2797 = vmatpush1.msra.mxu0 0.0
        %2798 = vmatprep.subr.mxu0 0.0
        %2799 = vmatpush1.msra.mxu0 0.0
        %2800 = vmatprep.subr.mxu0 0.0
        %2801 = vmatpush1.msra.mxu0 0.0
        %2802 = vmatprep.subr.mxu0 0.0
        %2803 = vmatpush1.msra.mxu0 0.0
        %2804 = vmatprep.subr.mxu0 0.0
        %2805 = vmatpush1.msra.mxu0 0.0
        %2806 = vmatprep.subr.mxu0 0.0
        %2807 = vmatpush1.msra.mxu0 0.0
        %2808 = vmatprep.subr.mxu0 0.0
        %2809 = vmatpush1.msra.mxu0 0.0
        %2810 = vmatprep.mubr.f32.mxu0 0.0
        %v2811 = vand.u32 %v2272, 4294901760
        %v2812 = vsub.f32 %v2272, %v2811
        %v2813 = vand.u32 %v2812, 4294901760
        %2814 = vmatmul.mubr.f32.gmra.mrb[0].mxu0 %v2813
        %v2815 = vpop.f32.mrb[0].mxu0
        %v2816 = vadd.f32 %v2686, %v2815
        %v2817 = vpop.f32.mrb[0].mxu0
        %2818 = vmatprep.mubr.f32.mxu0 0.0
        %v2819 = vand.u32 %v2275, 4294901760
        %v2820 = vsub.f32 %v2275, %v2819
        %v2821 = vand.u32 %v2820, 4294901760
        %2822 = vmatmul.mubr.f32.gmra.mrb[0].mxu0 %v2821
        %v2823 = vpop.f32.mrb[0].mxu0
        %v2824 = vadd.f32 %v2693, %v2823
        %v2825 = vpop.f32.mrb[0].mxu0
        %2826 = vmatprep.mubr.f32.mxu0 0.0
        %v2827 = vand.u32 %v2278, 4294901760
        %v2828 = vsub.f32 %v2278, %v2827
        %v2829 = vand.u32 %v2828, 4294901760
        %2830 = vmatmul.mubr.f32.gmra.mrb[0].mxu0 %v2829
        %v2831 = vpop.f32.mrb[0].mxu0
        %v2832 = vadd.f32 %v2700, %v2831
        %v2833 = vpop.f32.mrb[0].mxu0
        %2834 = vmatprep.mubr.f32.mxu0 0.0
        %v2835 = vand.u32 %v2281, 4294901760
        %v2836 = vsub.f32 %v2281, %v2835
        %v2837 = vand.u32 %v2836, 4294901760
        %2838 = vmatmul.mubr.f32.gmra.mrb[0].mxu0 %v2837
        %v2839 = vpop.f32.mrb[0].mxu0
        %v2840 = vadd.f32 %v2707, %v2839
        %v2841 = vpop.f32.mrb[0].mxu0
        %2842 = vmatprep.mubr.f32.mxu0 0.0
        %v2843 = vand.u32 %v2284, 4294901760
        %v2844 = vsub.f32 %v2284, %v2843
        %v2845 = vand.u32 %v2844, 4294901760
        %2846 = vmatmul.mubr.f32.gmra.mrb[0].mxu0 %v2845
        %v2847 = vpop.f32.mrb[0].mxu0
        %v2848 = vadd.f32 %v2714, %v2847
        %v2849 = vpop.f32.mrb[0].mxu0
        %2850 = vmatprep.mubr.f32.mxu0 0.0
        %v2851 = vand.u32 %v2287, 4294901760
        %v2852 = vsub.f32 %v2287, %v2851
        %v2853 = vand.u32 %v2852, 4294901760
        %2854 = vmatmul.mubr.f32.gmra.mrb[0].mxu0 %v2853
        %v2855 = vpop.f32.mrb[0].mxu0
        %v2856 = vadd.f32 %v2721, %v2855
        %v2857 = vpop.f32.mrb[0].mxu0
        %2858 = vmatprep.mubr.f32.mxu0 0.0
        %v2859 = vand.u32 %v2290, 4294901760
        %v2860 = vsub.f32 %v2290, %v2859
        %v2861 = vand.u32 %v2860, 4294901760
        %2862 = vmatmul.mubr.f32.gmra.mrb[0].mxu0 %v2861
        %v2863 = vpop.f32.mrb[0].mxu0
        %v2864 = vadd.f32 %v2728, %v2863
        %v2865 = vpop.f32.mrb[0].mxu0
        %2866 = vmatprep.mubr.f32.mxu0 0.0
        %v2867 = vand.u32 %v2293, 4294901760
        %v2868 = vsub.f32 %v2293, %v2867
        %v2869 = vand.u32 %v2868, 4294901760
        %2870 = vmatmul.mubr.f32.gmra.mrb[0].mxu0 %v2869
        %v2871 = vpop.f32.mrb[0].mxu0
        %v2872 = vadd.f32 %v2735, %v2871
        %v2873 = vpop.f32.mrb[0].mxu0
        %2874 = vdwg.mxu0
        %2875 = vmatprep.subr.mxu0 0.0
        %v2876 = vand.u32 %v2231, 4294901760
        %v2877 = vsub.f32 %v2231, %v2876
        %v2878 = vand.u32 %v2877, 4294901760
        %2879 = vmatpush1.msra.mxu0 %v2878
        %2880 = vmatprep.subr.mxu0 0.0
        %v2881 = vand.u32 %v2232, 4294901760
        %v2882 = vsub.f32 %v2232, %v2881
        %v2883 = vand.u32 %v2882, 4294901760
        %2884 = vmatpush1.msra.mxu0 %v2883
        %2885 = vmatprep.subr.mxu0 0.0
        %v2886 = vand.u32 %v2233, 4294901760
        %v2887 = vsub.f32 %v2233, %v2886
        %v2888 = vand.u32 %v2887, 4294901760
        %2889 = vmatpush1.msra.mxu0 %v2888
        %2890 = vmatprep.subr.mxu0 0.0
        %v2891 = vand.u32 %v2234, 4294901760
        %v2892 = vsub.f32 %v2234, %v2891
        %v2893 = vand.u32 %v2892, 4294901760
        %2894 = vmatpush1.msra.mxu0 %v2893
        %2895 = vmatprep.subr.mxu0 0.0
        %v2896 = vand.u32 %v2235, 4294901760
        %v2897 = vsub.f32 %v2235, %v2896
        %v2898 = vand.u32 %v2897, 4294901760
        %2899 = vmatpush1.msra.mxu0 %v2898
        %2900 = vmatprep.subr.mxu0 0.0
        %v2901 = vand.u32 %v2236, 4294901760
        %v2902 = vsub.f32 %v2236, %v2901
        %v2903 = vand.u32 %v2902, 4294901760
        %2904 = vmatpush1.msra.mxu0 %v2903
        %2905 = vmatprep.subr.mxu0 0.0
        %v2906 = vand.u32 %v2237, 4294901760
        %v2907 = vsub.f32 %v2237, %v2906
        %v2908 = vand.u32 %v2907, 4294901760
        %2909 = vmatpush1.msra.mxu0 %v2908
        %2910 = vmatprep.subr.mxu0 0.0
        %v2911 = vand.u32 %v2238, 4294901760
        %v2912 = vsub.f32 %v2238, %v2911
        %v2913 = vand.u32 %v2912, 4294901760
        %2914 = vmatpush1.msra.mxu0 %v2913
        %2915 = vmatprep.subr.mxu0 0.0
        %2916 = vmatpush1.msra.mxu0 0.0
        %2917 = vmatprep.subr.mxu0 0.0
        %2918 = vmatpush1.msra.mxu0 0.0
        %2919 = vmatprep.subr.mxu0 0.0
        %2920 = vmatpush1.msra.mxu0 0.0
        %2921 = vmatprep.subr.mxu0 0.0
        %2922 = vmatpush1.msra.mxu0 0.0
        %2923 = vmatprep.subr.mxu0 0.0
        %2924 = vmatpush1.msra.mxu0 0.0
        %2925 = vmatprep.subr.mxu0 0.0
        %2926 = vmatpush1.msra.mxu0 0.0
        %2927 = vmatprep.subr.mxu0 0.0
        %2928 = vmatpush1.msra.mxu0 0.0
        %2929 = vmatprep.subr.mxu0 0.0
        %2930 = vmatpush1.msra.mxu0 0.0
        %2931 = vmatprep.subr.mxu0 0.0
        %2932 = vmatpush1.msra.mxu0 0.0
        %2933 = vmatprep.subr.mxu0 0.0
        %2934 = vmatpush1.msra.mxu0 0.0
        %2935 = vmatprep.subr.mxu0 0.0
        %2936 = vmatpush1.msra.mxu0 0.0
        %2937 = vmatprep.subr.mxu0 0.0
        %2938 = vmatpush1.msra.mxu0 0.0
        %2939 = vmatprep.subr.mxu0 0.0
        %2940 = vmatpush1.msra.mxu0 0.0
        %2941 = vmatprep.subr.mxu0 0.0
        %2942 = vmatpush1.msra.mxu0 0.0
        %2943 = vmatprep.subr.mxu0 0.0
        %2944 = vmatpush1.msra.mxu0 0.0
        %2945 = vmatprep.subr.mxu0 0.0
        %2946 = vmatpush1.msra.mxu0 0.0
        %2947 = vmatprep.subr.mxu0 0.0
        %2948 = vmatpush1.msra.mxu0 0.0
        %2949 = vmatprep.subr.mxu0 0.0
        %2950 = vmatpush1.msra.mxu0 0.0
        %2951 = vmatprep.subr.mxu0 0.0
        %2952 = vmatpush1.msra.mxu0 0.0
        %2953 = vmatprep.subr.mxu0 0.0
        %2954 = vmatpush1.msra.mxu0 0.0
        %2955 = vmatprep.subr.mxu0 0.0
        %2956 = vmatpush1.msra.mxu0 0.0
        %2957 = vmatprep.subr.mxu0 0.0
        %2958 = vmatpush1.msra.mxu0 0.0
        %2959 = vmatprep.subr.mxu0 0.0
        %2960 = vmatpush1.msra.mxu0 0.0
        %2961 = vmatprep.subr.mxu0 0.0
        %2962 = vmatpush1.msra.mxu0 0.0
        %2963 = vmatprep.mubr.f32.mxu0 0.0
        %v2964 = vand.u32 %v2272, 4294901760
        %2965 = vmatmul.mubr.f32.gmra.mrb[0].mxu0 %v2964
        %v2966 = vpop.f32.mrb[0].mxu0
        %v2967 = vadd.f32 %v2816, %v2966
        %v2968 = vpop.f32.mrb[0].mxu0
        %2969 = vmatprep.mubr.f32.mxu0 0.0
        %v2970 = vand.u32 %v2275, 4294901760
        %2971 = vmatmul.mubr.f32.gmra.mrb[0].mxu0 %v2970
        %v2972 = vpop.f32.mrb[0].mxu0
        %v2973 = vadd.f32 %v2824, %v2972
        %v2974 = vpop.f32.mrb[0].mxu0
        %2975 = vmatprep.mubr.f32.mxu0 0.0
        %v2976 = vand.u32 %v2278, 4294901760
        %2977 = vmatmul.mubr.f32.gmra.mrb[0].mxu0 %v2976
        %v2978 = vpop.f32.mrb[0].mxu0
        %v2979 = vadd.f32 %v2832, %v2978
        %v2980 = vpop.f32.mrb[0].mxu0
        %2981 = vmatprep.mubr.f32.mxu0 0.0
        %v2982 = vand.u32 %v2281, 4294901760
        %2983 = vmatmul.mubr.f32.gmra.mrb[0].mxu0 %v2982
        %v2984 = vpop.f32.mrb[0].mxu0
        %v2985 = vadd.f32 %v2840, %v2984
        %v2986 = vpop.f32.mrb[0].mxu0
        %2987 = vmatprep.mubr.f32.mxu0 0.0
        %v2988 = vand.u32 %v2284, 4294901760
        %2989 = vmatmul.mubr.f32.gmra.mrb[0].mxu0 %v2988
        %v2990 = vpop.f32.mrb[0].mxu0
        %v2991 = vadd.f32 %v2848, %v2990
        %v2992 = vpop.f32.mrb[0].mxu0
        %2993 = vmatprep.mubr.f32.mxu0 0.0
        %v2994 = vand.u32 %v2287, 4294901760
        %2995 = vmatmul.mubr.f32.gmra.mrb[0].mxu0 %v2994
        %v2996 = vpop.f32.mrb[0].mxu0
        %v2997 = vadd.f32 %v2856, %v2996
        %v2998 = vpop.f32.mrb[0].mxu0
        %2999 = vmatprep.mubr.f32.mxu0 0.0
        %v3000 = vand.u32 %v2290, 4294901760
        %3001 = vmatmul.mubr.f32.gmra.mrb[0].mxu0 %v3000
        %v3002 = vpop.f32.mrb[0].mxu0
        %v3003 = vadd.f32 %v2864, %v3002
        %v3004 = vpop.f32.mrb[0].mxu0
        %3005 = vmatprep.mubr.f32.mxu0 0.0
        %v3006 = vand.u32 %v2293, 4294901760
        %3007 = vmatmul.mubr.f32.gmra.mrb[0].mxu0 %v3006
        %v3008 = vpop.f32.mrb[0].mxu0
        %v3009 = vadd.f32 %v2872, %v3008
        %v3010 = vpop.f32.mrb[0].mxu0
        %3011 = vdwg.mxu0
        %3012 = vmatprep.subr.mxu0 0.0
        %v3013 = vand.u32 %v2231, 4294901760
        %3014 = vmatpush1.msra.mxu0 %v3013
        %3015 = vmatprep.subr.mxu0 0.0
        %v3016 = vand.u32 %v2232, 4294901760
        %3017 = vmatpush1.msra.mxu0 %v3016
        %3018 = vmatprep.subr.mxu0 0.0
        %v3019 = vand.u32 %v2233, 4294901760
        %3020 = vmatpush1.msra.mxu0 %v3019
        %3021 = vmatprep.subr.mxu0 0.0
        %v3022 = vand.u32 %v2234, 4294901760
        %3023 = vmatpush1.msra.mxu0 %v3022
        %3024 = vmatprep.subr.mxu0 0.0
        %v3025 = vand.u32 %v2235, 4294901760
        %3026 = vmatpush1.msra.mxu0 %v3025
        %3027 = vmatprep.subr.mxu0 0.0
        %v3028 = vand.u32 %v2236, 4294901760
        %3029 = vmatpush1.msra.mxu0 %v3028
        %3030 = vmatprep.subr.mxu0 0.0
        %v3031 = vand.u32 %v2237, 4294901760
        %3032 = vmatpush1.msra.mxu0 %v3031
        %3033 = vmatprep.subr.mxu0 0.0
        %v3034 = vand.u32 %v2238, 4294901760
        %3035 = vmatpush1.msra.mxu0 %v3034
        %3036 = vmatprep.subr.mxu0 0.0
        %3037 = vmatpush1.msra.mxu0 0.0
        %3038 = vmatprep.subr.mxu0 0.0
        %3039 = vmatpush1.msra.mxu0 0.0
        %3040 = vmatprep.subr.mxu0 0.0
        %3041 = vmatpush1.msra.mxu0 0.0
        %3042 = vmatprep.subr.mxu0 0.0
        %3043 = vmatpush1.msra.mxu0 0.0
        %3044 = vmatprep.subr.mxu0 0.0
        %3045 = vmatpush1.msra.mxu0 0.0
        %3046 = vmatprep.subr.mxu0 0.0
        %3047 = vmatpush1.msra.mxu0 0.0
        %3048 = vmatprep.subr.mxu0 0.0
        %3049 = vmatpush1.msra.mxu0 0.0
        %3050 = vmatprep.subr.mxu0 0.0
        %3051 = vmatpush1.msra.mxu0 0.0
        %3052 = vmatprep.subr.mxu0 0.0
        %3053 = vmatpush1.msra.mxu0 0.0
        %3054 = vmatprep.subr.mxu0 0.0
        %3055 = vmatpush1.msra.mxu0 0.0
        %3056 = vmatprep.subr.mxu0 0.0
        %3057 = vmatpush1.msra.mxu0 0.0
        %3058 = vmatprep.subr.mxu0 0.0
        %3059 = vmatpush1.msra.mxu0 0.0
        %3060 = vmatprep.subr.mxu0 0.0
        %3061 = vmatpush1.msra.mxu0 0.0
        %3062 = vmatprep.subr.mxu0 0.0
        %3063 = vmatpush1.msra.mxu0 0.0
        %3064 = vmatprep.subr.mxu0 0.0
        %3065 = vmatpush1.msra.mxu0 0.0
        %3066 = vmatprep.subr.mxu0 0.0
        %3067 = vmatpush1.msra.mxu0 0.0
        %3068 = vmatprep.subr.mxu0 0.0
        %3069 = vmatpush1.msra.mxu0 0.0
        %3070 = vmatprep.subr.mxu0 0.0
        %3071 = vmatpush1.msra.mxu0 0.0
        %3072 = vmatprep.subr.mxu0 0.0
        %3073 = vmatpush1.msra.mxu0 0.0
        %3074 = vmatprep.subr.mxu0 0.0
        %3075 = vmatpush1.msra.mxu0 0.0
        %3076 = vmatprep.subr.mxu0 0.0
        %3077 = vmatpush1.msra.mxu0 0.0
        %3078 = vmatprep.subr.mxu0 0.0
        %3079 = vmatpush1.msra.mxu0 0.0
        %3080 = vmatprep.subr.mxu0 0.0
        %3081 = vmatpush1.msra.mxu0 0.0
        %3082 = vmatprep.subr.mxu0 0.0
        %3083 = vmatpush1.msra.mxu0 0.0
        %3084 = vmatprep.mubr.f32.mxu0 0.0
        %v3085 = vand.u32 %v2272, 4294901760
        %3086 = vmatmul.mubr.f32.gmra.mrb[0].mxu0 %v3085
        %v3087 = vpop.f32.mrb[0].mxu0
        %v3088 = vadd.f32 %v2967, %v3087
        %v3089 = vpop.f32.mrb[0].mxu0
        %3090 = vmatprep.mubr.f32.mxu0 0.0
        %v3091 = vand.u32 %v2275, 4294901760
        %3092 = vmatmul.mubr.f32.gmra.mrb[0].mxu0 %v3091
        %v3093 = vpop.f32.mrb[0].mxu0
        %v3094 = vadd.f32 %v2973, %v3093
        %v3095 = vpop.f32.mrb[0].mxu0
        %3096 = vmatprep.mubr.f32.mxu0 0.0
        %v3097 = vand.u32 %v2278, 4294901760
        %3098 = vmatmul.mubr.f32.gmra.mrb[0].mxu0 %v3097
        %v3099 = vpop.f32.mrb[0].mxu0
        %v3100 = vadd.f32 %v2979, %v3099
        %v3101 = vpop.f32.mrb[0].mxu0
        %3102 = vmatprep.mubr.f32.mxu0 0.0
        %v3103 = vand.u32 %v2281, 4294901760
        %3104 = vmatmul.mubr.f32.gmra.mrb[0].mxu0 %v3103
        %v3105 = vpop.f32.mrb[0].mxu0
        %v3106 = vadd.f32 %v2985, %v3105
        %v3107 = vpop.f32.mrb[0].mxu0
        %3108 = vmatprep.mubr.f32.mxu0 0.0
        %v3109 = vand.u32 %v2284, 4294901760
        %3110 = vmatmul.mubr.f32.gmra.mrb[0].mxu0 %v3109
        %v3111 = vpop.f32.mrb[0].mxu0
        %v3112 = vadd.f32 %v2991, %v3111
        %v3113 = vpop.f32.mrb[0].mxu0
        %3114 = vmatprep.mubr.f32.mxu0 0.0
        %v3115 = vand.u32 %v2287, 4294901760
        %3116 = vmatmul.mubr.f32.gmra.mrb[0].mxu0 %v3115
        %v3117 = vpop.f32.mrb[0].mxu0
        %v3118 = vadd.f32 %v2997, %v3117
        %v3119 = vpop.f32.mrb[0].mxu0
        %3120 = vmatprep.mubr.f32.mxu0 0.0
        %v3121 = vand.u32 %v2290, 4294901760
        %3122 = vmatmul.mubr.f32.gmra.mrb[0].mxu0 %v3121
        %v3123 = vpop.f32.mrb[0].mxu0
        %v3124 = vadd.f32 %v3003, %v3123
        %v3125 = vpop.f32.mrb[0].mxu0
        %3126 = vmatprep.mubr.f32.mxu0 0.0
        %v3127 = vand.u32 %v2293, 4294901760
        %3128 = vmatmul.mubr.f32.gmra.mrb[0].mxu0 %v3127
        %v3129 = vpop.f32.mrb[0].mxu0
        %v3130 = vadd.f32 %v3009, %v3129
        %v3131 = vpop.f32.mrb[0].mxu0
        %3132 = vdwg.mxu0
        %v3133 = vsel %vm419, %v3088, 0.0
        %3134 = vadd.xlane.f32.xlu0 %v3133
        %v3135 = vpop.xlane.xlu0 %3134
        %v3136 = vsel %vm419, %v3094, 0.0
        %3137 = vadd.xlane.f32.xlu0 %v3136
        %v3138 = vpop.xlane.xlu0 %3137
        %v3139 = vsel %vm419, %v3100, 0.0
        %3140 = vadd.xlane.f32.xlu0 %v3139
        %v3141 = vpop.xlane.xlu0 %3140
        %v3142 = vsel %vm419, %v3106, 0.0
        %3143 = vadd.xlane.f32.xlu0 %v3142
        %v3144 = vpop.xlane.xlu0 %3143
        %v3145 = vsel %vm419, %v3112, 0.0
        %3146 = vadd.xlane.f32.xlu0 %v3145
        %v3147 = vpop.xlane.xlu0 %3146
        %v3148 = vsel %vm419, %v3118, 0.0
        %3149 = vadd.xlane.f32.xlu0 %v3148
        %v3150 = vpop.xlane.xlu0 %3149
        %v3151 = vsel %vm419, %v3124, 0.0
        %3152 = vadd.xlane.f32.xlu0 %v3151
        %v3153 = vpop.xlane.xlu0 %3152
        %v3154 = vsel %vm419, %v3130, 0.0
        %3155 = vadd.xlane.f32.xlu0 %v3154
        %v3156 = vpop.xlane.xlu0 %3155
        %v3157 = vmul.f32 %v3088, %v3088
        %v3158 = vmul.f32 %v3094, %v3094
        %v3159 = vmul.f32 %v3100, %v3100
        %v3160 = vmul.f32 %v3106, %v3106
        %v3161 = vmul.f32 %v3112, %v3112
        %v3162 = vmul.f32 %v3118, %v3118
        %v3163 = vmul.f32 %v3124, %v3124
        %v3164 = vmul.f32 %v3130, %v3130
        %v3165 = vsel %vm419, %v3157, 0.0
        %3166 = vadd.xlane.f32.xlu0 %v3165
        %v3167 = vpop.xlane.xlu0 %3166
        %v3168 = vsel %vm419, %v3158, 0.0
        %3169 = vadd.xlane.f32.xlu0 %v3168
        %v3170 = vpop.xlane.xlu0 %3169
        %v3171 = vsel %vm419, %v3159, 0.0
        %3172 = vadd.xlane.f32.xlu0 %v3171
        %v3173 = vpop.xlane.xlu0 %3172
        %v3174 = vsel %vm419, %v3160, 0.0
        %3175 = vadd.xlane.f32.xlu0 %v3174
        %v3176 = vpop.xlane.xlu0 %3175
        %v3177 = vsel %vm419, %v3161, 0.0
        %3178 = vadd.xlane.f32.xlu0 %v3177
        %v3179 = vpop.xlane.xlu0 %3178
        %v3180 = vsel %vm419, %v3162, 0.0
        %3181 = vadd.xlane.f32.xlu0 %v3180
        %v3182 = vpop.xlane.xlu0 %3181
        %v3183 = vsel %vm419, %v3163, 0.0
        %3184 = vadd.xlane.f32.xlu0 %v3183
        %v3185 = vpop.xlane.xlu0 %3184
        %v3186 = vsel %vm419, %v3164, 0.0
        %3187 = vadd.xlane.f32.xlu0 %v3186
        %v3188 = vpop.xlane.xlu0 %3187
        %v3189 = vmul.f32 %v3135, 0.03125
        %v3190 = vmul.f32 %v3138, 0.03125
        %v3191 = vmul.f32 %v3141, 0.03125
        %v3192 = vmul.f32 %v3144, 0.03125
        %v3193 = vmul.f32 %v3147, 0.03125
        %v3194 = vmul.f32 %v3150, 0.03125
        %v3195 = vmul.f32 %v3153, 0.03125
        %v3196 = vmul.f32 %v3156, 0.03125
        %v3197 = vmul.f32 %v3167, 0.03125
        %v3198 = vmul.f32 %v3170, 0.03125
        %v3199 = vmul.f32 %v3173, 0.03125
        %v3200 = vmul.f32 %v3176, 0.03125
        %v3201 = vmul.f32 %v3179, 0.03125
        %v3202 = vmul.f32 %v3182, 0.03125
        %v3203 = vmul.f32 %v3185, 0.03125
        %v3204 = vmul.f32 %v3188, 0.03125
        %v3205 = vmul.f32 %v3189, %v3189
        %v3206 = vmul.f32 %v3190, %v3190
        %v3207 = vmul.f32 %v3191, %v3191
        %v3208 = vmul.f32 %v3192, %v3192
        %v3209 = vmul.f32 %v3193, %v3193
        %v3210 = vmul.f32 %v3194, %v3194
        %v3211 = vmul.f32 %v3195, %v3195
        %v3212 = vmul.f32 %v3196, %v3196
        %v3213 = vsub.f32 %v3197, %v3205
        %v3214 = vsub.f32 %v3198, %v3206
        %v3215 = vsub.f32 %v3199, %v3207
        %v3216 = vsub.f32 %v3200, %v3208
        %v3217 = vsub.f32 %v3201, %v3209
        %v3218 = vsub.f32 %v3202, %v3210
        %v3219 = vsub.f32 %v3203, %v3211
        %v3220 = vsub.f32 %v3204, %v3212
        %v3221 = vmax.f32 %v3213, 0.0
        %v3222 = vmax.f32 %v3214, 0.0
        %v3223 = vmax.f32 %v3215, 0.0
        %v3224 = vmax.f32 %v3216, 0.0
        %v3225 = vmax.f32 %v3217, 0.0
        %v3226 = vmax.f32 %v3218, 0.0
        %v3227 = vmax.f32 %v3219, 0.0
        %v3228 = vmax.f32 %v3220, 0.0
        %v3229 = vsub.f32 %v3088, %v3189
        %v3230 = vsub.f32 %v3094, %v3190
        %v3231 = vsub.f32 %v3100, %v3191
        %v3232 = vsub.f32 %v3106, %v3192
        %v3233 = vsub.f32 %v3112, %v3193
        %v3234 = vsub.f32 %v3118, %v3194
        %v3235 = vsub.f32 %v3124, %v3195
        %v3236 = vsub.f32 %v3130, %v3196
        %v3237 = vadd.f32 %v3221, 1e-05
        %v3238 = vadd.f32 %v3222, 1e-05
        %v3239 = vadd.f32 %v3223, 1e-05
        %v3240 = vadd.f32 %v3224, 1e-05
        %v3241 = vadd.f32 %v3225, 1e-05
        %v3242 = vadd.f32 %v3226, 1e-05
        %v3243 = vadd.f32 %v3227, 1e-05
        %v3244 = vadd.f32 %v3228, 1e-05
        %v3245 = vrsqrt.pop %v3237
        %v3246 = vrsqrt.pop %v3238
        %v3247 = vrsqrt.pop %v3239
        %v3248 = vrsqrt.pop %v3240
        %v3249 = vrsqrt.pop %v3241
        %v3250 = vrsqrt.pop %v3242
        %v3251 = vrsqrt.pop %v3243
        %v3252 = vrsqrt.pop %v3244
        %v3253 = vmul.f32 %v3229, %v3245
        %v3254 = vmul.f32 %v3230, %v3246
        %v3255 = vmul.f32 %v3231, %v3247
        %v3256 = vmul.f32 %v3232, %v3248
        %v3257 = vmul.f32 %v3233, %v3249
        %v3258 = vmul.f32 %v3234, %v3250
        %v3259 = vmul.f32 %v3235, %v3251
        %v3260 = vmul.f32 %v3236, %v3252
        %v3261 = vld [vmem:[%s7] sm:$0x1]
        %v3263 = vlaneseq
        %v3264 = vshrl.u32 %v3263, 7
        %v3265 = vsub.s32 0, %v3264
        %v3266 = vrot.slane %v3261, %v3265
        %v3268 = vmul.f32 %v3253, %v3266
        %v3269 = vmul.f32 %v3254, %v3266
        %v3270 = vmul.f32 %v3255, %v3266
        %v3271 = vmul.f32 %v3256, %v3266
        %v3272 = vmul.f32 %v3257, %v3266
        %v3273 = vmul.f32 %v3258, %v3266
        %v3274 = vmul.f32 %v3259, %v3266
        %v3275 = vmul.f32 %v3260, %v3266
        %v3276 = vld [vmem:[%s8] sm:$0x1]
        %v3278 = vlaneseq
        %v3279 = vshrl.u32 %v3278, 7
        %v3280 = vsub.s32 0, %v3279
        %v3281 = vrot.slane %v3276, %v3280
        %v3283 = vadd.f32 %v3268, %v3281
        %v3284 = vadd.f32 %v3269, %v3281
        %v3285 = vadd.f32 %v3270, %v3281
        %v3286 = vadd.f32 %v3271, %v3281
        %v3287 = vadd.f32 %v3272, %v3281
        %v3288 = vadd.f32 %v3273, %v3281
        %v3289 = vadd.f32 %v3274, %v3281
        %v3290 = vadd.f32 %v3275, %v3281
        %3291 = vst.msk [vmem:[%s384] sm:$0xff] %vm419, %v3283
        %3292 = vst.msk [vmem:[%s384 + $0x8] sm:$0xff] %vm419, %v3284
        %3293 = vst.msk [vmem:[%s384 + $0x10] sm:$0xff] %vm419, %v3285
        %3294 = vst.msk [vmem:[%s384 + $0x18] sm:$0xff] %vm419, %v3286
        %3295 = vst.msk [vmem:[%s384 + $0x20] sm:$0xff] %vm419, %v3287
        %3296 = vst.msk [vmem:[%s384 + $0x28] sm:$0xff] %vm419, %v3288
        %3297 = vst.msk [vmem:[%s384 + $0x30] sm:$0xff] %vm419, %v3289
        %3298 = vst.msk [vmem:[%s384 + $0x38] sm:$0xff] %vm419, %v3290
        %s3299 = sand.u32 %s253, 1
        %s3300 = scalar_lea.sflag [#allocation3], %s3299
        %s3301 = sand.u32 %s253, 1
        %s3302 = smul.addr %s3301, 64
        %s3303 = scalar_lea.vmem [#allocation2], %s3302
        // Predicated region
        $region57: #{edge_transition_pallas.1} parent=55 // pred_check
          %p3304 = pneg %p263
        $region58: #{edge_transition_pallas.1} parent=55 // pred_check_branch
          %3306 = sbr.rel (%p3304) target = $region60
        $region59: #{edge_transition_pallas.1} parent=55 // pred_region
          %s3307 = smul.u32 8, %s28
          %s3309 = ssub.s32 1024, 1024
          %3310 = vsyncadd %s3300, %s3309
          %s3311 = smul.addr %s27, 8
          %s3312 = sadd.s32 %s3307, %s3311
          %s3313 = smul.addr %s3312, 128
          %s3314 = scalar_lea.hbm %s9, %s3313
          %s3315 = sshll.u32 %s3303, 4
          %s3316 = int_to_ptr.vmem [resolvable:$true] %s3315
          %3321 = dma.vmem_to_hbm [thread:$0]  %s3316, 1024, %s3314, %s3300, 128, 128, 8
        $region60: #{edge_transition_pallas.1} parent=55 // pred_fallthru
          _
      $region56: #{edge_transition_pallas.1} parent=5 // pred_fallthru
        _
      %p3322 = scmp.le.s32.totalorder 2, %s18
      // Predicated region
      $region61: #{edge_transition_pallas.1} parent=5 // pred_check
        %p3323 = pneg %p3322
      $region62: #{edge_transition_pallas.1} parent=5 // pred_check_branch
        %3325 = sbr.rel (%p3323) target = $region64
      $region63: #{edge_transition_pallas.1} parent=5 // pred_region
        %s3326 = ssub.s32 %s18, 2
        // Predicated region
        $region65: #{edge_transition_pallas.1} parent=63 // pred_check
          %p3327 = pneg %p269
        $region66: #{edge_transition_pallas.1} parent=63 // pred_check_branch
          %3329 = sbr.rel (%p3327) target = $region68
        $region67: #{edge_transition_pallas.1} parent=63 // pred_region
          %s3330 = sand.u32 %s254, 1
          %s3331 = scalar_lea.sflag [#allocation3], %s3330
          %s3332 = sand.u32 %s254, 1
          %s3333 = smul.addr %s3332, 64
          %s3334 = scalar_lea.vmem [#allocation2], %s3333
          %3335 = dma.done %s3331, 1024
        $region68: #{edge_transition_pallas.1} parent=63 // pred_fallthru
          _
      $region64: #{edge_transition_pallas.1} parent=5 // pred_fallthru
        _
    $region6: #{edge_transition_pallas.1} parent=1 // loop_footer
      %s22 = sadd.s32 1, %s18
    $region7: #{edge_transition_pallas.1} parent=1 // loop_footer_branch
      %17 = sbr.rel target = $region3
    $region8: #{edge_transition_pallas.1} parent=1 // loop_exit
      _
    %3336 = vsyncpa [#allocation3], 1
    %s3337 = scalar_lea.sflag [#allocation3], 1
    %3338 = vsyncpa %s3337, 1

</llo_original>
